<compile_context>
chip_gen: v5e
topology: v5e:2x2
jax: 0.10.0
libtpu: 0.0.40
codegen_flags: <defaults>
</compile_context>

<pallas_src>
import functools

import jax
import jax.numpy as jnp
from jax import lax
from jax.experimental import pallas as pl
from jax.experimental.pallas import tpu as pltpu


# -----------------------------------------------------------------------------
# Pallas kernel: full forward pass (LSTM recurrence + mean pool + 3-layer MLP)
# -----------------------------------------------------------------------------
def _make_kernel(T, Bp, H):
    def kernel(x_ref,                        # (T*Bp, D) bf16, time-major flattened
               wih0_ref, whh0_ref, b0_ref,   # (D,4H) bf16, (H,4H) bf16, (1,4H) f32
               wih1_ref, whh1_ref, b1_ref,   # (H,4H) bf16, (H,4H) bf16, (1,4H) f32
               fc1w_ref, fc1b_ref,           # (H,128) bf16 (pre-scaled 1/T), (1,128) f32
               fc2w_ref, fc2b_ref,           # (128,64) bf16, (1,64) f32
               fc3w_ref, fc3b_ref,           # (64,C)  bf16, (1,C)  f32
               out_ref):                     # (Bp, C) f32

        def gate_split(g):
            # gate columns pre-permuted to (i, f, o, g): one contiguous sigmoid
            # over 3H lanes + one tanh over H lanes.
            s = jax.nn.sigmoid(g[:, :3 * H])
            gg = jnp.tanh(g[:, 3 * H:])
            return s[:, :H], s[:, H:2 * H], s[:, 2 * H:3 * H], gg  # i, f, o, g

        # ---- layer 0: hoisted input projection (one matmul for all T steps) ----
        u0 = (jnp.dot(x_ref[...], wih0_ref[...],
                      preferred_element_type=jnp.float32)
              + b0_ref[...])                                   # (T*Bp, 4H) f32
        whh0 = whh0_ref[...]                                   # (H, 4H) bf16

        h0 = jnp.zeros((Bp, H), jnp.float32)
        c0 = jnp.zeros((Bp, H), jnp.float32)
        h0_bf = h0.astype(jnp.bfloat16)
        h0_steps = []
        for t in range(T):                                     # fully unrolled, T static
            g0 = u0[t * Bp:(t + 1) * Bp, :] + jnp.dot(
                h0_bf, whh0, preferred_element_type=jnp.float32)
            i0, f0, o0, gg0 = gate_split(g0)
            c0 = f0 * c0 + i0 * gg0
            h0 = o0 * jnp.tanh(c0)
            h0_bf = h0.astype(jnp.bfloat16)
            h0_steps.append(h0_bf)

        # ---- layer 1: hoisted input projection over the stacked h0 sequence ----
        h0_seq = jnp.concatenate(h0_steps, axis=0)             # (T*Bp, H) bf16
        u1 = (jnp.dot(h0_seq, wih1_ref[...],
                      preferred_element_type=jnp.float32)
              + b1_ref[...])                                   # (T*Bp, 4H) f32
        whh1 = whh1_ref[...]                                   # (H, 4H) bf16

        h1 = jnp.zeros((Bp, H), jnp.float32)
        c1 = jnp.zeros((Bp, H), jnp.float32)
        h1_bf = h1.astype(jnp.bfloat16)
        acc = jnp.zeros((Bp, H), jnp.float32)
        for t in range(T):
            g1 = u1[t * Bp:(t + 1) * Bp, :] + jnp.dot(
                h1_bf, whh1, preferred_element_type=jnp.float32)
            i1, f1, o1, gg1 = gate_split(g1)
            c1 = f1 * c1 + i1 * gg1
            h1 = o1 * jnp.tanh(c1)
            h1_bf = h1.astype(jnp.bfloat16)
            acc = acc + h1          # running sum over time (AdaptiveAvgPool1d(1))

        # mean-pool 1/T scale is folded into fc1_w at prep time, so `acc`
        # (the time-sum) feeds fc1 directly. MLP head (dropout == identity).
        h = jnp.maximum(
            jnp.dot(acc.astype(jnp.bfloat16), fc1w_ref[...],
                    preferred_element_type=jnp.float32) + fc1b_ref[...], 0.0)
        h = jnp.maximum(
            jnp.dot(h.astype(jnp.bfloat16), fc2w_ref[...],
                    preferred_element_type=jnp.float32) + fc2b_ref[...], 0.0)
        out = (jnp.dot(h.astype(jnp.bfloat16), fc3w_ref[...],
                       preferred_element_type=jnp.float32) + fc3b_ref[...])
        out_ref[...] = out.astype(out_ref.dtype)

    return kernel


# -----------------------------------------------------------------------------
# One-time parameter preparation (model-load time, NOT in the per-call path)
# -----------------------------------------------------------------------------
def prepare_params(params, seq_len):
    """Convert PyTorch-layout params to kernel layout once."""
    T = seq_len

    def perm(mat):
        # reorder gate blocks along last axis: PyTorch (i, f, g, o) -> (i, f, o, g)
        i, f, g, o = jnp.split(mat, 4, axis=-1)
        return jnp.concatenate([i, f, o, g], axis=-1)

    return {
        "wih0": perm(params["wih0"].T).astype(jnp.bfloat16),               # (D, 4H)
        "whh0": perm(params["whh0"].T).astype(jnp.bfloat16),               # (H, 4H)
        "b0": perm((params["bih0"] + params["bhh0"]).reshape(1, -1)),      # (1, 4H)
        "wih1": perm(params["wih1"].T).astype(jnp.bfloat16),               # (H, 4H)
        "whh1": perm(params["whh1"].T).astype(jnp.bfloat16),               # (H, 4H)
        "b1": perm((params["bih1"] + params["bhh1"]).reshape(1, -1)),      # (1, 4H)
        "fc1_w": (params["fc1_w"].T * (1.0 / T)).astype(jnp.bfloat16),     # (H, 128)
        "fc1_b": params["fc1_b"].reshape(1, -1),
        "fc2_w": params["fc2_w"].T.astype(jnp.bfloat16),                   # (128, 64)
        "fc2_b": params["fc2_b"].reshape(1, -1),
        "fc3_w": params["fc3_w"].T.astype(jnp.bfloat16),                   # (64, C)
        "fc3_b": params["fc3_b"].reshape(1, -1),
    }


@jax.jit
def lstm_model_forward(x_btd, prepped):
    """x_btd: (B, T, D) float32, batch-first like PyTorch. Returns (B, num_classes)."""
    B, T, D = x_btd.shape
    H = prepped["whh0"].shape[0]
    C = prepped["fc3_w"].shape[1]
    Bp = max(8, ((B + 7) // 8) * 8)          # pad batch to the sublane tile

    x_p = jnp.pad(x_btd, ((0, Bp - B), (0, 0), (0, 0)))
    # time-major then flatten: rows [t*Bp, (t+1)*Bp) hold timestep t
    x_flat = jnp.transpose(x_p, (1, 0, 2)).reshape(T * Bp, D).astype(jnp.bfloat16)

    args = (
        x_flat,
        prepped["wih0"], prepped["whh0"], prepped["b0"],
        prepped["wih1"], prepped["whh1"], prepped["b1"],
        prepped["fc1_w"], prepped["fc1_b"],
        prepped["fc2_w"], prepped["fc2_b"],
        prepped["fc3_w"], prepped["fc3_b"],
    )

    vmem_spec = pl.BlockSpec(memory_space=pltpu.MemorySpace.VMEM)
    out = pl.pallas_call(
        _make_kernel(T, Bp, H),
        out_shape=jax.ShapeDtypeStruct((Bp, C), jnp.float32),
        in_specs=[vmem_spec] * len(args),
        out_specs=vmem_spec,
    )(*args)
    return out[:B]


# -----------------------------------------------------------------------------
# Deterministic parameter init (xavier_uniform weights, zero biases)
# -----------------------------------------------------------------------------
def xavier_uniform(key, shape):
    fan_out, fan_in = shape  # PyTorch weight layout (out_features, in_features)
    bound = (6.0 / (fan_in + fan_out)) ** 0.5
    return jax.random.uniform(key, shape, jnp.float32, -bound, bound)


def init_params(key, input_dim, hidden_dim, num_classes):
    H, D = hidden_dim, input_dim
    keys = jax.random.split(key, 7)
    return {
        # LSTM layer 0
        "wih0": xavier_uniform(keys[0], (4 * H, D)),
        "whh0": xavier_uniform(keys[1], (4 * H, H)),
        "bih0": jnp.zeros((4 * H,), jnp.float32),
        "bhh0": jnp.zeros((4 * H,), jnp.float32),
        # LSTM layer 1
        "wih1": xavier_uniform(keys[2], (4 * H, H)),
        "whh1": xavier_uniform(keys[3], (4 * H, H)),
        "bih1": jnp.zeros((4 * H,), jnp.float32),
        "bhh1": jnp.zeros((4 * H,), jnp.float32),
        # MLP head
        "fc1_w": xavier_uniform(keys[4], (128, H)),
        "fc1_b": jnp.zeros((128,), jnp.float32),
        "fc2_w": xavier_uniform(keys[5], (64, 128)),
        "fc2_b": jnp.zeros((64,), jnp.float32),
        "fc3_w": xavier_uniform(keys[6], (num_classes, 64)),
        "fc3_b": jnp.zeros((num_classes,), jnp.float32),
    }


# -----------------------------------------------------------------------------
# Pure-JAX f32 reference (for correctness check)
# -----------------------------------------------------------------------------
def reference_forward(x_btd, params, hidden_dim):
    H = hidden_dim
    B = x_btd.shape[0]

    def cell(h, c, x_t, wih, whh, b):
        g = x_t @ wih.T + h @ whh.T + b
        i, f, gg, o = jnp.split(g, 4, axis=-1)
        c = jax.nn.sigmoid(f) * c + jax.nn.sigmoid(i) * jnp.tanh(gg)
        h = jax.nn.sigmoid(o) * jnp.tanh(c)
        return h, c

    def scan_fn(carry, x_t):
        h0, c0, h1, c1 = carry
        h0, c0 = cell(h0, c0, x_t, params["wih0"], params["whh0"],
                      params["bih0"] + params["bhh0"])
        h1, c1 = cell(h1, c1, h0, params["wih1"], params["whh1"],
                      params["bih1"] + params["bhh1"])
        return (h0, c0, h1, c1), h1

    init = tuple(jnp.zeros((B, H), jnp.float32) for _ in range(4))
    _, hs = lax.scan(scan_fn, init, jnp.transpose(x_btd, (1, 0, 2)))   # (T, B, H)
    pooled = hs.mean(axis=0)                                            # (B, H)
    h = jnp.maximum(pooled @ params["fc1_w"].T + params["fc1_b"], 0.0)
    h = jnp.maximum(h @ params["fc2_w"].T + params["fc2_b"], 0.0)
    return h @ params["fc3_w"].T + params["fc3_b"]


if __name__ == "__main__":
    input_dim, hidden_dim, num_classes = 100, 128, 3
    B, T = 2, 8

    key = jax.random.PRNGKey(0)
    k_x, k_p = jax.random.split(key)
    x = jax.random.normal(k_x, (B, T, input_dim), jnp.float32)
    params = init_params(k_p, input_dim, hidden_dim, num_classes)

    # one-time, model-load-time preprocessing (kept out of the per-call path)
    prepped = jax.tree.map(jax.block_until_ready, prepare_params(params, T))

    out = jax.block_until_ready(lstm_model_forward(x, prepped))
    ref = jax.block_until_ready(reference_forward(x, params, hidden_dim))

    assert out.shape == (B, num_classes)
    # bf16 MXU operands (f32 accumulation) in the recurrence and head -> compare
    # against the all-f32 reference with a correspondingly loose tolerance.
    assert jnp.allclose(out, ref, atol=5e-2, rtol=5e-2), (out, ref)

    print("KERNEL_OK")
</pallas_src>

<mosaic_0001>
module attributes {stable_mosaic.version = 11 : i64} {
  func.func @kernel(%arg0: memref<64x100xbf16, #tpu.memory_space<vmem>>, %arg1: memref<100x512xbf16, #tpu.memory_space<vmem>>, %arg2: memref<128x512xbf16, #tpu.memory_space<vmem>>, %arg3: memref<1x512xf32, #tpu.memory_space<vmem>>, %arg4: memref<128x512xbf16, #tpu.memory_space<vmem>>, %arg5: memref<128x512xbf16, #tpu.memory_space<vmem>>, %arg6: memref<1x512xf32, #tpu.memory_space<vmem>>, %arg7: memref<128x128xbf16, #tpu.memory_space<vmem>>, %arg8: memref<1x128xf32, #tpu.memory_space<vmem>>, %arg9: memref<128x64xbf16, #tpu.memory_space<vmem>>, %arg10: memref<1x64xf32, #tpu.memory_space<vmem>>, %arg11: memref<64x3xbf16, #tpu.memory_space<vmem>>, %arg12: memref<1x3xf32, #tpu.memory_space<vmem>>, %arg13: memref<8x3xf32, #tpu.memory_space<vmem>>) attributes {dimension_semantics = [], scalar_prefetch = 0 : i64, scratch_operands = 0 : i64, tpu.core_type = #tpu.core_type<tc>} {
    %c0 = arith.constant 0 : index
    %c0_0 = arith.constant 0 : index
    %0 = vector.load %arg0[%c0, %c0_0] : memref<64x100xbf16, #tpu.memory_space<vmem>>, vector<64x100xbf16>
    %c0_1 = arith.constant 0 : index
    %c0_2 = arith.constant 0 : index
    %1 = vector.load %arg1[%c0_1, %c0_2] : memref<100x512xbf16, #tpu.memory_space<vmem>>, vector<100x512xbf16>
    %cst = arith.constant dense<0.000000e+00> : vector<64x512xf32>
    %2 = tpu.matmul %0, %1, %cst {dimension_numbers = #tpu.dot_dimension_numbers<[1], [0], [0], [1], [0, 0, 1, 1], [], []>} : vector<64x100xbf16>, vector<100x512xbf16>, vector<64x512xf32> -> vector<64x512xf32>
    %c0_3 = arith.constant 0 : index
    %c0_4 = arith.constant 0 : index
    %3 = vector.load %arg3[%c0_3, %c0_4] : memref<1x512xf32, #tpu.memory_space<vmem>>, vector<1x512xf32>
    %4 = vector.broadcast %3 : vector<1x512xf32> to vector<64x512xf32>
    %5 = arith.addf %2, %4 : vector<64x512xf32>
    %c0_5 = arith.constant 0 : index
    %c0_6 = arith.constant 0 : index
    %6 = vector.load %arg2[%c0_5, %c0_6] : memref<128x512xbf16, #tpu.memory_space<vmem>>, vector<128x512xbf16>
    %cst_7 = arith.constant 0.000000e+00 : f32
    %7 = vector.broadcast %cst_7 : f32 to vector<8x128xf32>
    %cst_8 = arith.constant 0.000000e+00 : f32
    %8 = vector.broadcast %cst_8 : f32 to vector<8x128xf32>
    %9 = arith.truncf %7 : vector<8x128xf32> to vector<8x128xbf16>
    %10 = vector.extract_strided_slice %5 {offsets = [0, 0], sizes = [8, 512], strides = [1, 1]} : vector<64x512xf32> to vector<8x512xf32>
    %cst_9 = arith.constant dense<0.000000e+00> : vector<8x512xf32>
    %11 = tpu.matmul %9, %6, %cst_9 {dimension_numbers = #tpu.dot_dimension_numbers<[1], [0], [0], [1], [0, 0, 1, 1], [], []>} : vector<8x128xbf16>, vector<128x512xbf16>, vector<8x512xf32> -> vector<8x512xf32>
    %12 = arith.addf %10, %11 : vector<8x512xf32>
    %13 = vector.extract_strided_slice %12 {offsets = [0, 0], sizes = [8, 384], strides = [1, 1]} : vector<8x512xf32> to vector<8x384xf32>
    %14 = arith.negf %13 : vector<8x384xf32>
    %15 = math.exp %14 : vector<8x384xf32>
    %cst_10 = arith.constant 1.000000e+00 : f32
    %16 = vector.broadcast %cst_10 : f32 to vector<8x384xf32>
    %17 = arith.addf %16, %15 : vector<8x384xf32>
    %18 = arith.divf %16, %17 : vector<8x384xf32>
    %19 = vector.extract_strided_slice %12 {offsets = [0, 384], sizes = [8, 128], strides = [1, 1]} : vector<8x512xf32> to vector<8x128xf32>
    %20 = math.tanh %19 : vector<8x128xf32>
    %21 = vector.extract_strided_slice %18 {offsets = [0, 0], sizes = [8, 128], strides = [1, 1]} : vector<8x384xf32> to vector<8x128xf32>
    %22 = vector.extract_strided_slice %18 {offsets = [0, 128], sizes = [8, 128], strides = [1, 1]} : vector<8x384xf32> to vector<8x128xf32>
    %23 = vector.extract_strided_slice %18 {offsets = [0, 256], sizes = [8, 128], strides = [1, 1]} : vector<8x384xf32> to vector<8x128xf32>
    %24 = arith.mulf %22, %8 : vector<8x128xf32>
    %25 = arith.mulf %21, %20 : vector<8x128xf32>
    %26 = arith.addf %24, %25 : vector<8x128xf32>
    %27 = math.tanh %26 : vector<8x128xf32>
    %28 = arith.mulf %23, %27 : vector<8x128xf32>
    %29 = arith.truncf %28 : vector<8x128xf32> to vector<8x128xbf16>
    %30 = vector.extract_strided_slice %5 {offsets = [8, 0], sizes = [8, 512], strides = [1, 1]} : vector<64x512xf32> to vector<8x512xf32>
    %cst_11 = arith.constant dense<0.000000e+00> : vector<8x512xf32>
    %31 = tpu.matmul %29, %6, %cst_11 {dimension_numbers = #tpu.dot_dimension_numbers<[1], [0], [0], [1], [0, 0, 1, 1], [], []>} : vector<8x128xbf16>, vector<128x512xbf16>, vector<8x512xf32> -> vector<8x512xf32>
    %32 = arith.addf %30, %31 : vector<8x512xf32>
    %33 = vector.extract_strided_slice %32 {offsets = [0, 0], sizes = [8, 384], strides = [1, 1]} : vector<8x512xf32> to vector<8x384xf32>
    %34 = arith.negf %33 : vector<8x384xf32>
    %35 = math.exp %34 : vector<8x384xf32>
    %cst_12 = arith.constant 1.000000e+00 : f32
    %36 = vector.broadcast %cst_12 : f32 to vector<8x384xf32>
    %37 = arith.addf %36, %35 : vector<8x384xf32>
    %38 = arith.divf %36, %37 : vector<8x384xf32>
    %39 = vector.extract_strided_slice %32 {offsets = [0, 384], sizes = [8, 128], strides = [1, 1]} : vector<8x512xf32> to vector<8x128xf32>
    %40 = math.tanh %39 : vector<8x128xf32>
    %41 = vector.extract_strided_slice %38 {offsets = [0, 0], sizes = [8, 128], strides = [1, 1]} : vector<8x384xf32> to vector<8x128xf32>
    %42 = vector.extract_strided_slice %38 {offsets = [0, 128], sizes = [8, 128], strides = [1, 1]} : vector<8x384xf32> to vector<8x128xf32>
    %43 = vector.extract_strided_slice %38 {offsets = [0, 256], sizes = [8, 128], strides = [1, 1]} : vector<8x384xf32> to vector<8x128xf32>
    %44 = arith.mulf %42, %26 : vector<8x128xf32>
    %45 = arith.mulf %41, %40 : vector<8x128xf32>
    %46 = arith.addf %44, %45 : vector<8x128xf32>
    %47 = math.tanh %46 : vector<8x128xf32>
    %48 = arith.mulf %43, %47 : vector<8x128xf32>
    %49 = arith.truncf %48 : vector<8x128xf32> to vector<8x128xbf16>
    %50 = vector.extract_strided_slice %5 {offsets = [16, 0], sizes = [8, 512], strides = [1, 1]} : vector<64x512xf32> to vector<8x512xf32>
    %cst_13 = arith.constant dense<0.000000e+00> : vector<8x512xf32>
    %51 = tpu.matmul %49, %6, %cst_13 {dimension_numbers = #tpu.dot_dimension_numbers<[1], [0], [0], [1], [0, 0, 1, 1], [], []>} : vector<8x128xbf16>, vector<128x512xbf16>, vector<8x512xf32> -> vector<8x512xf32>
    %52 = arith.addf %50, %51 : vector<8x512xf32>
    %53 = vector.extract_strided_slice %52 {offsets = [0, 0], sizes = [8, 384], strides = [1, 1]} : vector<8x512xf32> to vector<8x384xf32>
    %54 = arith.negf %53 : vector<8x384xf32>
    %55 = math.exp %54 : vector<8x384xf32>
    %cst_14 = arith.constant 1.000000e+00 : f32
    %56 = vector.broadcast %cst_14 : f32 to vector<8x384xf32>
    %57 = arith.addf %56, %55 : vector<8x384xf32>
    %58 = arith.divf %56, %57 : vector<8x384xf32>
    %59 = vector.extract_strided_slice %52 {offsets = [0, 384], sizes = [8, 128], strides = [1, 1]} : vector<8x512xf32> to vector<8x128xf32>
    %60 = math.tanh %59 : vector<8x128xf32>
    %61 = vector.extract_strided_slice %58 {offsets = [0, 0], sizes = [8, 128], strides = [1, 1]} : vector<8x384xf32> to vector<8x128xf32>
    %62 = vector.extract_strided_slice %58 {offsets = [0, 128], sizes = [8, 128], strides = [1, 1]} : vector<8x384xf32> to vector<8x128xf32>
    %63 = vector.extract_strided_slice %58 {offsets = [0, 256], sizes = [8, 128], strides = [1, 1]} : vector<8x384xf32> to vector<8x128xf32>
    %64 = arith.mulf %62, %46 : vector<8x128xf32>
    %65 = arith.mulf %61, %60 : vector<8x128xf32>
    %66 = arith.addf %64, %65 : vector<8x128xf32>
    %67 = math.tanh %66 : vector<8x128xf32>
    %68 = arith.mulf %63, %67 : vector<8x128xf32>
    %69 = arith.truncf %68 : vector<8x128xf32> to vector<8x128xbf16>
    %70 = vector.extract_strided_slice %5 {offsets = [24, 0], sizes = [8, 512], strides = [1, 1]} : vector<64x512xf32> to vector<8x512xf32>
    %cst_15 = arith.constant dense<0.000000e+00> : vector<8x512xf32>
    %71 = tpu.matmul %69, %6, %cst_15 {dimension_numbers = #tpu.dot_dimension_numbers<[1], [0], [0], [1], [0, 0, 1, 1], [], []>} : vector<8x128xbf16>, vector<128x512xbf16>, vector<8x512xf32> -> vector<8x512xf32>
    %72 = arith.addf %70, %71 : vector<8x512xf32>
    %73 = vector.extract_strided_slice %72 {offsets = [0, 0], sizes = [8, 384], strides = [1, 1]} : vector<8x512xf32> to vector<8x384xf32>
    %74 = arith.negf %73 : vector<8x384xf32>
    %75 = math.exp %74 : vector<8x384xf32>
    %cst_16 = arith.constant 1.000000e+00 : f32
    %76 = vector.broadcast %cst_16 : f32 to vector<8x384xf32>
    %77 = arith.addf %76, %75 : vector<8x384xf32>
    %78 = arith.divf %76, %77 : vector<8x384xf32>
    %79 = vector.extract_strided_slice %72 {offsets = [0, 384], sizes = [8, 128], strides = [1, 1]} : vector<8x512xf32> to vector<8x128xf32>
    %80 = math.tanh %79 : vector<8x128xf32>
    %81 = vector.extract_strided_slice %78 {offsets = [0, 0], sizes = [8, 128], strides = [1, 1]} : vector<8x384xf32> to vector<8x128xf32>
    %82 = vector.extract_strided_slice %78 {offsets = [0, 128], sizes = [8, 128], strides = [1, 1]} : vector<8x384xf32> to vector<8x128xf32>
    %83 = vector.extract_strided_slice %78 {offsets = [0, 256], sizes = [8, 128], strides = [1, 1]} : vector<8x384xf32> to vector<8x128xf32>
    %84 = arith.mulf %82, %66 : vector<8x128xf32>
    %85 = arith.mulf %81, %80 : vector<8x128xf32>
    %86 = arith.addf %84, %85 : vector<8x128xf32>
    %87 = math.tanh %86 : vector<8x128xf32>
    %88 = arith.mulf %83, %87 : vector<8x128xf32>
    %89 = arith.truncf %88 : vector<8x128xf32> to vector<8x128xbf16>
    %90 = vector.extract_strided_slice %5 {offsets = [32, 0], sizes = [8, 512], strides = [1, 1]} : vector<64x512xf32> to vector<8x512xf32>
    %cst_17 = arith.constant dense<0.000000e+00> : vector<8x512xf32>
    %91 = tpu.matmul %89, %6, %cst_17 {dimension_numbers = #tpu.dot_dimension_numbers<[1], [0], [0], [1], [0, 0, 1, 1], [], []>} : vector<8x128xbf16>, vector<128x512xbf16>, vector<8x512xf32> -> vector<8x512xf32>
    %92 = arith.addf %90, %91 : vector<8x512xf32>
    %93 = vector.extract_strided_slice %92 {offsets = [0, 0], sizes = [8, 384], strides = [1, 1]} : vector<8x512xf32> to vector<8x384xf32>
    %94 = arith.negf %93 : vector<8x384xf32>
    %95 = math.exp %94 : vector<8x384xf32>
    %cst_18 = arith.constant 1.000000e+00 : f32
    %96 = vector.broadcast %cst_18 : f32 to vector<8x384xf32>
    %97 = arith.addf %96, %95 : vector<8x384xf32>
    %98 = arith.divf %96, %97 : vector<8x384xf32>
    %99 = vector.extract_strided_slice %92 {offsets = [0, 384], sizes = [8, 128], strides = [1, 1]} : vector<8x512xf32> to vector<8x128xf32>
    %100 = math.tanh %99 : vector<8x128xf32>
    %101 = vector.extract_strided_slice %98 {offsets = [0, 0], sizes = [8, 128], strides = [1, 1]} : vector<8x384xf32> to vector<8x128xf32>
    %102 = vector.extract_strided_slice %98 {offsets = [0, 128], sizes = [8, 128], strides = [1, 1]} : vector<8x384xf32> to vector<8x128xf32>
    %103 = vector.extract_strided_slice %98 {offsets = [0, 256], sizes = [8, 128], strides = [1, 1]} : vector<8x384xf32> to vector<8x128xf32>
    %104 = arith.mulf %102, %86 : vector<8x128xf32>
    %105 = arith.mulf %101, %100 : vector<8x128xf32>
    %106 = arith.addf %104, %105 : vector<8x128xf32>
    %107 = math.tanh %106 : vector<8x128xf32>
    %108 = arith.mulf %103, %107 : vector<8x128xf32>
    %109 = arith.truncf %108 : vector<8x128xf32> to vector<8x128xbf16>
    %110 = vector.extract_strided_slice %5 {offsets = [40, 0], sizes = [8, 512], strides = [1, 1]} : vector<64x512xf32> to vector<8x512xf32>
    %cst_19 = arith.constant dense<0.000000e+00> : vector<8x512xf32>
    %111 = tpu.matmul %109, %6, %cst_19 {dimension_numbers = #tpu.dot_dimension_numbers<[1], [0], [0], [1], [0, 0, 1, 1], [], []>} : vector<8x128xbf16>, vector<128x512xbf16>, vector<8x512xf32> -> vector<8x512xf32>
    %112 = arith.addf %110, %111 : vector<8x512xf32>
    %113 = vector.extract_strided_slice %112 {offsets = [0, 0], sizes = [8, 384], strides = [1, 1]} : vector<8x512xf32> to vector<8x384xf32>
    %114 = arith.negf %113 : vector<8x384xf32>
    %115 = math.exp %114 : vector<8x384xf32>
    %cst_20 = arith.constant 1.000000e+00 : f32
    %116 = vector.broadcast %cst_20 : f32 to vector<8x384xf32>
    %117 = arith.addf %116, %115 : vector<8x384xf32>
    %118 = arith.divf %116, %117 : vector<8x384xf32>
    %119 = vector.extract_strided_slice %112 {offsets = [0, 384], sizes = [8, 128], strides = [1, 1]} : vector<8x512xf32> to vector<8x128xf32>
    %120 = math.tanh %119 : vector<8x128xf32>
    %121 = vector.extract_strided_slice %118 {offsets = [0, 0], sizes = [8, 128], strides = [1, 1]} : vector<8x384xf32> to vector<8x128xf32>
    %122 = vector.extract_strided_slice %118 {offsets = [0, 128], sizes = [8, 128], strides = [1, 1]} : vector<8x384xf32> to vector<8x128xf32>
    %123 = vector.extract_strided_slice %118 {offsets = [0, 256], sizes = [8, 128], strides = [1, 1]} : vector<8x384xf32> to vector<8x128xf32>
    %124 = arith.mulf %122, %106 : vector<8x128xf32>
    %125 = arith.mulf %121, %120 : vector<8x128xf32>
    %126 = arith.addf %124, %125 : vector<8x128xf32>
    %127 = math.tanh %126 : vector<8x128xf32>
    %128 = arith.mulf %123, %127 : vector<8x128xf32>
    %129 = arith.truncf %128 : vector<8x128xf32> to vector<8x128xbf16>
    %130 = vector.extract_strided_slice %5 {offsets = [48, 0], sizes = [8, 512], strides = [1, 1]} : vector<64x512xf32> to vector<8x512xf32>
    %cst_21 = arith.constant dense<0.000000e+00> : vector<8x512xf32>
    %131 = tpu.matmul %129, %6, %cst_21 {dimension_numbers = #tpu.dot_dimension_numbers<[1], [0], [0], [1], [0, 0, 1, 1], [], []>} : vector<8x128xbf16>, vector<128x512xbf16>, vector<8x512xf32> -> vector<8x512xf32>
    %132 = arith.addf %130, %131 : vector<8x512xf32>
    %133 = vector.extract_strided_slice %132 {offsets = [0, 0], sizes = [8, 384], strides = [1, 1]} : vector<8x512xf32> to vector<8x384xf32>
    %134 = arith.negf %133 : vector<8x384xf32>
    %135 = math.exp %134 : vector<8x384xf32>
    %cst_22 = arith.constant 1.000000e+00 : f32
    %136 = vector.broadcast %cst_22 : f32 to vector<8x384xf32>
    %137 = arith.addf %136, %135 : vector<8x384xf32>
    %138 = arith.divf %136, %137 : vector<8x384xf32>
    %139 = vector.extract_strided_slice %132 {offsets = [0, 384], sizes = [8, 128], strides = [1, 1]} : vector<8x512xf32> to vector<8x128xf32>
    %140 = math.tanh %139 : vector<8x128xf32>
    %141 = vector.extract_strided_slice %138 {offsets = [0, 0], sizes = [8, 128], strides = [1, 1]} : vector<8x384xf32> to vector<8x128xf32>
    %142 = vector.extract_strided_slice %138 {offsets = [0, 128], sizes = [8, 128], strides = [1, 1]} : vector<8x384xf32> to vector<8x128xf32>
    %143 = vector.extract_strided_slice %138 {offsets = [0, 256], sizes = [8, 128], strides = [1, 1]} : vector<8x384xf32> to vector<8x128xf32>
    %144 = arith.mulf %142, %126 : vector<8x128xf32>
    %145 = arith.mulf %141, %140 : vector<8x128xf32>
    %146 = arith.addf %144, %145 : vector<8x128xf32>
    %147 = math.tanh %146 : vector<8x128xf32>
    %148 = arith.mulf %143, %147 : vector<8x128xf32>
    %149 = arith.truncf %148 : vector<8x128xf32> to vector<8x128xbf16>
    %150 = vector.extract_strided_slice %5 {offsets = [56, 0], sizes = [8, 512], strides = [1, 1]} : vector<64x512xf32> to vector<8x512xf32>
    %cst_23 = arith.constant dense<0.000000e+00> : vector<8x512xf32>
    %151 = tpu.matmul %149, %6, %cst_23 {dimension_numbers = #tpu.dot_dimension_numbers<[1], [0], [0], [1], [0, 0, 1, 1], [], []>} : vector<8x128xbf16>, vector<128x512xbf16>, vector<8x512xf32> -> vector<8x512xf32>
    %152 = arith.addf %150, %151 : vector<8x512xf32>
    %153 = vector.extract_strided_slice %152 {offsets = [0, 0], sizes = [8, 384], strides = [1, 1]} : vector<8x512xf32> to vector<8x384xf32>
    %154 = arith.negf %153 : vector<8x384xf32>
    %155 = math.exp %154 : vector<8x384xf32>
    %cst_24 = arith.constant 1.000000e+00 : f32
    %156 = vector.broadcast %cst_24 : f32 to vector<8x384xf32>
    %157 = arith.addf %156, %155 : vector<8x384xf32>
    %158 = arith.divf %156, %157 : vector<8x384xf32>
    %159 = vector.extract_strided_slice %152 {offsets = [0, 384], sizes = [8, 128], strides = [1, 1]} : vector<8x512xf32> to vector<8x128xf32>
    %160 = math.tanh %159 : vector<8x128xf32>
    %161 = vector.extract_strided_slice %158 {offsets = [0, 0], sizes = [8, 128], strides = [1, 1]} : vector<8x384xf32> to vector<8x128xf32>
    %162 = vector.extract_strided_slice %158 {offsets = [0, 128], sizes = [8, 128], strides = [1, 1]} : vector<8x384xf32> to vector<8x128xf32>
    %163 = vector.extract_strided_slice %158 {offsets = [0, 256], sizes = [8, 128], strides = [1, 1]} : vector<8x384xf32> to vector<8x128xf32>
    %164 = arith.mulf %162, %146 : vector<8x128xf32>
    %165 = arith.mulf %161, %160 : vector<8x128xf32>
    %166 = arith.addf %164, %165 : vector<8x128xf32>
    %167 = math.tanh %166 : vector<8x128xf32>
    %168 = arith.mulf %163, %167 : vector<8x128xf32>
    %169 = arith.truncf %168 : vector<8x128xf32> to vector<8x128xbf16>
    %170 = tpu.concatenate %29, %49, %69, %89, %109, %129, %149, %169 in 0 : vector<8x128xbf16>, vector<8x128xbf16>, vector<8x128xbf16>, vector<8x128xbf16>, vector<8x128xbf16>, vector<8x128xbf16>, vector<8x128xbf16>, vector<8x128xbf16> -> vector<64x128xbf16>
    %c0_25 = arith.constant 0 : index
    %c0_26 = arith.constant 0 : index
    %171 = vector.load %arg4[%c0_25, %c0_26] : memref<128x512xbf16, #tpu.memory_space<vmem>>, vector<128x512xbf16>
    %cst_27 = arith.constant dense<0.000000e+00> : vector<64x512xf32>
    %172 = tpu.matmul %170, %171, %cst_27 {dimension_numbers = #tpu.dot_dimension_numbers<[1], [0], [0], [1], [0, 0, 1, 1], [], []>} : vector<64x128xbf16>, vector<128x512xbf16>, vector<64x512xf32> -> vector<64x512xf32>
    %c0_28 = arith.constant 0 : index
    %c0_29 = arith.constant 0 : index
    %173 = vector.load %arg6[%c0_28, %c0_29] : memref<1x512xf32, #tpu.memory_space<vmem>>, vector<1x512xf32>
    %174 = vector.broadcast %173 : vector<1x512xf32> to vector<64x512xf32>
    %175 = arith.addf %172, %174 : vector<64x512xf32>
    %c0_30 = arith.constant 0 : index
    %c0_31 = arith.constant 0 : index
    %176 = vector.load %arg5[%c0_30, %c0_31] : memref<128x512xbf16, #tpu.memory_space<vmem>>, vector<128x512xbf16>
    %cst_32 = arith.constant 0.000000e+00 : f32
    %177 = vector.broadcast %cst_32 : f32 to vector<8x128xf32>
    %cst_33 = arith.constant 0.000000e+00 : f32
    %178 = vector.broadcast %cst_33 : f32 to vector<8x128xf32>
    %179 = arith.truncf %177 : vector<8x128xf32> to vector<8x128xbf16>
    %cst_34 = arith.constant 0.000000e+00 : f32
    %180 = vector.broadcast %cst_34 : f32 to vector<8x128xf32>
    %181 = vector.extract_strided_slice %175 {offsets = [0, 0], sizes = [8, 512], strides = [1, 1]} : vector<64x512xf32> to vector<8x512xf32>
    %cst_35 = arith.constant dense<0.000000e+00> : vector<8x512xf32>
    %182 = tpu.matmul %179, %176, %cst_35 {dimension_numbers = #tpu.dot_dimension_numbers<[1], [0], [0], [1], [0, 0, 1, 1], [], []>} : vector<8x128xbf16>, vector<128x512xbf16>, vector<8x512xf32> -> vector<8x512xf32>
    %183 = arith.addf %181, %182 : vector<8x512xf32>
    %184 = vector.extract_strided_slice %183 {offsets = [0, 0], sizes = [8, 384], strides = [1, 1]} : vector<8x512xf32> to vector<8x384xf32>
    %185 = arith.negf %184 : vector<8x384xf32>
    %186 = math.exp %185 : vector<8x384xf32>
    %cst_36 = arith.constant 1.000000e+00 : f32
    %187 = vector.broadcast %cst_36 : f32 to vector<8x384xf32>
    %188 = arith.addf %187, %186 : vector<8x384xf32>
    %189 = arith.divf %187, %188 : vector<8x384xf32>
    %190 = vector.extract_strided_slice %183 {offsets = [0, 384], sizes = [8, 128], strides = [1, 1]} : vector<8x512xf32> to vector<8x128xf32>
    %191 = math.tanh %190 : vector<8x128xf32>
    %192 = vector.extract_strided_slice %189 {offsets = [0, 0], sizes = [8, 128], strides = [1, 1]} : vector<8x384xf32> to vector<8x128xf32>
    %193 = vector.extract_strided_slice %189 {offsets = [0, 128], sizes = [8, 128], strides = [1, 1]} : vector<8x384xf32> to vector<8x128xf32>
    %194 = vector.extract_strided_slice %189 {offsets = [0, 256], sizes = [8, 128], strides = [1, 1]} : vector<8x384xf32> to vector<8x128xf32>
    %195 = arith.mulf %193, %178 : vector<8x128xf32>
    %196 = arith.mulf %192, %191 : vector<8x128xf32>
    %197 = arith.addf %195, %196 : vector<8x128xf32>
    %198 = math.tanh %197 : vector<8x128xf32>
    %199 = arith.mulf %194, %198 : vector<8x128xf32>
    %200 = arith.truncf %199 : vector<8x128xf32> to vector<8x128xbf16>
    %201 = arith.addf %180, %199 : vector<8x128xf32>
    %202 = vector.extract_strided_slice %175 {offsets = [8, 0], sizes = [8, 512], strides = [1, 1]} : vector<64x512xf32> to vector<8x512xf32>
    %cst_37 = arith.constant dense<0.000000e+00> : vector<8x512xf32>
    %203 = tpu.matmul %200, %176, %cst_37 {dimension_numbers = #tpu.dot_dimension_numbers<[1], [0], [0], [1], [0, 0, 1, 1], [], []>} : vector<8x128xbf16>, vector<128x512xbf16>, vector<8x512xf32> -> vector<8x512xf32>
    %204 = arith.addf %202, %203 : vector<8x512xf32>
    %205 = vector.extract_strided_slice %204 {offsets = [0, 0], sizes = [8, 384], strides = [1, 1]} : vector<8x512xf32> to vector<8x384xf32>
    %206 = arith.negf %205 : vector<8x384xf32>
    %207 = math.exp %206 : vector<8x384xf32>
    %cst_38 = arith.constant 1.000000e+00 : f32
    %208 = vector.broadcast %cst_38 : f32 to vector<8x384xf32>
    %209 = arith.addf %208, %207 : vector<8x384xf32>
    %210 = arith.divf %208, %209 : vector<8x384xf32>
    %211 = vector.extract_strided_slice %204 {offsets = [0, 384], sizes = [8, 128], strides = [1, 1]} : vector<8x512xf32> to vector<8x128xf32>
    %212 = math.tanh %211 : vector<8x128xf32>
    %213 = vector.extract_strided_slice %210 {offsets = [0, 0], sizes = [8, 128], strides = [1, 1]} : vector<8x384xf32> to vector<8x128xf32>
    %214 = vector.extract_strided_slice %210 {offsets = [0, 128], sizes = [8, 128], strides = [1, 1]} : vector<8x384xf32> to vector<8x128xf32>
    %215 = vector.extract_strided_slice %210 {offsets = [0, 256], sizes = [8, 128], strides = [1, 1]} : vector<8x384xf32> to vector<8x128xf32>
    %216 = arith.mulf %214, %197 : vector<8x128xf32>
    %217 = arith.mulf %213, %212 : vector<8x128xf32>
    %218 = arith.addf %216, %217 : vector<8x128xf32>
    %219 = math.tanh %218 : vector<8x128xf32>
    %220 = arith.mulf %215, %219 : vector<8x128xf32>
    %221 = arith.truncf %220 : vector<8x128xf32> to vector<8x128xbf16>
    %222 = arith.addf %201, %220 : vector<8x128xf32>
    %223 = vector.extract_strided_slice %175 {offsets = [16, 0], sizes = [8, 512], strides = [1, 1]} : vector<64x512xf32> to vector<8x512xf32>
    %cst_39 = arith.constant dense<0.000000e+00> : vector<8x512xf32>
    %224 = tpu.matmul %221, %176, %cst_39 {dimension_numbers = #tpu.dot_dimension_numbers<[1], [0], [0], [1], [0, 0, 1, 1], [], []>} : vector<8x128xbf16>, vector<128x512xbf16>, vector<8x512xf32> -> vector<8x512xf32>
    %225 = arith.addf %223, %224 : vector<8x512xf32>
    %226 = vector.extract_strided_slice %225 {offsets = [0, 0], sizes = [8, 384], strides = [1, 1]} : vector<8x512xf32> to vector<8x384xf32>
    %227 = arith.negf %226 : vector<8x384xf32>
    %228 = math.exp %227 : vector<8x384xf32>
    %cst_40 = arith.constant 1.000000e+00 : f32
    %229 = vector.broadcast %cst_40 : f32 to vector<8x384xf32>
    %230 = arith.addf %229, %228 : vector<8x384xf32>
    %231 = arith.divf %229, %230 : vector<8x384xf32>
    %232 = vector.extract_strided_slice %225 {offsets = [0, 384], sizes = [8, 128], strides = [1, 1]} : vector<8x512xf32> to vector<8x128xf32>
    %233 = math.tanh %232 : vector<8x128xf32>
    %234 = vector.extract_strided_slice %231 {offsets = [0, 0], sizes = [8, 128], strides = [1, 1]} : vector<8x384xf32> to vector<8x128xf32>
    %235 = vector.extract_strided_slice %231 {offsets = [0, 128], sizes = [8, 128], strides = [1, 1]} : vector<8x384xf32> to vector<8x128xf32>
    %236 = vector.extract_strided_slice %231 {offsets = [0, 256], sizes = [8, 128], strides = [1, 1]} : vector<8x384xf32> to vector<8x128xf32>
    %237 = arith.mulf %235, %218 : vector<8x128xf32>
    %238 = arith.mulf %234, %233 : vector<8x128xf32>
    %239 = arith.addf %237, %238 : vector<8x128xf32>
    %240 = math.tanh %239 : vector<8x128xf32>
    %241 = arith.mulf %236, %240 : vector<8x128xf32>
    %242 = arith.truncf %241 : vector<8x128xf32> to vector<8x128xbf16>
    %243 = arith.addf %222, %241 : vector<8x128xf32>
    %244 = vector.extract_strided_slice %175 {offsets = [24, 0], sizes = [8, 512], strides = [1, 1]} : vector<64x512xf32> to vector<8x512xf32>
    %cst_41 = arith.constant dense<0.000000e+00> : vector<8x512xf32>
    %245 = tpu.matmul %242, %176, %cst_41 {dimension_numbers = #tpu.dot_dimension_numbers<[1], [0], [0], [1], [0, 0, 1, 1], [], []>} : vector<8x128xbf16>, vector<128x512xbf16>, vector<8x512xf32> -> vector<8x512xf32>
    %246 = arith.addf %244, %245 : vector<8x512xf32>
    %247 = vector.extract_strided_slice %246 {offsets = [0, 0], sizes = [8, 384], strides = [1, 1]} : vector<8x512xf32> to vector<8x384xf32>
    %248 = arith.negf %247 : vector<8x384xf32>
    %249 = math.exp %248 : vector<8x384xf32>
    %cst_42 = arith.constant 1.000000e+00 : f32
    %250 = vector.broadcast %cst_42 : f32 to vector<8x384xf32>
    %251 = arith.addf %250, %249 : vector<8x384xf32>
    %252 = arith.divf %250, %251 : vector<8x384xf32>
    %253 = vector.extract_strided_slice %246 {offsets = [0, 384], sizes = [8, 128], strides = [1, 1]} : vector<8x512xf32> to vector<8x128xf32>
    %254 = math.tanh %253 : vector<8x128xf32>
    %255 = vector.extract_strided_slice %252 {offsets = [0, 0], sizes = [8, 128], strides = [1, 1]} : vector<8x384xf32> to vector<8x128xf32>
    %256 = vector.extract_strided_slice %252 {offsets = [0, 128], sizes = [8, 128], strides = [1, 1]} : vector<8x384xf32> to vector<8x128xf32>
    %257 = vector.extract_strided_slice %252 {offsets = [0, 256], sizes = [8, 128], strides = [1, 1]} : vector<8x384xf32> to vector<8x128xf32>
    %258 = arith.mulf %256, %239 : vector<8x128xf32>
    %259 = arith.mulf %255, %254 : vector<8x128xf32>
    %260 = arith.addf %258, %259 : vector<8x128xf32>
    %261 = math.tanh %260 : vector<8x128xf32>
    %262 = arith.mulf %257, %261 : vector<8x128xf32>
    %263 = arith.truncf %262 : vector<8x128xf32> to vector<8x128xbf16>
    %264 = arith.addf %243, %262 : vector<8x128xf32>
    %265 = vector.extract_strided_slice %175 {offsets = [32, 0], sizes = [8, 512], strides = [1, 1]} : vector<64x512xf32> to vector<8x512xf32>
    %cst_43 = arith.constant dense<0.000000e+00> : vector<8x512xf32>
    %266 = tpu.matmul %263, %176, %cst_43 {dimension_numbers = #tpu.dot_dimension_numbers<[1], [0], [0], [1], [0, 0, 1, 1], [], []>} : vector<8x128xbf16>, vector<128x512xbf16>, vector<8x512xf32> -> vector<8x512xf32>
    %267 = arith.addf %265, %266 : vector<8x512xf32>
    %268 = vector.extract_strided_slice %267 {offsets = [0, 0], sizes = [8, 384], strides = [1, 1]} : vector<8x512xf32> to vector<8x384xf32>
    %269 = arith.negf %268 : vector<8x384xf32>
    %270 = math.exp %269 : vector<8x384xf32>
    %cst_44 = arith.constant 1.000000e+00 : f32
    %271 = vector.broadcast %cst_44 : f32 to vector<8x384xf32>
    %272 = arith.addf %271, %270 : vector<8x384xf32>
    %273 = arith.divf %271, %272 : vector<8x384xf32>
    %274 = vector.extract_strided_slice %267 {offsets = [0, 384], sizes = [8, 128], strides = [1, 1]} : vector<8x512xf32> to vector<8x128xf32>
    %275 = math.tanh %274 : vector<8x128xf32>
    %276 = vector.extract_strided_slice %273 {offsets = [0, 0], sizes = [8, 128], strides = [1, 1]} : vector<8x384xf32> to vector<8x128xf32>
    %277 = vector.extract_strided_slice %273 {offsets = [0, 128], sizes = [8, 128], strides = [1, 1]} : vector<8x384xf32> to vector<8x128xf32>
    %278 = vector.extract_strided_slice %273 {offsets = [0, 256], sizes = [8, 128], strides = [1, 1]} : vector<8x384xf32> to vector<8x128xf32>
    %279 = arith.mulf %277, %260 : vector<8x128xf32>
    %280 = arith.mulf %276, %275 : vector<8x128xf32>
    %281 = arith.addf %279, %280 : vector<8x128xf32>
    %282 = math.tanh %281 : vector<8x128xf32>
    %283 = arith.mulf %278, %282 : vector<8x128xf32>
    %284 = arith.truncf %283 : vector<8x128xf32> to vector<8x128xbf16>
    %285 = arith.addf %264, %283 : vector<8x128xf32>
    %286 = vector.extract_strided_slice %175 {offsets = [40, 0], sizes = [8, 512], strides = [1, 1]} : vector<64x512xf32> to vector<8x512xf32>
    %cst_45 = arith.constant dense<0.000000e+00> : vector<8x512xf32>
    %287 = tpu.matmul %284, %176, %cst_45 {dimension_numbers = #tpu.dot_dimension_numbers<[1], [0], [0], [1], [0, 0, 1, 1], [], []>} : vector<8x128xbf16>, vector<128x512xbf16>, vector<8x512xf32> -> vector<8x512xf32>
    %288 = arith.addf %286, %287 : vector<8x512xf32>
    %289 = vector.extract_strided_slice %288 {offsets = [0, 0], sizes = [8, 384], strides = [1, 1]} : vector<8x512xf32> to vector<8x384xf32>
    %290 = arith.negf %289 : vector<8x384xf32>
    %291 = math.exp %290 : vector<8x384xf32>
    %cst_46 = arith.constant 1.000000e+00 : f32
    %292 = vector.broadcast %cst_46 : f32 to vector<8x384xf32>
    %293 = arith.addf %292, %291 : vector<8x384xf32>
    %294 = arith.divf %292, %293 : vector<8x384xf32>
    %295 = vector.extract_strided_slice %288 {offsets = [0, 384], sizes = [8, 128], strides = [1, 1]} : vector<8x512xf32> to vector<8x128xf32>
    %296 = math.tanh %295 : vector<8x128xf32>
    %297 = vector.extract_strided_slice %294 {offsets = [0, 0], sizes = [8, 128], strides = [1, 1]} : vector<8x384xf32> to vector<8x128xf32>
    %298 = vector.extract_strided_slice %294 {offsets = [0, 128], sizes = [8, 128], strides = [1, 1]} : vector<8x384xf32> to vector<8x128xf32>
    %299 = vector.extract_strided_slice %294 {offsets = [0, 256], sizes = [8, 128], strides = [1, 1]} : vector<8x384xf32> to vector<8x128xf32>
    %300 = arith.mulf %298, %281 : vector<8x128xf32>
    %301 = arith.mulf %297, %296 : vector<8x128xf32>
    %302 = arith.addf %300, %301 : vector<8x128xf32>
    %303 = math.tanh %302 : vector<8x128xf32>
    %304 = arith.mulf %299, %303 : vector<8x128xf32>
    %305 = arith.truncf %304 : vector<8x128xf32> to vector<8x128xbf16>
    %306 = arith.addf %285, %304 : vector<8x128xf32>
    %307 = vector.extract_strided_slice %175 {offsets = [48, 0], sizes = [8, 512], strides = [1, 1]} : vector<64x512xf32> to vector<8x512xf32>
    %cst_47 = arith.constant dense<0.000000e+00> : vector<8x512xf32>
    %308 = tpu.matmul %305, %176, %cst_47 {dimension_numbers = #tpu.dot_dimension_numbers<[1], [0], [0], [1], [0, 0, 1, 1], [], []>} : vector<8x128xbf16>, vector<128x512xbf16>, vector<8x512xf32> -> vector<8x512xf32>
    %309 = arith.addf %307, %308 : vector<8x512xf32>
    %310 = vector.extract_strided_slice %309 {offsets = [0, 0], sizes = [8, 384], strides = [1, 1]} : vector<8x512xf32> to vector<8x384xf32>
    %311 = arith.negf %310 : vector<8x384xf32>
    %312 = math.exp %311 : vector<8x384xf32>
    %cst_48 = arith.constant 1.000000e+00 : f32
    %313 = vector.broadcast %cst_48 : f32 to vector<8x384xf32>
    %314 = arith.addf %313, %312 : vector<8x384xf32>
    %315 = arith.divf %313, %314 : vector<8x384xf32>
    %316 = vector.extract_strided_slice %309 {offsets = [0, 384], sizes = [8, 128], strides = [1, 1]} : vector<8x512xf32> to vector<8x128xf32>
    %317 = math.tanh %316 : vector<8x128xf32>
    %318 = vector.extract_strided_slice %315 {offsets = [0, 0], sizes = [8, 128], strides = [1, 1]} : vector<8x384xf32> to vector<8x128xf32>
    %319 = vector.extract_strided_slice %315 {offsets = [0, 128], sizes = [8, 128], strides = [1, 1]} : vector<8x384xf32> to vector<8x128xf32>
    %320 = vector.extract_strided_slice %315 {offsets = [0, 256], sizes = [8, 128], strides = [1, 1]} : vector<8x384xf32> to vector<8x128xf32>
    %321 = arith.mulf %319, %302 : vector<8x128xf32>
    %322 = arith.mulf %318, %317 : vector<8x128xf32>
    %323 = arith.addf %321, %322 : vector<8x128xf32>
    %324 = math.tanh %323 : vector<8x128xf32>
    %325 = arith.mulf %320, %324 : vector<8x128xf32>
    %326 = arith.truncf %325 : vector<8x128xf32> to vector<8x128xbf16>
    %327 = arith.addf %306, %325 : vector<8x128xf32>
    %328 = vector.extract_strided_slice %175 {offsets = [56, 0], sizes = [8, 512], strides = [1, 1]} : vector<64x512xf32> to vector<8x512xf32>
    %cst_49 = arith.constant dense<0.000000e+00> : vector<8x512xf32>
    %329 = tpu.matmul %326, %176, %cst_49 {dimension_numbers = #tpu.dot_dimension_numbers<[1], [0], [0], [1], [0, 0, 1, 1], [], []>} : vector<8x128xbf16>, vector<128x512xbf16>, vector<8x512xf32> -> vector<8x512xf32>
    %330 = arith.addf %328, %329 : vector<8x512xf32>
    %331 = vector.extract_strided_slice %330 {offsets = [0, 0], sizes = [8, 384], strides = [1, 1]} : vector<8x512xf32> to vector<8x384xf32>
    %332 = arith.negf %331 : vector<8x384xf32>
    %333 = math.exp %332 : vector<8x384xf32>
    %cst_50 = arith.constant 1.000000e+00 : f32
    %334 = vector.broadcast %cst_50 : f32 to vector<8x384xf32>
    %335 = arith.addf %334, %333 : vector<8x384xf32>
    %336 = arith.divf %334, %335 : vector<8x384xf32>
    %337 = vector.extract_strided_slice %330 {offsets = [0, 384], sizes = [8, 128], strides = [1, 1]} : vector<8x512xf32> to vector<8x128xf32>
    %338 = math.tanh %337 : vector<8x128xf32>
    %339 = vector.extract_strided_slice %336 {offsets = [0, 0], sizes = [8, 128], strides = [1, 1]} : vector<8x384xf32> to vector<8x128xf32>
    %340 = vector.extract_strided_slice %336 {offsets = [0, 128], sizes = [8, 128], strides = [1, 1]} : vector<8x384xf32> to vector<8x128xf32>
    %341 = vector.extract_strided_slice %336 {offsets = [0, 256], sizes = [8, 128], strides = [1, 1]} : vector<8x384xf32> to vector<8x128xf32>
    %342 = arith.mulf %340, %323 : vector<8x128xf32>
    %343 = arith.mulf %339, %338 : vector<8x128xf32>
    %344 = arith.addf %342, %343 : vector<8x128xf32>
    %345 = math.tanh %344 : vector<8x128xf32>
    %346 = arith.mulf %341, %345 : vector<8x128xf32>
    %347 = arith.addf %327, %346 : vector<8x128xf32>
    %348 = arith.truncf %347 : vector<8x128xf32> to vector<8x128xbf16>
    %c0_51 = arith.constant 0 : index
    %c0_52 = arith.constant 0 : index
    %349 = vector.load %arg7[%c0_51, %c0_52] : memref<128x128xbf16, #tpu.memory_space<vmem>>, vector<128x128xbf16>
    %cst_53 = arith.constant dense<0.000000e+00> : vector<8x128xf32>
    %350 = tpu.matmul %348, %349, %cst_53 {dimension_numbers = #tpu.dot_dimension_numbers<[1], [0], [0], [1], [0, 0, 1, 1], [], []>} : vector<8x128xbf16>, vector<128x128xbf16>, vector<8x128xf32> -> vector<8x128xf32>
    %c0_54 = arith.constant 0 : index
    %c0_55 = arith.constant 0 : index
    %351 = vector.load %arg8[%c0_54, %c0_55] : memref<1x128xf32, #tpu.memory_space<vmem>>, vector<1x128xf32>
    %352 = vector.broadcast %351 : vector<1x128xf32> to vector<8x128xf32>
    %353 = arith.addf %350, %352 : vector<8x128xf32>
    %cst_56 = arith.constant 0.000000e+00 : f32
    %354 = vector.broadcast %cst_56 : f32 to vector<8x128xf32>
    %355 = arith.maximumf %353, %354 : vector<8x128xf32>
    %356 = arith.truncf %355 : vector<8x128xf32> to vector<8x128xbf16>
    %c0_57 = arith.constant 0 : index
    %c0_58 = arith.constant 0 : index
    %357 = vector.load %arg9[%c0_57, %c0_58] : memref<128x64xbf16, #tpu.memory_space<vmem>>, vector<128x64xbf16>
    %cst_59 = arith.constant dense<0.000000e+00> : vector<8x64xf32>
    %358 = tpu.matmul %356, %357, %cst_59 {dimension_numbers = #tpu.dot_dimension_numbers<[1], [0], [0], [1], [0, 0, 1, 1], [], []>} : vector<8x128xbf16>, vector<128x64xbf16>, vector<8x64xf32> -> vector<8x64xf32>
    %c0_60 = arith.constant 0 : index
    %c0_61 = arith.constant 0 : index
    %359 = vector.load %arg10[%c0_60, %c0_61] : memref<1x64xf32, #tpu.memory_space<vmem>>, vector<1x64xf32>
    %360 = vector.broadcast %359 : vector<1x64xf32> to vector<8x64xf32>
    %361 = arith.addf %358, %360 : vector<8x64xf32>
    %cst_62 = arith.constant 0.000000e+00 : f32
    %362 = vector.broadcast %cst_62 : f32 to vector<8x64xf32>
    %363 = arith.maximumf %361, %362 : vector<8x64xf32>
    %364 = arith.truncf %363 : vector<8x64xf32> to vector<8x64xbf16>
    %c0_63 = arith.constant 0 : index
    %c0_64 = arith.constant 0 : index
    %365 = vector.load %arg11[%c0_63, %c0_64] : memref<64x3xbf16, #tpu.memory_space<vmem>>, vector<64x3xbf16>
    %cst_65 = arith.constant dense<0.000000e+00> : vector<8x3xf32>
    %366 = tpu.matmul %364, %365, %cst_65 {dimension_numbers = #tpu.dot_dimension_numbers<[1], [0], [0], [1], [0, 0, 1, 1], [], []>} : vector<8x64xbf16>, vector<64x3xbf16>, vector<8x3xf32> -> vector<8x3xf32>
    %c0_66 = arith.constant 0 : index
    %c0_67 = arith.constant 0 : index
    %367 = vector.load %arg12[%c0_66, %c0_67] : memref<1x3xf32, #tpu.memory_space<vmem>>, vector<1x3xf32>
    %368 = vector.broadcast %367 : vector<1x3xf32> to vector<8x3xf32>
    %369 = arith.addf %366, %368 : vector<8x3xf32>
    %c0_68 = arith.constant 0 : index
    %c0_69 = arith.constant 0 : index
    %370 = vector.load %arg13[%c0_68, %c0_69] : memref<8x3xf32, #tpu.memory_space<vmem>>, vector<8x3xf32>
    tpu.vector_store %arg13[%c0_68, %c0_69], %369 {strides = array<i32>} : memref<8x3xf32, #tpu.memory_space<vmem>>, vector<8x3xf32>,
    return
  }
}

</mosaic_0001>

<llo_original>
// kernel: lstm_model_forward.1
$region0: #{lstm_model_forward.1}
  #allocation0 [shape = 'u32[]', space=smem, size = 0x4, offset = 0x4, fixed_abs, tag = 'smem constant byte address 0x4 - core index']
  #allocation1 [shape = 'u32[72,128]{1,0:T(1,128)}', space=vmem, size = 0x9000, scoped, tag = 'internal scratch']
  %s0 = inlined_call_operand.vmem [shape: bf16[64,100], index: 0, kind: input, shape index: {}]
  %s1 = inlined_call_operand.hbm [shape: bf16[100,512], index: 1, kind: input, shape index: {}]
  %s2 = inlined_call_operand.hbm [shape: bf16[128,512], index: 2, kind: input, shape index: {}]
  %s3 = inlined_call_operand.vmem [shape: f32[1,512], index: 3, kind: input, shape index: {}]
  %s4 = inlined_call_operand.hbm [shape: bf16[128,512], index: 4, kind: input, shape index: {}]
  %s5 = inlined_call_operand.hbm [shape: bf16[128,512], index: 5, kind: input, shape index: {}]
  %s6 = inlined_call_operand.vmem [shape: f32[1,512], index: 6, kind: input, shape index: {}]
  %s7 = inlined_call_operand.vmem [shape: bf16[128,128], index: 7, kind: input, shape index: {}]
  %s8 = inlined_call_operand.vmem [shape: f32[1,128], index: 8, kind: input, shape index: {}]
  %s9 = inlined_call_operand.vmem [shape: bf16[128,64], index: 9, kind: input, shape index: {}]
  %s10 = inlined_call_operand.vmem [shape: f32[1,64], index: 10, kind: input, shape index: {}]
  %s11 = inlined_call_operand.vmem [shape: bf16[64,3], index: 11, kind: input, shape index: {}]
  %s12 = inlined_call_operand.vmem [shape: f32[1,3], index: 12, kind: input, shape index: {}]
  %s13 = inlined_call_operand.vmem [shape: f32[8,3], index: 13, kind: output, shape index: {}]
  %s14 = sld [smem:[#allocation0]]
  $region78: #{lstm_model_forward.1} parent=0
    _
  %s16 = ssub.s32 1, %s14
  %s17 = scalar_select 0, %s16, %s14
  $region1: #{lstm_model_forward.1} parent=0
    #allocation2 [shape = 'u8[106496]{0}', space=vmem, size = 0x1a000, scoped, tag = 'input window, operand 1, single buffered']
    #allocation3 [shape = 's32[1]{0}', space=sflag, size = 0x4, scoped, tag = 'scoped memory for lstm_model_forward.1']
    #allocation4 [shape = 'u8[131072]{0}', space=vmem, size = 0x20000, scoped, tag = 'input window, operand 2, single buffered']
    #allocation5 [shape = 's32[1]{0}', space=sflag, size = 0x4, scoped, tag = 'scoped memory for lstm_model_forward.1']
    #allocation6 [shape = 'u8[131072]{0}', space=vmem, size = 0x20000, scoped, tag = 'input window, operand 4, single buffered']
    #allocation7 [shape = 'u8[131072]{0}', space=vmem, size = 0x20000, scoped, tag = 'input window, operand 5, single buffered']
    #allocation8 [shape = 's32[1]{0}', space=sflag, size = 0x4, scoped, tag = 'scoped memory for lstm_model_forward.1']
    %18 = vsyncpa [#allocation3], 0
    %19 = vsyncpa [#allocation5], 0
    %20 = vsyncpa [#allocation8], 0
    // Predicated region
    $region2: #{lstm_model_forward.1} parent=1 // pred_check
      _
    $region3: #{lstm_model_forward.1} parent=1 // pred_check_branch
      %22 = sbr.rel (0) target = $region5
    $region4: #{lstm_model_forward.1} parent=1 // pred_region
      _
    $region5: #{lstm_model_forward.1} parent=1 // pred_fallthru
      _
    // Predicated region
    $region6: #{lstm_model_forward.1} parent=1 // pred_check
      _
    $region7: #{lstm_model_forward.1} parent=1 // pred_check_branch
      %24 = sbr.rel (0) target = $region9
    $region8: #{lstm_model_forward.1} parent=1 // pred_region
      %26 = vsyncadd [#allocation3], 0
      %s27 = sshll.u32 %s1, 4
      %s28 = int_to_ptr.hbm [resolvable:$true] %s27
      %s29 = sshll.u32 [#allocation2], 4
      %s30 = int_to_ptr.vmem [resolvable:$true] %s29
      %35 = dma.hbm_to_vmem [thread:$0]  %s28, 3328, %s30, [#allocation3], 256, 256, 16
    $region9: #{lstm_model_forward.1} parent=1 // pred_fallthru
      _
    // Predicated region
    $region10: #{lstm_model_forward.1} parent=1 // pred_check
      _
    $region11: #{lstm_model_forward.1} parent=1 // pred_check_branch
      %37 = sbr.rel (0) target = $region13
    $region12: #{lstm_model_forward.1} parent=1 // pred_region
      %39 = vsyncadd [#allocation5], 0
      %s40 = sshll.u32 %s2, 4
      %s41 = int_to_ptr.hbm [resolvable:$true] %s40
      %s42 = sshll.u32 [#allocation4], 4
      %s43 = int_to_ptr.vmem [resolvable:$true] %s42
      %48 = dma.hbm_to_vmem [thread:$0]  %s41, 4096, %s43, [#allocation5], 256, 256, 16
    $region13: #{lstm_model_forward.1} parent=1 // pred_fallthru
      _
    // Predicated region
    $region14: #{lstm_model_forward.1} parent=1 // pred_check
      _
    $region15: #{lstm_model_forward.1} parent=1 // pred_check_branch
      %50 = sbr.rel (0) target = $region17
    $region16: #{lstm_model_forward.1} parent=1 // pred_region
      _
    $region17: #{lstm_model_forward.1} parent=1 // pred_fallthru
      _
    // Predicated region
    $region18: #{lstm_model_forward.1} parent=1 // pred_check
      _
    $region19: #{lstm_model_forward.1} parent=1 // pred_check_branch
      %52 = sbr.rel (0) target = $region21
    $region20: #{lstm_model_forward.1} parent=1 // pred_region
      %54 = vsyncadd [#allocation5], 0
      %s55 = sshll.u32 %s4, 4
      %s56 = int_to_ptr.hbm [resolvable:$true] %s55
      %s57 = sshll.u32 [#allocation6], 4
      %s58 = int_to_ptr.vmem [resolvable:$true] %s57
      %63 = dma.hbm_to_vmem [thread:$0]  %s56, 4096, %s58, [#allocation5], 256, 256, 16
    $region21: #{lstm_model_forward.1} parent=1 // pred_fallthru
      _
    // Predicated region
    $region22: #{lstm_model_forward.1} parent=1 // pred_check
      _
    $region23: #{lstm_model_forward.1} parent=1 // pred_check_branch
      %65 = sbr.rel (0) target = $region25
    $region24: #{lstm_model_forward.1} parent=1 // pred_region
      %67 = vsyncadd [#allocation8], 0
      %s68 = sshll.u32 %s5, 4
      %s69 = int_to_ptr.hbm [resolvable:$true] %s68
      %s70 = sshll.u32 [#allocation7], 4
      %s71 = int_to_ptr.vmem [resolvable:$true] %s70
      %76 = dma.hbm_to_vmem [thread:$0]  %s69, 4096, %s71, [#allocation8], 256, 256, 16
    $region25: #{lstm_model_forward.1} parent=1 // pred_fallthru
      _
    // Predicated region
    $region26: #{lstm_model_forward.1} parent=1 // pred_check
      _
    $region27: #{lstm_model_forward.1} parent=1 // pred_check_branch
      %78 = sbr.rel (0) target = $region29
    $region28: #{lstm_model_forward.1} parent=1 // pred_region
      _
    $region29: #{lstm_model_forward.1} parent=1 // pred_fallthru
      _
    // Predicated region
    $region30: #{lstm_model_forward.1} parent=1 // pred_check
      _
    $region31: #{lstm_model_forward.1} parent=1 // pred_check_branch
      %80 = sbr.rel (0) target = $region33
    $region32: #{lstm_model_forward.1} parent=1 // pred_region
      _
    $region33: #{lstm_model_forward.1} parent=1 // pred_fallthru
      _
    // Predicated region
    $region34: #{lstm_model_forward.1} parent=1 // pred_check
      _
    $region35: #{lstm_model_forward.1} parent=1 // pred_check_branch
      %82 = sbr.rel (0) target = $region37
    $region36: #{lstm_model_forward.1} parent=1 // pred_region
      _
    $region37: #{lstm_model_forward.1} parent=1 // pred_fallthru
      _
    // Predicated region
    $region38: #{lstm_model_forward.1} parent=1 // pred_check
      _
    $region39: #{lstm_model_forward.1} parent=1 // pred_check_branch
      %84 = sbr.rel (0) target = $region41
    $region40: #{lstm_model_forward.1} parent=1 // pred_region
      _
    $region41: #{lstm_model_forward.1} parent=1 // pred_fallthru
      _
    // Predicated region
    $region42: #{lstm_model_forward.1} parent=1 // pred_check
      _
    $region43: #{lstm_model_forward.1} parent=1 // pred_check_branch
      %86 = sbr.rel (0) target = $region45
    $region44: #{lstm_model_forward.1} parent=1 // pred_region
      _
    $region45: #{lstm_model_forward.1} parent=1 // pred_fallthru
      _
    // Predicated region
    $region46: #{lstm_model_forward.1} parent=1 // pred_check
      _
    $region47: #{lstm_model_forward.1} parent=1 // pred_check_branch
      %88 = sbr.rel (0) target = $region49
    $region48: #{lstm_model_forward.1} parent=1 // pred_region
      _
    $region49: #{lstm_model_forward.1} parent=1 // pred_fallthru
      _
    // Predicated region
    $region50: #{lstm_model_forward.1} parent=1 // pred_check
      _
    $region51: #{lstm_model_forward.1} parent=1 // pred_check_branch
      %90 = sbr.rel (0) target = $region53
    $region52: #{lstm_model_forward.1} parent=1 // pred_region
      _
    $region53: #{lstm_model_forward.1} parent=1 // pred_fallthru
      _
    // Predicated region
    $region54: #{lstm_model_forward.1} parent=1 // pred_check
      _
    $region55: #{lstm_model_forward.1} parent=1 // pred_check_branch
      %92 = sbr.rel (0) target = $region57
    $region56: #{lstm_model_forward.1} parent=1 // pred_region
      %94 = dma.done [#allocation3], 3328
    $region57: #{lstm_model_forward.1} parent=1 // pred_fallthru
      _
    // Predicated region
    $region58: #{lstm_model_forward.1} parent=1 // pred_check
      _
    $region59: #{lstm_model_forward.1} parent=1 // pred_check_branch
      %96 = sbr.rel (0) target = $region61
    $region60: #{lstm_model_forward.1} parent=1 // pred_region
      %98 = dma.done [#allocation5], 4096
    $region61: #{lstm_model_forward.1} parent=1 // pred_fallthru
      _
    // Predicated region
    $region62: #{lstm_model_forward.1} parent=1 // pred_check
      _
    $region63: #{lstm_model_forward.1} parent=1 // pred_check_branch
      %100 = sbr.rel (0) target = $region65
    $region64: #{lstm_model_forward.1} parent=1 // pred_region
      %102 = dma.done [#allocation5], 4096
    $region65: #{lstm_model_forward.1} parent=1 // pred_fallthru
      _
    // Predicated region
    $region66: #{lstm_model_forward.1} parent=1 // pred_check
      _
    $region67: #{lstm_model_forward.1} parent=1 // pred_check_branch
      %104 = sbr.rel (0) target = $region69
    $region68: #{lstm_model_forward.1} parent=1 // pred_region
      %106 = dma.done [#allocation8], 4096
    $region69: #{lstm_model_forward.1} parent=1 // pred_fallthru
      _
    %v108 = vld [vmem:[%s0] sm:$0xf]
    %v109 = vld [vmem:[%s0 + $0x4] sm:$0xf]
    %v110 = vld [vmem:[%s0 + $0x8] sm:$0xf]
    %v111 = vld [vmem:[%s0 + $0xc] sm:$0xf]
    %v112 = vld [vmem:[%s0 + $0x10] sm:$0xf]
    %v113 = vld [vmem:[%s0 + $0x14] sm:$0xf]
    %v114 = vld [vmem:[%s0 + $0x18] sm:$0xf]
    %v115 = vld [vmem:[%s0 + $0x1c] sm:$0xf]
    %v116 = vld [vmem:[#allocation2] sm:$0xff]
    %v117 = vld [vmem:[#allocation2 + $0x8] sm:$0xff]
    %v118 = vld [vmem:[#allocation2 + $0x10] sm:$0xff]
    %v119 = vld [vmem:[#allocation2 + $0x18] sm:$0xff]
    %v120 = vld [vmem:[#allocation2 + $0x20] sm:$0xff]
    %v121 = vld [vmem:[#allocation2 + $0x28] sm:$0xff]
    %v122 = vld [vmem:[#allocation2 + $0x30] sm:$0xff]
    %v123 = vld [vmem:[#allocation2 + $0x38] sm:$0xff]
    %v124 = vld [vmem:[#allocation2 + $0x40] sm:$0xff]
    %v125 = vld [vmem:[#allocation2 + $0x48] sm:$0xff]
    %v126 = vld [vmem:[#allocation2 + $0x50] sm:$0xff]
    %v127 = vld [vmem:[#allocation2 + $0x58] sm:$0xff]
    %v128 = vld [vmem:[#allocation2 + $0x60] sm:$0xff]
    %v129 = vld [vmem:[#allocation2 + $0x68] sm:$0xff]
    %v130 = vld [vmem:[#allocation2 + $0x70] sm:$0xff]
    %v131 = vld [vmem:[#allocation2 + $0x78] sm:$0xff]
    %v132 = vld [vmem:[#allocation2 + $0x80] sm:$0xff]
    %v133 = vld [vmem:[#allocation2 + $0x88] sm:$0xff]
    %v134 = vld [vmem:[#allocation2 + $0x90] sm:$0xff]
    %v135 = vld [vmem:[#allocation2 + $0x98] sm:$0xff]
    %v136 = vld [vmem:[#allocation2 + $0xa0] sm:$0xff]
    %v137 = vld [vmem:[#allocation2 + $0xa8] sm:$0xff]
    %v138 = vld [vmem:[#allocation2 + $0xb0] sm:$0xff]
    %v139 = vld [vmem:[#allocation2 + $0xb8] sm:$0xff]
    %v140 = vld [vmem:[#allocation2 + $0xc0] sm:$0x33]
    %v141 = vld [vmem:[#allocation2 + $0xc8] sm:$0x33]
    %v142 = vld [vmem:[%s3] sm:$0xf]
    %v144 = vperm.slane %v142, 0
    %v145 = vperm.slane %v142, 1
    %v146 = vperm.slane %v142, 2
    %v147 = vperm.slane %v142, 3
    %v160 = vunpack.c.l.b16 %v108
    %v161 = vunpack.c.l.b16 %v109
    %v162 = vunpack.c.l.b16 %v110
    %v163 = vunpack.c.l.b16 %v111
    %v164 = vunpack.c.l.b16 %v112
    %v165 = vunpack.c.l.b16 %v113
    %v166 = vunpack.c.l.b16 %v114
    %v167 = vunpack.c.l.b16 %v115
    %v168 = vpack.c.b16 %v161, %v160
    %v169 = vpack.c.b16 %v163, %v162
    %v170 = vpack.c.b16 %v165, %v164
    %v171 = vpack.c.b16 %v167, %v166
    %v198 = vunpack.c.l.b16 %v116
    %v199 = vunpack.c.h.b16 %v116
    %v200 = vunpack.c.l.b16 %v117
    %v201 = vunpack.c.h.b16 %v117
    %v202 = vunpack.c.l.b16 %v118
    %v203 = vunpack.c.h.b16 %v118
    %v204 = vunpack.c.l.b16 %v119
    %v205 = vunpack.c.h.b16 %v119
    %v206 = vunpack.c.l.b16 %v120
    %v207 = vunpack.c.h.b16 %v120
    %v208 = vunpack.c.l.b16 %v121
    %v209 = vunpack.c.h.b16 %v121
    %v210 = vunpack.c.l.b16 %v122
    %v211 = vunpack.c.h.b16 %v122
    %v212 = vunpack.c.l.b16 %v123
    %v213 = vunpack.c.h.b16 %v123
    %v214 = vunpack.c.l.b16 %v124
    %v215 = vunpack.c.h.b16 %v124
    %v216 = vunpack.c.l.b16 %v125
    %v217 = vunpack.c.h.b16 %v125
    %v218 = vunpack.c.l.b16 %v126
    %v219 = vunpack.c.h.b16 %v126
    %v220 = vunpack.c.l.b16 %v127
    %v221 = vunpack.c.h.b16 %v127
    %v222 = vunpack.c.l.b16 %v128
    %v223 = vunpack.c.h.b16 %v128
    %v224 = vunpack.c.l.b16 %v129
    %v225 = vunpack.c.h.b16 %v129
    %v226 = vunpack.c.l.b16 %v130
    %v227 = vunpack.c.h.b16 %v130
    %v228 = vunpack.c.l.b16 %v131
    %v229 = vunpack.c.h.b16 %v131
    %v230 = vunpack.c.l.b16 %v132
    %v231 = vunpack.c.h.b16 %v132
    %v232 = vunpack.c.l.b16 %v133
    %v233 = vunpack.c.h.b16 %v133
    %v234 = vunpack.c.l.b16 %v134
    %v235 = vunpack.c.h.b16 %v134
    %v236 = vunpack.c.l.b16 %v135
    %v237 = vunpack.c.h.b16 %v135
    %v238 = vunpack.c.l.b16 %v136
    %v239 = vunpack.c.h.b16 %v136
    %v240 = vunpack.c.l.b16 %v137
    %v241 = vunpack.c.h.b16 %v137
    %v242 = vunpack.c.l.b16 %v138
    %v243 = vunpack.c.h.b16 %v138
    %v244 = vunpack.c.l.b16 %v139
    %v245 = vunpack.c.h.b16 %v139
    %v246 = vunpack.c.l.b16 %v140
    %v247 = vunpack.c.h.b16 %v140
    %v248 = vunpack.c.l.b16 %v141
    %v249 = vunpack.c.h.b16 %v141
    %v250 = vpack.c.b16 %v202, %v198
    %v251 = vpack.c.b16 %v203, %v199
    %v252 = vpack.c.b16 %v204, %v200
    %v253 = vpack.c.b16 %v205, %v201
    %v254 = vpack.c.b16 %v210, %v206
    %v255 = vpack.c.b16 %v211, %v207
    %v256 = vpack.c.b16 %v212, %v208
    %v257 = vpack.c.b16 %v213, %v209
    %v258 = vpack.c.b16 %v218, %v214
    %v259 = vpack.c.b16 %v219, %v215
    %v260 = vpack.c.b16 %v220, %v216
    %v261 = vpack.c.b16 %v221, %v217
    %v262 = vpack.c.b16 %v226, %v222
    %v263 = vpack.c.b16 %v227, %v223
    %v264 = vpack.c.b16 %v228, %v224
    %v265 = vpack.c.b16 %v229, %v225
    %v266 = vpack.c.b16 %v234, %v230
    %v267 = vpack.c.b16 %v235, %v231
    %v268 = vpack.c.b16 %v236, %v232
    %v269 = vpack.c.b16 %v237, %v233
    %v270 = vpack.c.b16 %v242, %v238
    %v271 = vpack.c.b16 %v243, %v239
    %v272 = vpack.c.b16 %v244, %v240
    %v273 = vpack.c.b16 %v245, %v241
    %v274 = vpack.c.b16 %v246, %v246
    %v275 = vpack.c.b16 %v247, %v247
    %v276 = vpack.c.b16 %v248, %v248
    %v277 = vpack.c.b16 %v249, %v249
    %vm302 = vcmask 818176
    %v304 = vsel %vm302, %v168, 0
    %v307 = vsel %vm302, %v169, 0
    %v310 = vsel %vm302, %v170, 0
    %v313 = vsel %vm302, %v171, 0
    %vm315 = vcmask 1041408
    %v317 = vsel %vm315, %v274, 0
    %v320 = vsel %vm315, %v275, 0
    %v323 = vsel %vm315, %v276, 0
    %v326 = vsel %vm315, %v277, 0
    %328 = vmatpush.bf16.msra.mxu0 0
    %329 = vmatpush.bf16.msra.mxu0 %v317
    %330 = vmatpush.bf16.msra.mxu0 %v270
    %331 = vmatpush.bf16.msra.mxu0 %v266
    %332 = vmatpush.bf16.msra.mxu0 %v262
    %333 = vmatpush.bf16.msra.mxu0 %v258
    %334 = vmatpush.bf16.msra.mxu0 %v254
    %335 = vmatpush.bf16.msra.mxu0 %v250
    %336 = vmatmul.bf16.gmra.mxu0 %v304
    %v337 = vpop.f32.mrf.mxu0
    %v338 = vadd.f32 %v144, %v337
    %v339 = vpop.f32.mrf.mxu0
    %v340 = vadd.f32 %v144, %v339
    %341 = vmatmul.bf16.gmra.mxu0 %v307
    %v342 = vpop.f32.mrf.mxu0
    %v343 = vadd.f32 %v144, %v342
    %v344 = vpop.f32.mrf.mxu0
    %v345 = vadd.f32 %v144, %v344
    %346 = vmatmul.bf16.gmra.mxu0 %v310
    %v347 = vpop.f32.mrf.mxu0
    %v348 = vadd.f32 %v144, %v347
    %v349 = vpop.f32.mrf.mxu0
    %v350 = vadd.f32 %v144, %v349
    %351 = vmatmul.bf16.gmra.mxu0 %v313
    %v352 = vpop.f32.mrf.mxu0
    %v353 = vadd.f32 %v144, %v352
    %v354 = vpop.f32.mrf.mxu0
    %v355 = vadd.f32 %v144, %v354
    %356 = vdwg.mxu0
    %357 = vmatpush.bf16.msra.mxu0 0
    %358 = vmatpush.bf16.msra.mxu0 %v320
    %359 = vmatpush.bf16.msra.mxu0 %v271
    %360 = vmatpush.bf16.msra.mxu0 %v267
    %361 = vmatpush.bf16.msra.mxu0 %v263
    %362 = vmatpush.bf16.msra.mxu0 %v259
    %363 = vmatpush.bf16.msra.mxu0 %v255
    %364 = vmatpush.bf16.msra.mxu0 %v251
    %365 = vmatmul.bf16.gmra.mxu0 %v304
    %v366 = vpop.f32.mrf.mxu0
    %v367 = vadd.f32 %v145, %v366
    %v368 = vpop.f32.mrf.mxu0
    %v369 = vadd.f32 %v145, %v368
    %370 = vmatmul.bf16.gmra.mxu0 %v307
    %v371 = vpop.f32.mrf.mxu0
    %v372 = vadd.f32 %v145, %v371
    %v373 = vpop.f32.mrf.mxu0
    %v374 = vadd.f32 %v145, %v373
    %375 = vmatmul.bf16.gmra.mxu0 %v310
    %v376 = vpop.f32.mrf.mxu0
    %v377 = vadd.f32 %v145, %v376
    %v378 = vpop.f32.mrf.mxu0
    %v379 = vadd.f32 %v145, %v378
    %380 = vmatmul.bf16.gmra.mxu0 %v313
    %v381 = vpop.f32.mrf.mxu0
    %v382 = vadd.f32 %v145, %v381
    %v383 = vpop.f32.mrf.mxu0
    %v384 = vadd.f32 %v145, %v383
    %385 = vdwg.mxu0
    %386 = vmatpush.bf16.msra.mxu0 0
    %387 = vmatpush.bf16.msra.mxu0 %v323
    %388 = vmatpush.bf16.msra.mxu0 %v272
    %389 = vmatpush.bf16.msra.mxu0 %v268
    %390 = vmatpush.bf16.msra.mxu0 %v264
    %391 = vmatpush.bf16.msra.mxu0 %v260
    %392 = vmatpush.bf16.msra.mxu0 %v256
    %393 = vmatpush.bf16.msra.mxu0 %v252
    %394 = vmatmul.bf16.gmra.mxu0 %v304
    %v395 = vpop.f32.mrf.mxu0
    %v396 = vadd.f32 %v146, %v395
    %v397 = vpop.f32.mrf.mxu0
    %v398 = vadd.f32 %v146, %v397
    %399 = vmatmul.bf16.gmra.mxu0 %v307
    %v400 = vpop.f32.mrf.mxu0
    %v401 = vadd.f32 %v146, %v400
    %v402 = vpop.f32.mrf.mxu0
    %v403 = vadd.f32 %v146, %v402
    %404 = vmatmul.bf16.gmra.mxu0 %v310
    %v405 = vpop.f32.mrf.mxu0
    %v406 = vadd.f32 %v146, %v405
    %v407 = vpop.f32.mrf.mxu0
    %v408 = vadd.f32 %v146, %v407
    %409 = vmatmul.bf16.gmra.mxu0 %v313
    %v410 = vpop.f32.mrf.mxu0
    %v411 = vadd.f32 %v146, %v410
    %v412 = vpop.f32.mrf.mxu0
    %v413 = vadd.f32 %v146, %v412
    %414 = vdwg.mxu0
    %415 = vmatpush.bf16.msra.mxu0 0
    %416 = vmatpush.bf16.msra.mxu0 %v326
    %417 = vmatpush.bf16.msra.mxu0 %v273
    %418 = vmatpush.bf16.msra.mxu0 %v269
    %419 = vmatpush.bf16.msra.mxu0 %v265
    %420 = vmatpush.bf16.msra.mxu0 %v261
    %421 = vmatpush.bf16.msra.mxu0 %v257
    %422 = vmatpush.bf16.msra.mxu0 %v253
    %423 = vmatmul.bf16.gmra.mxu0 %v304
    %v424 = vpop.f32.mrf.mxu0
    %v425 = vadd.f32 %v147, %v424
    %v426 = vpop.f32.mrf.mxu0
    %v427 = vadd.f32 %v147, %v426
    %428 = vmatmul.bf16.gmra.mxu0 %v307
    %v429 = vpop.f32.mrf.mxu0
    %v430 = vadd.f32 %v147, %v429
    %v431 = vpop.f32.mrf.mxu0
    %v432 = vadd.f32 %v147, %v431
    %433 = vmatmul.bf16.gmra.mxu0 %v310
    %v434 = vpop.f32.mrf.mxu0
    %v435 = vadd.f32 %v147, %v434
    %v436 = vpop.f32.mrf.mxu0
    %v437 = vadd.f32 %v147, %v436
    %438 = vmatmul.bf16.gmra.mxu0 %v313
    %v439 = vpop.f32.mrf.mxu0
    %v440 = vadd.f32 %v147, %v439
    %v441 = vpop.f32.mrf.mxu0
    %v442 = vadd.f32 %v147, %v441
    %443 = vdwg.mxu0
    %v444 = vld [vmem:[#allocation4] sm:$0xff]
    %v445 = vld [vmem:[#allocation4 + $0x8] sm:$0xff]
    %v446 = vld [vmem:[#allocation4 + $0x10] sm:$0xff]
    %v447 = vld [vmem:[#allocation4 + $0x18] sm:$0xff]
    %v448 = vld [vmem:[#allocation4 + $0x20] sm:$0xff]
    %v449 = vld [vmem:[#allocation4 + $0x28] sm:$0xff]
    %v450 = vld [vmem:[#allocation4 + $0x30] sm:$0xff]
    %v451 = vld [vmem:[#allocation4 + $0x38] sm:$0xff]
    %v452 = vld [vmem:[#allocation4 + $0x40] sm:$0xff]
    %v453 = vld [vmem:[#allocation4 + $0x48] sm:$0xff]
    %v454 = vld [vmem:[#allocation4 + $0x50] sm:$0xff]
    %v455 = vld [vmem:[#allocation4 + $0x58] sm:$0xff]
    %v456 = vld [vmem:[#allocation4 + $0x60] sm:$0xff]
    %v457 = vld [vmem:[#allocation4 + $0x68] sm:$0xff]
    %v458 = vld [vmem:[#allocation4 + $0x70] sm:$0xff]
    %v459 = vld [vmem:[#allocation4 + $0x78] sm:$0xff]
    %v460 = vld [vmem:[#allocation4 + $0x80] sm:$0xff]
    %v461 = vld [vmem:[#allocation4 + $0x88] sm:$0xff]
    %v462 = vld [vmem:[#allocation4 + $0x90] sm:$0xff]
    %v463 = vld [vmem:[#allocation4 + $0x98] sm:$0xff]
    %v464 = vld [vmem:[#allocation4 + $0xa0] sm:$0xff]
    %v465 = vld [vmem:[#allocation4 + $0xa8] sm:$0xff]
    %v466 = vld [vmem:[#allocation4 + $0xb0] sm:$0xff]
    %v467 = vld [vmem:[#allocation4 + $0xb8] sm:$0xff]
    %v468 = vld [vmem:[#allocation4 + $0xc0] sm:$0xff]
    %v469 = vld [vmem:[#allocation4 + $0xc8] sm:$0xff]
    %v470 = vld [vmem:[#allocation4 + $0xd0] sm:$0xff]
    %v471 = vld [vmem:[#allocation4 + $0xd8] sm:$0xff]
    %v472 = vld [vmem:[#allocation4 + $0xe0] sm:$0xff]
    %v473 = vld [vmem:[#allocation4 + $0xe8] sm:$0xff]
    %v474 = vld [vmem:[#allocation4 + $0xf0] sm:$0xff]
    %v475 = vld [vmem:[#allocation4 + $0xf8] sm:$0xff]
    %v508 = vunpack.c.l.b16 %v444
    %v509 = vunpack.c.h.b16 %v444
    %v510 = vunpack.c.l.b16 %v445
    %v511 = vunpack.c.h.b16 %v445
    %v512 = vunpack.c.l.b16 %v446
    %v513 = vunpack.c.h.b16 %v446
    %v514 = vunpack.c.l.b16 %v447
    %v515 = vunpack.c.h.b16 %v447
    %v516 = vunpack.c.l.b16 %v448
    %v517 = vunpack.c.h.b16 %v448
    %v518 = vunpack.c.l.b16 %v449
    %v519 = vunpack.c.h.b16 %v449
    %v520 = vunpack.c.l.b16 %v450
    %v521 = vunpack.c.h.b16 %v450
    %v522 = vunpack.c.l.b16 %v451
    %v523 = vunpack.c.h.b16 %v451
    %v524 = vunpack.c.l.b16 %v452
    %v525 = vunpack.c.h.b16 %v452
    %v526 = vunpack.c.l.b16 %v453
    %v527 = vunpack.c.h.b16 %v453
    %v528 = vunpack.c.l.b16 %v454
    %v529 = vunpack.c.h.b16 %v454
    %v530 = vunpack.c.l.b16 %v455
    %v531 = vunpack.c.h.b16 %v455
    %v532 = vunpack.c.l.b16 %v456
    %v533 = vunpack.c.h.b16 %v456
    %v534 = vunpack.c.l.b16 %v457
    %v535 = vunpack.c.h.b16 %v457
    %v536 = vunpack.c.l.b16 %v458
    %v537 = vunpack.c.h.b16 %v458
    %v538 = vunpack.c.l.b16 %v459
    %v539 = vunpack.c.h.b16 %v459
    %v540 = vunpack.c.l.b16 %v460
    %v541 = vunpack.c.h.b16 %v460
    %v542 = vunpack.c.l.b16 %v461
    %v543 = vunpack.c.h.b16 %v461
    %v544 = vunpack.c.l.b16 %v462
    %v545 = vunpack.c.h.b16 %v462
    %v546 = vunpack.c.l.b16 %v463
    %v547 = vunpack.c.h.b16 %v463
    %v548 = vunpack.c.l.b16 %v464
    %v549 = vunpack.c.h.b16 %v464
    %v550 = vunpack.c.l.b16 %v465
    %v551 = vunpack.c.h.b16 %v465
    %v552 = vunpack.c.l.b16 %v466
    %v553 = vunpack.c.h.b16 %v466
    %v554 = vunpack.c.l.b16 %v467
    %v555 = vunpack.c.h.b16 %v467
    %v556 = vunpack.c.l.b16 %v468
    %v557 = vunpack.c.h.b16 %v468
    %v558 = vunpack.c.l.b16 %v469
    %v559 = vunpack.c.h.b16 %v469
    %v560 = vunpack.c.l.b16 %v470
    %v561 = vunpack.c.h.b16 %v470
    %v562 = vunpack.c.l.b16 %v471
    %v563 = vunpack.c.h.b16 %v471
    %v564 = vunpack.c.l.b16 %v472
    %v565 = vunpack.c.h.b16 %v472
    %v566 = vunpack.c.l.b16 %v473
    %v567 = vunpack.c.h.b16 %v473
    %v568 = vunpack.c.l.b16 %v474
    %v569 = vunpack.c.h.b16 %v474
    %v570 = vunpack.c.l.b16 %v475
    %v571 = vunpack.c.h.b16 %v475
    %v572 = vpack.c.b16 %v512, %v508
    %v573 = vpack.c.b16 %v513, %v509
    %v574 = vpack.c.b16 %v514, %v510
    %v575 = vpack.c.b16 %v515, %v511
    %v576 = vpack.c.b16 %v520, %v516
    %v577 = vpack.c.b16 %v521, %v517
    %v578 = vpack.c.b16 %v522, %v518
    %v579 = vpack.c.b16 %v523, %v519
    %v580 = vpack.c.b16 %v528, %v524
    %v581 = vpack.c.b16 %v529, %v525
    %v582 = vpack.c.b16 %v530, %v526
    %v583 = vpack.c.b16 %v531, %v527
    %v584 = vpack.c.b16 %v536, %v532
    %v585 = vpack.c.b16 %v537, %v533
    %v586 = vpack.c.b16 %v538, %v534
    %v587 = vpack.c.b16 %v539, %v535
    %v588 = vpack.c.b16 %v544, %v540
    %v589 = vpack.c.b16 %v545, %v541
    %v590 = vpack.c.b16 %v546, %v542
    %v591 = vpack.c.b16 %v547, %v543
    %v592 = vpack.c.b16 %v552, %v548
    %v593 = vpack.c.b16 %v553, %v549
    %v594 = vpack.c.b16 %v554, %v550
    %v595 = vpack.c.b16 %v555, %v551
    %v596 = vpack.c.b16 %v560, %v556
    %v597 = vpack.c.b16 %v561, %v557
    %v598 = vpack.c.b16 %v562, %v558
    %v599 = vpack.c.b16 %v563, %v559
    %v600 = vpack.c.b16 %v568, %v564
    %v601 = vpack.c.b16 %v569, %v565
    %v602 = vpack.c.b16 %v570, %v566
    %v603 = vpack.c.b16 %v571, %v567
    %636 = vmatpush.bf16.msra.mxu0 %v600
    %637 = vmatpush.bf16.msra.mxu0 %v596
    %638 = vmatpush.bf16.msra.mxu0 %v592
    %639 = vmatpush.bf16.msra.mxu0 %v588
    %640 = vmatpush.bf16.msra.mxu0 %v584
    %641 = vmatpush.bf16.msra.mxu0 %v580
    %642 = vmatpush.bf16.msra.mxu0 %v576
    %643 = vmatpush.bf16.msra.mxu0 %v572
    %644 = vmatmul.bf16.gmra.mxu0 0
    %v645 = vpop.f32.mrf.mxu0
    %v646 = vadd.f32 0.0, %v645
    %v647 = vpop.f32.mrf.mxu0
    %648 = vdwg.mxu0
    %649 = vmatpush.bf16.msra.mxu0 %v601
    %650 = vmatpush.bf16.msra.mxu0 %v597
    %651 = vmatpush.bf16.msra.mxu0 %v593
    %652 = vmatpush.bf16.msra.mxu0 %v589
    %653 = vmatpush.bf16.msra.mxu0 %v585
    %654 = vmatpush.bf16.msra.mxu0 %v581
    %655 = vmatpush.bf16.msra.mxu0 %v577
    %656 = vmatpush.bf16.msra.mxu0 %v573
    %657 = vmatmul.bf16.gmra.mxu0 0
    %v658 = vpop.f32.mrf.mxu0
    %v659 = vadd.f32 0.0, %v658
    %v660 = vpop.f32.mrf.mxu0
    %661 = vdwg.mxu0
    %662 = vmatpush.bf16.msra.mxu0 %v602
    %663 = vmatpush.bf16.msra.mxu0 %v598
    %664 = vmatpush.bf16.msra.mxu0 %v594
    %665 = vmatpush.bf16.msra.mxu0 %v590
    %666 = vmatpush.bf16.msra.mxu0 %v586
    %667 = vmatpush.bf16.msra.mxu0 %v582
    %668 = vmatpush.bf16.msra.mxu0 %v578
    %669 = vmatpush.bf16.msra.mxu0 %v574
    %670 = vmatmul.bf16.gmra.mxu0 0
    %v671 = vpop.f32.mrf.mxu0
    %v672 = vadd.f32 0.0, %v671
    %v673 = vpop.f32.mrf.mxu0
    %674 = vdwg.mxu0
    %675 = vmatpush.bf16.msra.mxu0 %v603
    %676 = vmatpush.bf16.msra.mxu0 %v599
    %677 = vmatpush.bf16.msra.mxu0 %v595
    %678 = vmatpush.bf16.msra.mxu0 %v591
    %679 = vmatpush.bf16.msra.mxu0 %v587
    %680 = vmatpush.bf16.msra.mxu0 %v583
    %681 = vmatpush.bf16.msra.mxu0 %v579
    %682 = vmatpush.bf16.msra.mxu0 %v575
    %683 = vmatmul.bf16.gmra.mxu0 0
    %v684 = vpop.f32.mrf.mxu0
    %v685 = vadd.f32 0.0, %v684
    %v686 = vpop.f32.mrf.mxu0
    %687 = vdwg.mxu0
    %v688 = vadd.f32 %v338, %v646
    %v689 = vadd.f32 %v367, %v659
    %v690 = vadd.f32 %v396, %v672
    %v691 = vadd.f32 %v425, %v685
    %v692 = vxor.u32 %v688, 2147483648
    %v693 = vxor.u32 %v689, 2147483648
    %v694 = vxor.u32 %v690, 2147483648
    %v695 = vmul.f32 %v692, 1.442695
    %v696 = vpow.pop %v695
    %v697 = vmul.f32 %v693, 1.442695
    %v698 = vpow.pop %v697
    %v699 = vmul.f32 %v694, 1.442695
    %v700 = vpow.pop %v699
    %v701 = vadd.f32 %v696, 1.0
    %v702 = vadd.f32 %v698, 1.0
    %v703 = vadd.f32 %v700, 1.0
    %v704 = vrcp.pop %v701
    %v705 = vmul.f32 %v701, %v704
    %v706 = vsub.f32 1.0, %v705
    %v707 = vmul.f32 %v704, %v706
    %v708 = vadd.f32 %v704, %v707
    %vm709 = vweird.f32 %v701
    %vm710 = vweird.f32 %v704
    %vm711 = vmor %vm709, %vm710
    %v712 = vsel %vm711, %v704, %v708
    %v713 = vand.u32 2147483647, %v701
    %vm714 = vcmp.eq.f32.partialorder %v713, 8.507059e+37
    %v715 = vand.u32 %v701, 2147483648
    %v716 = vor.u32 1.1754944e-38, %v715
    %v717 = vsel %vm714, %v716, %v712
    %v718 = vmul.f32 1.0, %v717
    %v719 = vrcp.pop %v702
    %v720 = vmul.f32 %v702, %v719
    %v721 = vsub.f32 1.0, %v720
    %v722 = vmul.f32 %v719, %v721
    %v723 = vadd.f32 %v719, %v722
    %vm724 = vweird.f32 %v702
    %vm725 = vweird.f32 %v719
    %vm726 = vmor %vm724, %vm725
    %v727 = vsel %vm726, %v719, %v723
    %v728 = vand.u32 2147483647, %v702
    %vm729 = vcmp.eq.f32.partialorder %v728, 8.507059e+37
    %v730 = vand.u32 %v702, 2147483648
    %v731 = vor.u32 1.1754944e-38, %v730
    %v732 = vsel %vm729, %v731, %v727
    %v733 = vmul.f32 1.0, %v732
    %v734 = vrcp.pop %v703
    %v735 = vmul.f32 %v703, %v734
    %v736 = vsub.f32 1.0, %v735
    %v737 = vmul.f32 %v734, %v736
    %v738 = vadd.f32 %v734, %v737
    %vm739 = vweird.f32 %v703
    %vm740 = vweird.f32 %v734
    %vm741 = vmor %vm739, %vm740
    %v742 = vsel %vm741, %v734, %v738
    %v743 = vand.u32 2147483647, %v703
    %vm744 = vcmp.eq.f32.partialorder %v743, 8.507059e+37
    %v745 = vand.u32 %v703, 2147483648
    %v746 = vor.u32 1.1754944e-38, %v745
    %v747 = vsel %vm744, %v746, %v742
    %v748 = vmul.f32 1.0, %v747
    %v749 = vtanh.pop %v691
    %v750 = vmul.f32 %v733, 0.0
    %v751 = vmul.f32 %v718, %v749
    %v752 = vadd.f32 %v750, %v751
    %v753 = vtanh.pop %v752
    %v754 = vmul.f32 %v748, %v753
    %v755 = vpack.c.bf16 %v754, %v754
    %756 = vmatpush.bf16.msra.mxu0 %v600
    %757 = vmatpush.bf16.msra.mxu0 %v596
    %758 = vmatpush.bf16.msra.mxu0 %v592
    %759 = vmatpush.bf16.msra.mxu0 %v588
    %760 = vmatpush.bf16.msra.mxu0 %v584
    %761 = vmatpush.bf16.msra.mxu0 %v580
    %762 = vmatpush.bf16.msra.mxu0 %v576
    %763 = vmatpush.bf16.msra.mxu0 %v572
    %764 = vmatmul.bf16.gmra.mxu0 %v755
    %v765 = vpop.f32.mrf.mxu0
    %v766 = vadd.f32 0.0, %v765
    %v767 = vpop.f32.mrf.mxu0
    %768 = vdwg.mxu0
    %769 = vmatpush.bf16.msra.mxu0 %v601
    %770 = vmatpush.bf16.msra.mxu0 %v597
    %771 = vmatpush.bf16.msra.mxu0 %v593
    %772 = vmatpush.bf16.msra.mxu0 %v589
    %773 = vmatpush.bf16.msra.mxu0 %v585
    %774 = vmatpush.bf16.msra.mxu0 %v581
    %775 = vmatpush.bf16.msra.mxu0 %v577
    %776 = vmatpush.bf16.msra.mxu0 %v573
    %777 = vmatmul.bf16.gmra.mxu0 %v755
    %v778 = vpop.f32.mrf.mxu0
    %v779 = vadd.f32 0.0, %v778
    %v780 = vpop.f32.mrf.mxu0
    %781 = vdwg.mxu0
    %782 = vmatpush.bf16.msra.mxu0 %v602
    %783 = vmatpush.bf16.msra.mxu0 %v598
    %784 = vmatpush.bf16.msra.mxu0 %v594
    %785 = vmatpush.bf16.msra.mxu0 %v590
    %786 = vmatpush.bf16.msra.mxu0 %v586
    %787 = vmatpush.bf16.msra.mxu0 %v582
    %788 = vmatpush.bf16.msra.mxu0 %v578
    %789 = vmatpush.bf16.msra.mxu0 %v574
    %790 = vmatmul.bf16.gmra.mxu0 %v755
    %v791 = vpop.f32.mrf.mxu0
    %v792 = vadd.f32 0.0, %v791
    %v793 = vpop.f32.mrf.mxu0
    %794 = vdwg.mxu0
    %795 = vmatpush.bf16.msra.mxu0 %v603
    %796 = vmatpush.bf16.msra.mxu0 %v599
    %797 = vmatpush.bf16.msra.mxu0 %v595
    %798 = vmatpush.bf16.msra.mxu0 %v591
    %799 = vmatpush.bf16.msra.mxu0 %v587
    %800 = vmatpush.bf16.msra.mxu0 %v583
    %801 = vmatpush.bf16.msra.mxu0 %v579
    %802 = vmatpush.bf16.msra.mxu0 %v575
    %803 = vmatmul.bf16.gmra.mxu0 %v755
    %v804 = vpop.f32.mrf.mxu0
    %v805 = vadd.f32 0.0, %v804
    %v806 = vpop.f32.mrf.mxu0
    %807 = vdwg.mxu0
    %v808 = vadd.f32 %v340, %v766
    %v809 = vadd.f32 %v369, %v779
    %v810 = vadd.f32 %v398, %v792
    %v811 = vadd.f32 %v427, %v805
    %v812 = vxor.u32 %v808, 2147483648
    %v813 = vxor.u32 %v809, 2147483648
    %v814 = vxor.u32 %v810, 2147483648
    %v815 = vmul.f32 %v812, 1.442695
    %v816 = vpow.pop %v815
    %v817 = vmul.f32 %v813, 1.442695
    %v818 = vpow.pop %v817
    %v819 = vmul.f32 %v814, 1.442695
    %v820 = vpow.pop %v819
    %v821 = vadd.f32 %v816, 1.0
    %v822 = vadd.f32 %v818, 1.0
    %v823 = vadd.f32 %v820, 1.0
    %v824 = vrcp.pop %v821
    %v825 = vmul.f32 %v821, %v824
    %v826 = vsub.f32 1.0, %v825
    %v827 = vmul.f32 %v824, %v826
    %v828 = vadd.f32 %v824, %v827
    %vm829 = vweird.f32 %v821
    %vm830 = vweird.f32 %v824
    %vm831 = vmor %vm829, %vm830
    %v832 = vsel %vm831, %v824, %v828
    %v833 = vand.u32 2147483647, %v821
    %vm834 = vcmp.eq.f32.partialorder %v833, 8.507059e+37
    %v835 = vand.u32 %v821, 2147483648
    %v836 = vor.u32 1.1754944e-38, %v835
    %v837 = vsel %vm834, %v836, %v832
    %v838 = vmul.f32 1.0, %v837
    %v839 = vrcp.pop %v822
    %v840 = vmul.f32 %v822, %v839
    %v841 = vsub.f32 1.0, %v840
    %v842 = vmul.f32 %v839, %v841
    %v843 = vadd.f32 %v839, %v842
    %vm844 = vweird.f32 %v822
    %vm845 = vweird.f32 %v839
    %vm846 = vmor %vm844, %vm845
    %v847 = vsel %vm846, %v839, %v843
    %v848 = vand.u32 2147483647, %v822
    %vm849 = vcmp.eq.f32.partialorder %v848, 8.507059e+37
    %v850 = vand.u32 %v822, 2147483648
    %v851 = vor.u32 1.1754944e-38, %v850
    %v852 = vsel %vm849, %v851, %v847
    %v853 = vmul.f32 1.0, %v852
    %v854 = vrcp.pop %v823
    %v855 = vmul.f32 %v823, %v854
    %v856 = vsub.f32 1.0, %v855
    %v857 = vmul.f32 %v854, %v856
    %v858 = vadd.f32 %v854, %v857
    %vm859 = vweird.f32 %v823
    %vm860 = vweird.f32 %v854
    %vm861 = vmor %vm859, %vm860
    %v862 = vsel %vm861, %v854, %v858
    %v863 = vand.u32 2147483647, %v823
    %vm864 = vcmp.eq.f32.partialorder %v863, 8.507059e+37
    %v865 = vand.u32 %v823, 2147483648
    %v866 = vor.u32 1.1754944e-38, %v865
    %v867 = vsel %vm864, %v866, %v862
    %v868 = vmul.f32 1.0, %v867
    %v869 = vtanh.pop %v811
    %v870 = vmul.f32 %v853, %v752
    %v871 = vmul.f32 %v838, %v869
    %v872 = vadd.f32 %v870, %v871
    %v873 = vtanh.pop %v872
    %v874 = vmul.f32 %v868, %v873
    %v875 = vpack.c.bf16 %v874, %v874
    %876 = vmatpush.bf16.msra.mxu0 %v600
    %877 = vmatpush.bf16.msra.mxu0 %v596
    %878 = vmatpush.bf16.msra.mxu0 %v592
    %879 = vmatpush.bf16.msra.mxu0 %v588
    %880 = vmatpush.bf16.msra.mxu0 %v584
    %881 = vmatpush.bf16.msra.mxu0 %v580
    %882 = vmatpush.bf16.msra.mxu0 %v576
    %883 = vmatpush.bf16.msra.mxu0 %v572
    %884 = vmatmul.bf16.gmra.mxu0 %v875
    %v885 = vpop.f32.mrf.mxu0
    %v886 = vadd.f32 0.0, %v885
    %v887 = vpop.f32.mrf.mxu0
    %888 = vdwg.mxu0
    %889 = vmatpush.bf16.msra.mxu0 %v601
    %890 = vmatpush.bf16.msra.mxu0 %v597
    %891 = vmatpush.bf16.msra.mxu0 %v593
    %892 = vmatpush.bf16.msra.mxu0 %v589
    %893 = vmatpush.bf16.msra.mxu0 %v585
    %894 = vmatpush.bf16.msra.mxu0 %v581
    %895 = vmatpush.bf16.msra.mxu0 %v577
    %896 = vmatpush.bf16.msra.mxu0 %v573
    %897 = vmatmul.bf16.gmra.mxu0 %v875
    %v898 = vpop.f32.mrf.mxu0
    %v899 = vadd.f32 0.0, %v898
    %v900 = vpop.f32.mrf.mxu0
    %901 = vdwg.mxu0
    %902 = vmatpush.bf16.msra.mxu0 %v602
    %903 = vmatpush.bf16.msra.mxu0 %v598
    %904 = vmatpush.bf16.msra.mxu0 %v594
    %905 = vmatpush.bf16.msra.mxu0 %v590
    %906 = vmatpush.bf16.msra.mxu0 %v586
    %907 = vmatpush.bf16.msra.mxu0 %v582
    %908 = vmatpush.bf16.msra.mxu0 %v578
    %909 = vmatpush.bf16.msra.mxu0 %v574
    %910 = vmatmul.bf16.gmra.mxu0 %v875
    %v911 = vpop.f32.mrf.mxu0
    %v912 = vadd.f32 0.0, %v911
    %v913 = vpop.f32.mrf.mxu0
    %914 = vdwg.mxu0
    %915 = vmatpush.bf16.msra.mxu0 %v603
    %916 = vmatpush.bf16.msra.mxu0 %v599
    %917 = vmatpush.bf16.msra.mxu0 %v595
    %918 = vmatpush.bf16.msra.mxu0 %v591
    %919 = vmatpush.bf16.msra.mxu0 %v587
    %920 = vmatpush.bf16.msra.mxu0 %v583
    %921 = vmatpush.bf16.msra.mxu0 %v579
    %922 = vmatpush.bf16.msra.mxu0 %v575
    %923 = vmatmul.bf16.gmra.mxu0 %v875
    %v924 = vpop.f32.mrf.mxu0
    %v925 = vadd.f32 0.0, %v924
    %v926 = vpop.f32.mrf.mxu0
    %927 = vdwg.mxu0
    %v928 = vadd.f32 %v343, %v886
    %v929 = vadd.f32 %v372, %v899
    %v930 = vadd.f32 %v401, %v912
    %v931 = vadd.f32 %v430, %v925
    %v932 = vxor.u32 %v928, 2147483648
    %v933 = vxor.u32 %v929, 2147483648
    %v934 = vxor.u32 %v930, 2147483648
    %v935 = vmul.f32 %v932, 1.442695
    %v936 = vpow.pop %v935
    %v937 = vmul.f32 %v933, 1.442695
    %v938 = vpow.pop %v937
    %v939 = vmul.f32 %v934, 1.442695
    %v940 = vpow.pop %v939
    %v941 = vadd.f32 %v936, 1.0
    %v942 = vadd.f32 %v938, 1.0
    %v943 = vadd.f32 %v940, 1.0
    %v944 = vrcp.pop %v941
    %v945 = vmul.f32 %v941, %v944
    %v946 = vsub.f32 1.0, %v945
    %v947 = vmul.f32 %v944, %v946
    %v948 = vadd.f32 %v944, %v947
    %vm949 = vweird.f32 %v941
    %vm950 = vweird.f32 %v944
    %vm951 = vmor %vm949, %vm950
    %v952 = vsel %vm951, %v944, %v948
    %v953 = vand.u32 2147483647, %v941
    %vm954 = vcmp.eq.f32.partialorder %v953, 8.507059e+37
    %v955 = vand.u32 %v941, 2147483648
    %v956 = vor.u32 1.1754944e-38, %v955
    %v957 = vsel %vm954, %v956, %v952
    %v958 = vmul.f32 1.0, %v957
    %v959 = vrcp.pop %v942
    %v960 = vmul.f32 %v942, %v959
    %v961 = vsub.f32 1.0, %v960
    %v962 = vmul.f32 %v959, %v961
    %v963 = vadd.f32 %v959, %v962
    %vm964 = vweird.f32 %v942
    %vm965 = vweird.f32 %v959
    %vm966 = vmor %vm964, %vm965
    %v967 = vsel %vm966, %v959, %v963
    %v968 = vand.u32 2147483647, %v942
    %vm969 = vcmp.eq.f32.partialorder %v968, 8.507059e+37
    %v970 = vand.u32 %v942, 2147483648
    %v971 = vor.u32 1.1754944e-38, %v970
    %v972 = vsel %vm969, %v971, %v967
    %v973 = vmul.f32 1.0, %v972
    %v974 = vrcp.pop %v943
    %v975 = vmul.f32 %v943, %v974
    %v976 = vsub.f32 1.0, %v975
    %v977 = vmul.f32 %v974, %v976
    %v978 = vadd.f32 %v974, %v977
    %vm979 = vweird.f32 %v943
    %vm980 = vweird.f32 %v974
    %vm981 = vmor %vm979, %vm980
    %v982 = vsel %vm981, %v974, %v978
    %v983 = vand.u32 2147483647, %v943
    %vm984 = vcmp.eq.f32.partialorder %v983, 8.507059e+37
    %v985 = vand.u32 %v943, 2147483648
    %v986 = vor.u32 1.1754944e-38, %v985
    %v987 = vsel %vm984, %v986, %v982
    %v988 = vmul.f32 1.0, %v987
    %v989 = vtanh.pop %v931
    %v990 = vmul.f32 %v973, %v872
    %v991 = vmul.f32 %v958, %v989
    %v992 = vadd.f32 %v990, %v991
    %v993 = vtanh.pop %v992
    %v994 = vmul.f32 %v988, %v993
    %v995 = vpack.c.bf16 %v994, %v994
    %996 = vmatpush.bf16.msra.mxu0 %v600
    %997 = vmatpush.bf16.msra.mxu0 %v596
    %998 = vmatpush.bf16.msra.mxu0 %v592
    %999 = vmatpush.bf16.msra.mxu0 %v588
    %1000 = vmatpush.bf16.msra.mxu0 %v584
    %1001 = vmatpush.bf16.msra.mxu0 %v580
    %1002 = vmatpush.bf16.msra.mxu0 %v576
    %1003 = vmatpush.bf16.msra.mxu0 %v572
    %1004 = vmatmul.bf16.gmra.mxu0 %v995
    %v1005 = vpop.f32.mrf.mxu0
    %v1006 = vadd.f32 0.0, %v1005
    %v1007 = vpop.f32.mrf.mxu0
    %1008 = vdwg.mxu0
    %1009 = vmatpush.bf16.msra.mxu0 %v601
    %1010 = vmatpush.bf16.msra.mxu0 %v597
    %1011 = vmatpush.bf16.msra.mxu0 %v593
    %1012 = vmatpush.bf16.msra.mxu0 %v589
    %1013 = vmatpush.bf16.msra.mxu0 %v585
    %1014 = vmatpush.bf16.msra.mxu0 %v581
    %1015 = vmatpush.bf16.msra.mxu0 %v577
    %1016 = vmatpush.bf16.msra.mxu0 %v573
    %1017 = vmatmul.bf16.gmra.mxu0 %v995
    %v1018 = vpop.f32.mrf.mxu0
    %v1019 = vadd.f32 0.0, %v1018
    %v1020 = vpop.f32.mrf.mxu0
    %1021 = vdwg.mxu0
    %1022 = vmatpush.bf16.msra.mxu0 %v602
    %1023 = vmatpush.bf16.msra.mxu0 %v598
    %1024 = vmatpush.bf16.msra.mxu0 %v594
    %1025 = vmatpush.bf16.msra.mxu0 %v590
    %1026 = vmatpush.bf16.msra.mxu0 %v586
    %1027 = vmatpush.bf16.msra.mxu0 %v582
    %1028 = vmatpush.bf16.msra.mxu0 %v578
    %1029 = vmatpush.bf16.msra.mxu0 %v574
    %1030 = vmatmul.bf16.gmra.mxu0 %v995
    %v1031 = vpop.f32.mrf.mxu0
    %v1032 = vadd.f32 0.0, %v1031
    %v1033 = vpop.f32.mrf.mxu0
    %1034 = vdwg.mxu0
    %1035 = vmatpush.bf16.msra.mxu0 %v603
    %1036 = vmatpush.bf16.msra.mxu0 %v599
    %1037 = vmatpush.bf16.msra.mxu0 %v595
    %1038 = vmatpush.bf16.msra.mxu0 %v591
    %1039 = vmatpush.bf16.msra.mxu0 %v587
    %1040 = vmatpush.bf16.msra.mxu0 %v583
    %1041 = vmatpush.bf16.msra.mxu0 %v579
    %1042 = vmatpush.bf16.msra.mxu0 %v575
    %1043 = vmatmul.bf16.gmra.mxu0 %v995
    %v1044 = vpop.f32.mrf.mxu0
    %v1045 = vadd.f32 0.0, %v1044
    %v1046 = vpop.f32.mrf.mxu0
    %1047 = vdwg.mxu0
    %v1048 = vadd.f32 %v345, %v1006
    %v1049 = vadd.f32 %v374, %v1019
    %v1050 = vadd.f32 %v403, %v1032
    %v1051 = vadd.f32 %v432, %v1045
    %v1052 = vxor.u32 %v1048, 2147483648
    %v1053 = vxor.u32 %v1049, 2147483648
    %v1054 = vxor.u32 %v1050, 2147483648
    %v1055 = vmul.f32 %v1052, 1.442695
    %v1056 = vpow.pop %v1055
    %v1057 = vmul.f32 %v1053, 1.442695
    %v1058 = vpow.pop %v1057
    %v1059 = vmul.f32 %v1054, 1.442695
    %v1060 = vpow.pop %v1059
    %v1061 = vadd.f32 %v1056, 1.0
    %v1062 = vadd.f32 %v1058, 1.0
    %v1063 = vadd.f32 %v1060, 1.0
    %v1064 = vrcp.pop %v1061
    %v1065 = vmul.f32 %v1061, %v1064
    %v1066 = vsub.f32 1.0, %v1065
    %v1067 = vmul.f32 %v1064, %v1066
    %v1068 = vadd.f32 %v1064, %v1067
    %vm1069 = vweird.f32 %v1061
    %vm1070 = vweird.f32 %v1064
    %vm1071 = vmor %vm1069, %vm1070
    %v1072 = vsel %vm1071, %v1064, %v1068
    %v1073 = vand.u32 2147483647, %v1061
    %vm1074 = vcmp.eq.f32.partialorder %v1073, 8.507059e+37
    %v1075 = vand.u32 %v1061, 2147483648
    %v1076 = vor.u32 1.1754944e-38, %v1075
    %v1077 = vsel %vm1074, %v1076, %v1072
    %v1078 = vmul.f32 1.0, %v1077
    %v1079 = vrcp.pop %v1062
    %v1080 = vmul.f32 %v1062, %v1079
    %v1081 = vsub.f32 1.0, %v1080
    %v1082 = vmul.f32 %v1079, %v1081
    %v1083 = vadd.f32 %v1079, %v1082
    %vm1084 = vweird.f32 %v1062
    %vm1085 = vweird.f32 %v1079
    %vm1086 = vmor %vm1084, %vm1085
    %v1087 = vsel %vm1086, %v1079, %v1083
    %v1088 = vand.u32 2147483647, %v1062
    %vm1089 = vcmp.eq.f32.partialorder %v1088, 8.507059e+37
    %v1090 = vand.u32 %v1062, 2147483648
    %v1091 = vor.u32 1.1754944e-38, %v1090
    %v1092 = vsel %vm1089, %v1091, %v1087
    %v1093 = vmul.f32 1.0, %v1092
    %v1094 = vrcp.pop %v1063
    %v1095 = vmul.f32 %v1063, %v1094
    %v1096 = vsub.f32 1.0, %v1095
    %v1097 = vmul.f32 %v1094, %v1096
    %v1098 = vadd.f32 %v1094, %v1097
    %vm1099 = vweird.f32 %v1063
    %vm1100 = vweird.f32 %v1094
    %vm1101 = vmor %vm1099, %vm1100
    %v1102 = vsel %vm1101, %v1094, %v1098
    %v1103 = vand.u32 2147483647, %v1063
    %vm1104 = vcmp.eq.f32.partialorder %v1103, 8.507059e+37
    %v1105 = vand.u32 %v1063, 2147483648
    %v1106 = vor.u32 1.1754944e-38, %v1105
    %v1107 = vsel %vm1104, %v1106, %v1102
    %v1108 = vmul.f32 1.0, %v1107
    %v1109 = vtanh.pop %v1051
    %v1110 = vmul.f32 %v1093, %v992
    %v1111 = vmul.f32 %v1078, %v1109
    %v1112 = vadd.f32 %v1110, %v1111
    %v1113 = vtanh.pop %v1112
    %v1114 = vmul.f32 %v1108, %v1113
    %v1115 = vpack.c.bf16 %v1114, %v1114
    %1116 = vmatpush.bf16.msra.mxu0 %v600
    %1117 = vmatpush.bf16.msra.mxu0 %v596
    %1118 = vmatpush.bf16.msra.mxu0 %v592
    %1119 = vmatpush.bf16.msra.mxu0 %v588
    %1120 = vmatpush.bf16.msra.mxu0 %v584
    %1121 = vmatpush.bf16.msra.mxu0 %v580
    %1122 = vmatpush.bf16.msra.mxu0 %v576
    %1123 = vmatpush.bf16.msra.mxu0 %v572
    %1124 = vmatmul.bf16.gmra.mxu0 %v1115
    %v1125 = vpop.f32.mrf.mxu0
    %v1126 = vadd.f32 0.0, %v1125
    %v1127 = vpop.f32.mrf.mxu0
    %1128 = vdwg.mxu0
    %1129 = vmatpush.bf16.msra.mxu0 %v601
    %1130 = vmatpush.bf16.msra.mxu0 %v597
    %1131 = vmatpush.bf16.msra.mxu0 %v593
    %1132 = vmatpush.bf16.msra.mxu0 %v589
    %1133 = vmatpush.bf16.msra.mxu0 %v585
    %1134 = vmatpush.bf16.msra.mxu0 %v581
    %1135 = vmatpush.bf16.msra.mxu0 %v577
    %1136 = vmatpush.bf16.msra.mxu0 %v573
    %1137 = vmatmul.bf16.gmra.mxu0 %v1115
    %v1138 = vpop.f32.mrf.mxu0
    %v1139 = vadd.f32 0.0, %v1138
    %v1140 = vpop.f32.mrf.mxu0
    %1141 = vdwg.mxu0
    %1142 = vmatpush.bf16.msra.mxu0 %v602
    %1143 = vmatpush.bf16.msra.mxu0 %v598
    %1144 = vmatpush.bf16.msra.mxu0 %v594
    %1145 = vmatpush.bf16.msra.mxu0 %v590
    %1146 = vmatpush.bf16.msra.mxu0 %v586
    %1147 = vmatpush.bf16.msra.mxu0 %v582
    %1148 = vmatpush.bf16.msra.mxu0 %v578
    %1149 = vmatpush.bf16.msra.mxu0 %v574
    %1150 = vmatmul.bf16.gmra.mxu0 %v1115
    %v1151 = vpop.f32.mrf.mxu0
    %v1152 = vadd.f32 0.0, %v1151
    %v1153 = vpop.f32.mrf.mxu0
    %1154 = vdwg.mxu0
    %1155 = vmatpush.bf16.msra.mxu0 %v603
    %1156 = vmatpush.bf16.msra.mxu0 %v599
    %1157 = vmatpush.bf16.msra.mxu0 %v595
    %1158 = vmatpush.bf16.msra.mxu0 %v591
    %1159 = vmatpush.bf16.msra.mxu0 %v587
    %1160 = vmatpush.bf16.msra.mxu0 %v583
    %1161 = vmatpush.bf16.msra.mxu0 %v579
    %1162 = vmatpush.bf16.msra.mxu0 %v575
    %1163 = vmatmul.bf16.gmra.mxu0 %v1115
    %v1164 = vpop.f32.mrf.mxu0
    %v1165 = vadd.f32 0.0, %v1164
    %v1166 = vpop.f32.mrf.mxu0
    %1167 = vdwg.mxu0
    %v1168 = vadd.f32 %v348, %v1126
    %v1169 = vadd.f32 %v377, %v1139
    %v1170 = vadd.f32 %v406, %v1152
    %v1171 = vadd.f32 %v435, %v1165
    %v1172 = vxor.u32 %v1168, 2147483648
    %v1173 = vxor.u32 %v1169, 2147483648
    %v1174 = vxor.u32 %v1170, 2147483648
    %v1175 = vmul.f32 %v1172, 1.442695
    %v1176 = vpow.pop %v1175
    %v1177 = vmul.f32 %v1173, 1.442695
    %v1178 = vpow.pop %v1177
    %v1179 = vmul.f32 %v1174, 1.442695
    %v1180 = vpow.pop %v1179
    %v1181 = vadd.f32 %v1176, 1.0
    %v1182 = vadd.f32 %v1178, 1.0
    %v1183 = vadd.f32 %v1180, 1.0
    %v1184 = vrcp.pop %v1181
    %v1185 = vmul.f32 %v1181, %v1184
    %v1186 = vsub.f32 1.0, %v1185
    %v1187 = vmul.f32 %v1184, %v1186
    %v1188 = vadd.f32 %v1184, %v1187
    %vm1189 = vweird.f32 %v1181
    %vm1190 = vweird.f32 %v1184
    %vm1191 = vmor %vm1189, %vm1190
    %v1192 = vsel %vm1191, %v1184, %v1188
    %v1193 = vand.u32 2147483647, %v1181
    %vm1194 = vcmp.eq.f32.partialorder %v1193, 8.507059e+37
    %v1195 = vand.u32 %v1181, 2147483648
    %v1196 = vor.u32 1.1754944e-38, %v1195
    %v1197 = vsel %vm1194, %v1196, %v1192
    %v1198 = vmul.f32 1.0, %v1197
    %v1199 = vrcp.pop %v1182
    %v1200 = vmul.f32 %v1182, %v1199
    %v1201 = vsub.f32 1.0, %v1200
    %v1202 = vmul.f32 %v1199, %v1201
    %v1203 = vadd.f32 %v1199, %v1202
    %vm1204 = vweird.f32 %v1182
    %vm1205 = vweird.f32 %v1199
    %vm1206 = vmor %vm1204, %vm1205
    %v1207 = vsel %vm1206, %v1199, %v1203
    %v1208 = vand.u32 2147483647, %v1182
    %vm1209 = vcmp.eq.f32.partialorder %v1208, 8.507059e+37
    %v1210 = vand.u32 %v1182, 2147483648
    %v1211 = vor.u32 1.1754944e-38, %v1210
    %v1212 = vsel %vm1209, %v1211, %v1207
    %v1213 = vmul.f32 1.0, %v1212
    %v1214 = vrcp.pop %v1183
    %v1215 = vmul.f32 %v1183, %v1214
    %v1216 = vsub.f32 1.0, %v1215
    %v1217 = vmul.f32 %v1214, %v1216
    %v1218 = vadd.f32 %v1214, %v1217
    %vm1219 = vweird.f32 %v1183
    %vm1220 = vweird.f32 %v1214
    %vm1221 = vmor %vm1219, %vm1220
    %v1222 = vsel %vm1221, %v1214, %v1218
    %v1223 = vand.u32 2147483647, %v1183
    %vm1224 = vcmp.eq.f32.partialorder %v1223, 8.507059e+37
    %v1225 = vand.u32 %v1183, 2147483648
    %v1226 = vor.u32 1.1754944e-38, %v1225
    %v1227 = vsel %vm1224, %v1226, %v1222
    %v1228 = vmul.f32 1.0, %v1227
    %v1229 = vtanh.pop %v1171
    %v1230 = vmul.f32 %v1213, %v1112
    %v1231 = vmul.f32 %v1198, %v1229
    %v1232 = vadd.f32 %v1230, %v1231
    %v1233 = vtanh.pop %v1232
    %v1234 = vmul.f32 %v1228, %v1233
    %v1235 = vpack.c.bf16 %v1234, %v1234
    %1236 = vmatpush.bf16.msra.mxu0 %v600
    %1237 = vmatpush.bf16.msra.mxu0 %v596
    %1238 = vmatpush.bf16.msra.mxu0 %v592
    %1239 = vmatpush.bf16.msra.mxu0 %v588
    %1240 = vmatpush.bf16.msra.mxu0 %v584
    %1241 = vmatpush.bf16.msra.mxu0 %v580
    %1242 = vmatpush.bf16.msra.mxu0 %v576
    %1243 = vmatpush.bf16.msra.mxu0 %v572
    %1244 = vmatmul.bf16.gmra.mxu0 %v1235
    %v1245 = vpop.f32.mrf.mxu0
    %v1246 = vadd.f32 0.0, %v1245
    %v1247 = vpop.f32.mrf.mxu0
    %1248 = vdwg.mxu0
    %1249 = vmatpush.bf16.msra.mxu0 %v601
    %1250 = vmatpush.bf16.msra.mxu0 %v597
    %1251 = vmatpush.bf16.msra.mxu0 %v593
    %1252 = vmatpush.bf16.msra.mxu0 %v589
    %1253 = vmatpush.bf16.msra.mxu0 %v585
    %1254 = vmatpush.bf16.msra.mxu0 %v581
    %1255 = vmatpush.bf16.msra.mxu0 %v577
    %1256 = vmatpush.bf16.msra.mxu0 %v573
    %1257 = vmatmul.bf16.gmra.mxu0 %v1235
    %v1258 = vpop.f32.mrf.mxu0
    %v1259 = vadd.f32 0.0, %v1258
    %v1260 = vpop.f32.mrf.mxu0
    %1261 = vdwg.mxu0
    %1262 = vmatpush.bf16.msra.mxu0 %v602
    %1263 = vmatpush.bf16.msra.mxu0 %v598
    %1264 = vmatpush.bf16.msra.mxu0 %v594
    %1265 = vmatpush.bf16.msra.mxu0 %v590
    %1266 = vmatpush.bf16.msra.mxu0 %v586
    %1267 = vmatpush.bf16.msra.mxu0 %v582
    %1268 = vmatpush.bf16.msra.mxu0 %v578
    %1269 = vmatpush.bf16.msra.mxu0 %v574
    %1270 = vmatmul.bf16.gmra.mxu0 %v1235
    %v1271 = vpop.f32.mrf.mxu0
    %v1272 = vadd.f32 0.0, %v1271
    %v1273 = vpop.f32.mrf.mxu0
    %1274 = vdwg.mxu0
    %1275 = vmatpush.bf16.msra.mxu0 %v603
    %1276 = vmatpush.bf16.msra.mxu0 %v599
    %1277 = vmatpush.bf16.msra.mxu0 %v595
    %1278 = vmatpush.bf16.msra.mxu0 %v591
    %1279 = vmatpush.bf16.msra.mxu0 %v587
    %1280 = vmatpush.bf16.msra.mxu0 %v583
    %1281 = vmatpush.bf16.msra.mxu0 %v579
    %1282 = vmatpush.bf16.msra.mxu0 %v575
    %1283 = vmatmul.bf16.gmra.mxu0 %v1235
    %v1284 = vpop.f32.mrf.mxu0
    %v1285 = vadd.f32 0.0, %v1284
    %v1286 = vpop.f32.mrf.mxu0
    %1287 = vdwg.mxu0
    %v1288 = vadd.f32 %v350, %v1246
    %v1289 = vadd.f32 %v379, %v1259
    %v1290 = vadd.f32 %v408, %v1272
    %v1291 = vadd.f32 %v437, %v1285
    %v1292 = vxor.u32 %v1288, 2147483648
    %v1293 = vxor.u32 %v1289, 2147483648
    %v1294 = vxor.u32 %v1290, 2147483648
    %v1295 = vmul.f32 %v1292, 1.442695
    %v1296 = vpow.pop %v1295
    %v1297 = vmul.f32 %v1293, 1.442695
    %v1298 = vpow.pop %v1297
    %v1299 = vmul.f32 %v1294, 1.442695
    %v1300 = vpow.pop %v1299
    %v1301 = vadd.f32 %v1296, 1.0
    %v1302 = vadd.f32 %v1298, 1.0
    %v1303 = vadd.f32 %v1300, 1.0
    %v1304 = vrcp.pop %v1301
    %v1305 = vmul.f32 %v1301, %v1304
    %v1306 = vsub.f32 1.0, %v1305
    %v1307 = vmul.f32 %v1304, %v1306
    %v1308 = vadd.f32 %v1304, %v1307
    %vm1309 = vweird.f32 %v1301
    %vm1310 = vweird.f32 %v1304
    %vm1311 = vmor %vm1309, %vm1310
    %v1312 = vsel %vm1311, %v1304, %v1308
    %v1313 = vand.u32 2147483647, %v1301
    %vm1314 = vcmp.eq.f32.partialorder %v1313, 8.507059e+37
    %v1315 = vand.u32 %v1301, 2147483648
    %v1316 = vor.u32 1.1754944e-38, %v1315
    %v1317 = vsel %vm1314, %v1316, %v1312
    %v1318 = vmul.f32 1.0, %v1317
    %v1319 = vrcp.pop %v1302
    %v1320 = vmul.f32 %v1302, %v1319
    %v1321 = vsub.f32 1.0, %v1320
    %v1322 = vmul.f32 %v1319, %v1321
    %v1323 = vadd.f32 %v1319, %v1322
    %vm1324 = vweird.f32 %v1302
    %vm1325 = vweird.f32 %v1319
    %vm1326 = vmor %vm1324, %vm1325
    %v1327 = vsel %vm1326, %v1319, %v1323
    %v1328 = vand.u32 2147483647, %v1302
    %vm1329 = vcmp.eq.f32.partialorder %v1328, 8.507059e+37
    %v1330 = vand.u32 %v1302, 2147483648
    %v1331 = vor.u32 1.1754944e-38, %v1330
    %v1332 = vsel %vm1329, %v1331, %v1327
    %v1333 = vmul.f32 1.0, %v1332
    %v1334 = vrcp.pop %v1303
    %v1335 = vmul.f32 %v1303, %v1334
    %v1336 = vsub.f32 1.0, %v1335
    %v1337 = vmul.f32 %v1334, %v1336
    %v1338 = vadd.f32 %v1334, %v1337
    %vm1339 = vweird.f32 %v1303
    %vm1340 = vweird.f32 %v1334
    %vm1341 = vmor %vm1339, %vm1340
    %v1342 = vsel %vm1341, %v1334, %v1338
    %v1343 = vand.u32 2147483647, %v1303
    %vm1344 = vcmp.eq.f32.partialorder %v1343, 8.507059e+37
    %v1345 = vand.u32 %v1303, 2147483648
    %v1346 = vor.u32 1.1754944e-38, %v1345
    %v1347 = vsel %vm1344, %v1346, %v1342
    %v1348 = vmul.f32 1.0, %v1347
    %v1349 = vtanh.pop %v1291
    %v1350 = vmul.f32 %v1333, %v1232
    %v1351 = vmul.f32 %v1318, %v1349
    %v1352 = vadd.f32 %v1350, %v1351
    %v1353 = vtanh.pop %v1352
    %v1354 = vmul.f32 %v1348, %v1353
    %v1355 = vpack.c.bf16 %v1354, %v1354
    %1356 = vmatpush.bf16.msra.mxu0 %v600
    %1357 = vmatpush.bf16.msra.mxu0 %v596
    %1358 = vmatpush.bf16.msra.mxu0 %v592
    %1359 = vmatpush.bf16.msra.mxu0 %v588
    %1360 = vmatpush.bf16.msra.mxu0 %v584
    %1361 = vmatpush.bf16.msra.mxu0 %v580
    %1362 = vmatpush.bf16.msra.mxu0 %v576
    %1363 = vmatpush.bf16.msra.mxu0 %v572
    %1364 = vmatmul.bf16.gmra.mxu0 %v1355
    %v1365 = vpop.f32.mrf.mxu0
    %v1366 = vadd.f32 0.0, %v1365
    %v1367 = vpop.f32.mrf.mxu0
    %1368 = vdwg.mxu0
    %1369 = vmatpush.bf16.msra.mxu0 %v601
    %1370 = vmatpush.bf16.msra.mxu0 %v597
    %1371 = vmatpush.bf16.msra.mxu0 %v593
    %1372 = vmatpush.bf16.msra.mxu0 %v589
    %1373 = vmatpush.bf16.msra.mxu0 %v585
    %1374 = vmatpush.bf16.msra.mxu0 %v581
    %1375 = vmatpush.bf16.msra.mxu0 %v577
    %1376 = vmatpush.bf16.msra.mxu0 %v573
    %1377 = vmatmul.bf16.gmra.mxu0 %v1355
    %v1378 = vpop.f32.mrf.mxu0
    %v1379 = vadd.f32 0.0, %v1378
    %v1380 = vpop.f32.mrf.mxu0
    %1381 = vdwg.mxu0
    %1382 = vmatpush.bf16.msra.mxu0 %v602
    %1383 = vmatpush.bf16.msra.mxu0 %v598
    %1384 = vmatpush.bf16.msra.mxu0 %v594
    %1385 = vmatpush.bf16.msra.mxu0 %v590
    %1386 = vmatpush.bf16.msra.mxu0 %v586
    %1387 = vmatpush.bf16.msra.mxu0 %v582
    %1388 = vmatpush.bf16.msra.mxu0 %v578
    %1389 = vmatpush.bf16.msra.mxu0 %v574
    %1390 = vmatmul.bf16.gmra.mxu0 %v1355
    %v1391 = vpop.f32.mrf.mxu0
    %v1392 = vadd.f32 0.0, %v1391
    %v1393 = vpop.f32.mrf.mxu0
    %1394 = vdwg.mxu0
    %1395 = vmatpush.bf16.msra.mxu0 %v603
    %1396 = vmatpush.bf16.msra.mxu0 %v599
    %1397 = vmatpush.bf16.msra.mxu0 %v595
    %1398 = vmatpush.bf16.msra.mxu0 %v591
    %1399 = vmatpush.bf16.msra.mxu0 %v587
    %1400 = vmatpush.bf16.msra.mxu0 %v583
    %1401 = vmatpush.bf16.msra.mxu0 %v579
    %1402 = vmatpush.bf16.msra.mxu0 %v575
    %1403 = vmatmul.bf16.gmra.mxu0 %v1355
    %v1404 = vpop.f32.mrf.mxu0
    %v1405 = vadd.f32 0.0, %v1404
    %v1406 = vpop.f32.mrf.mxu0
    %1407 = vdwg.mxu0
    %v1408 = vadd.f32 %v353, %v1366
    %v1409 = vadd.f32 %v382, %v1379
    %v1410 = vadd.f32 %v411, %v1392
    %v1411 = vadd.f32 %v440, %v1405
    %v1412 = vxor.u32 %v1408, 2147483648
    %v1413 = vxor.u32 %v1409, 2147483648
    %v1414 = vxor.u32 %v1410, 2147483648
    %v1415 = vmul.f32 %v1412, 1.442695
    %v1416 = vpow.pop %v1415
    %v1417 = vmul.f32 %v1413, 1.442695
    %v1418 = vpow.pop %v1417
    %v1419 = vmul.f32 %v1414, 1.442695
    %v1420 = vpow.pop %v1419
    %v1421 = vadd.f32 %v1416, 1.0
    %v1422 = vadd.f32 %v1418, 1.0
    %v1423 = vadd.f32 %v1420, 1.0
    %v1424 = vrcp.pop %v1421
    %v1425 = vmul.f32 %v1421, %v1424
    %v1426 = vsub.f32 1.0, %v1425
    %v1427 = vmul.f32 %v1424, %v1426
    %v1428 = vadd.f32 %v1424, %v1427
    %vm1429 = vweird.f32 %v1421
    %vm1430 = vweird.f32 %v1424
    %vm1431 = vmor %vm1429, %vm1430
    %v1432 = vsel %vm1431, %v1424, %v1428
    %v1433 = vand.u32 2147483647, %v1421
    %vm1434 = vcmp.eq.f32.partialorder %v1433, 8.507059e+37
    %v1435 = vand.u32 %v1421, 2147483648
    %v1436 = vor.u32 1.1754944e-38, %v1435
    %v1437 = vsel %vm1434, %v1436, %v1432
    %v1438 = vmul.f32 1.0, %v1437
    %v1439 = vrcp.pop %v1422
    %v1440 = vmul.f32 %v1422, %v1439
    %v1441 = vsub.f32 1.0, %v1440
    %v1442 = vmul.f32 %v1439, %v1441
    %v1443 = vadd.f32 %v1439, %v1442
    %vm1444 = vweird.f32 %v1422
    %vm1445 = vweird.f32 %v1439
    %vm1446 = vmor %vm1444, %vm1445
    %v1447 = vsel %vm1446, %v1439, %v1443
    %v1448 = vand.u32 2147483647, %v1422
    %vm1449 = vcmp.eq.f32.partialorder %v1448, 8.507059e+37
    %v1450 = vand.u32 %v1422, 2147483648
    %v1451 = vor.u32 1.1754944e-38, %v1450
    %v1452 = vsel %vm1449, %v1451, %v1447
    %v1453 = vmul.f32 1.0, %v1452
    %v1454 = vrcp.pop %v1423
    %v1455 = vmul.f32 %v1423, %v1454
    %v1456 = vsub.f32 1.0, %v1455
    %v1457 = vmul.f32 %v1454, %v1456
    %v1458 = vadd.f32 %v1454, %v1457
    %vm1459 = vweird.f32 %v1423
    %vm1460 = vweird.f32 %v1454
    %vm1461 = vmor %vm1459, %vm1460
    %v1462 = vsel %vm1461, %v1454, %v1458
    %v1463 = vand.u32 2147483647, %v1423
    %vm1464 = vcmp.eq.f32.partialorder %v1463, 8.507059e+37
    %v1465 = vand.u32 %v1423, 2147483648
    %v1466 = vor.u32 1.1754944e-38, %v1465
    %v1467 = vsel %vm1464, %v1466, %v1462
    %v1468 = vmul.f32 1.0, %v1467
    %v1469 = vtanh.pop %v1411
    %v1470 = vmul.f32 %v1453, %v1352
    %v1471 = vmul.f32 %v1438, %v1469
    %v1472 = vadd.f32 %v1470, %v1471
    %v1473 = vtanh.pop %v1472
    %v1474 = vmul.f32 %v1468, %v1473
    %v1475 = vpack.c.bf16 %v1474, %v1474
    %1476 = vmatpush.bf16.msra.mxu0 %v600
    %1477 = vmatpush.bf16.msra.mxu0 %v596
    %1478 = vmatpush.bf16.msra.mxu0 %v592
    %1479 = vmatpush.bf16.msra.mxu0 %v588
    %1480 = vmatpush.bf16.msra.mxu0 %v584
    %1481 = vmatpush.bf16.msra.mxu0 %v580
    %1482 = vmatpush.bf16.msra.mxu0 %v576
    %1483 = vmatpush.bf16.msra.mxu0 %v572
    %1484 = vmatmul.bf16.gmra.mxu0 %v1475
    %v1485 = vpop.f32.mrf.mxu0
    %v1486 = vadd.f32 0.0, %v1485
    %v1487 = vpop.f32.mrf.mxu0
    %1488 = vdwg.mxu0
    %1489 = vmatpush.bf16.msra.mxu0 %v601
    %1490 = vmatpush.bf16.msra.mxu0 %v597
    %1491 = vmatpush.bf16.msra.mxu0 %v593
    %1492 = vmatpush.bf16.msra.mxu0 %v589
    %1493 = vmatpush.bf16.msra.mxu0 %v585
    %1494 = vmatpush.bf16.msra.mxu0 %v581
    %1495 = vmatpush.bf16.msra.mxu0 %v577
    %1496 = vmatpush.bf16.msra.mxu0 %v573
    %1497 = vmatmul.bf16.gmra.mxu0 %v1475
    %v1498 = vpop.f32.mrf.mxu0
    %v1499 = vadd.f32 0.0, %v1498
    %v1500 = vpop.f32.mrf.mxu0
    %1501 = vdwg.mxu0
    %1502 = vmatpush.bf16.msra.mxu0 %v602
    %1503 = vmatpush.bf16.msra.mxu0 %v598
    %1504 = vmatpush.bf16.msra.mxu0 %v594
    %1505 = vmatpush.bf16.msra.mxu0 %v590
    %1506 = vmatpush.bf16.msra.mxu0 %v586
    %1507 = vmatpush.bf16.msra.mxu0 %v582
    %1508 = vmatpush.bf16.msra.mxu0 %v578
    %1509 = vmatpush.bf16.msra.mxu0 %v574
    %1510 = vmatmul.bf16.gmra.mxu0 %v1475
    %v1511 = vpop.f32.mrf.mxu0
    %v1512 = vadd.f32 0.0, %v1511
    %v1513 = vpop.f32.mrf.mxu0
    %1514 = vdwg.mxu0
    %1515 = vmatpush.bf16.msra.mxu0 %v603
    %1516 = vmatpush.bf16.msra.mxu0 %v599
    %1517 = vmatpush.bf16.msra.mxu0 %v595
    %1518 = vmatpush.bf16.msra.mxu0 %v591
    %1519 = vmatpush.bf16.msra.mxu0 %v587
    %1520 = vmatpush.bf16.msra.mxu0 %v583
    %1521 = vmatpush.bf16.msra.mxu0 %v579
    %1522 = vmatpush.bf16.msra.mxu0 %v575
    %1523 = vmatmul.bf16.gmra.mxu0 %v1475
    %v1524 = vpop.f32.mrf.mxu0
    %v1525 = vadd.f32 0.0, %v1524
    %v1526 = vpop.f32.mrf.mxu0
    %1527 = vdwg.mxu0
    %v1528 = vadd.f32 %v355, %v1486
    %v1529 = vadd.f32 %v384, %v1499
    %v1530 = vadd.f32 %v413, %v1512
    %v1531 = vadd.f32 %v442, %v1525
    %v1532 = vxor.u32 %v1528, 2147483648
    %v1533 = vxor.u32 %v1529, 2147483648
    %v1534 = vxor.u32 %v1530, 2147483648
    %v1535 = vmul.f32 %v1532, 1.442695
    %v1536 = vpow.pop %v1535
    %v1537 = vmul.f32 %v1533, 1.442695
    %v1538 = vpow.pop %v1537
    %v1539 = vmul.f32 %v1534, 1.442695
    %v1540 = vpow.pop %v1539
    %v1541 = vadd.f32 %v1536, 1.0
    %v1542 = vadd.f32 %v1538, 1.0
    %v1543 = vadd.f32 %v1540, 1.0
    %v1544 = vrcp.pop %v1541
    %v1545 = vmul.f32 %v1541, %v1544
    %v1546 = vsub.f32 1.0, %v1545
    %v1547 = vmul.f32 %v1544, %v1546
    %v1548 = vadd.f32 %v1544, %v1547
    %vm1549 = vweird.f32 %v1541
    %vm1550 = vweird.f32 %v1544
    %vm1551 = vmor %vm1549, %vm1550
    %v1552 = vsel %vm1551, %v1544, %v1548
    %v1553 = vand.u32 2147483647, %v1541
    %vm1554 = vcmp.eq.f32.partialorder %v1553, 8.507059e+37
    %v1555 = vand.u32 %v1541, 2147483648
    %v1556 = vor.u32 1.1754944e-38, %v1555
    %v1557 = vsel %vm1554, %v1556, %v1552
    %v1558 = vmul.f32 1.0, %v1557
    %v1559 = vrcp.pop %v1542
    %v1560 = vmul.f32 %v1542, %v1559
    %v1561 = vsub.f32 1.0, %v1560
    %v1562 = vmul.f32 %v1559, %v1561
    %v1563 = vadd.f32 %v1559, %v1562
    %vm1564 = vweird.f32 %v1542
    %vm1565 = vweird.f32 %v1559
    %vm1566 = vmor %vm1564, %vm1565
    %v1567 = vsel %vm1566, %v1559, %v1563
    %v1568 = vand.u32 2147483647, %v1542
    %vm1569 = vcmp.eq.f32.partialorder %v1568, 8.507059e+37
    %v1570 = vand.u32 %v1542, 2147483648
    %v1571 = vor.u32 1.1754944e-38, %v1570
    %v1572 = vsel %vm1569, %v1571, %v1567
    %v1573 = vmul.f32 1.0, %v1572
    %v1574 = vrcp.pop %v1543
    %v1575 = vmul.f32 %v1543, %v1574
    %v1576 = vsub.f32 1.0, %v1575
    %v1577 = vmul.f32 %v1574, %v1576
    %v1578 = vadd.f32 %v1574, %v1577
    %vm1579 = vweird.f32 %v1543
    %vm1580 = vweird.f32 %v1574
    %vm1581 = vmor %vm1579, %vm1580
    %v1582 = vsel %vm1581, %v1574, %v1578
    %v1583 = vand.u32 2147483647, %v1543
    %vm1584 = vcmp.eq.f32.partialorder %v1583, 8.507059e+37
    %v1585 = vand.u32 %v1543, 2147483648
    %v1586 = vor.u32 1.1754944e-38, %v1585
    %v1587 = vsel %vm1584, %v1586, %v1582
    %v1588 = vmul.f32 1.0, %v1587
    %v1589 = vtanh.pop %v1531
    %v1590 = vmul.f32 %v1573, %v1472
    %v1591 = vmul.f32 %v1558, %v1589
    %v1592 = vadd.f32 %v1590, %v1591
    %v1593 = vtanh.pop %v1592
    %v1594 = vmul.f32 %v1588, %v1593
    %v1595 = vpack.c.bf16 %v1594, %v1594
    %v1597 = vunpack.c.l.b16 %v875
    %v1598 = vpack.c.b16 %v1597, %v1597
    %v1600 = vunpack.c.l.b16 %v1115
    %v1601 = vpack.c.b16 %v1600, %v1600
    %v1603 = vunpack.c.l.b16 %v1355
    %v1604 = vpack.c.b16 %v1603, %v1603
    %v1606 = vunpack.c.l.b16 %v1595
    %v1607 = vpack.c.b16 %v1606, %v1606
    %vm1608 = vcmask 1043456
    %v1611 = vsel %vm1608, %v755, %v1598
    %v1615 = vsel %vm1608, %v995, %v1601
    %v1619 = vsel %vm1608, %v1235, %v1604
    %v1623 = vsel %vm1608, %v1475, %v1607
    %v1625 = vld [vmem:[#allocation6] sm:$0xff]
    %v1626 = vld [vmem:[#allocation6 + $0x8] sm:$0xff]
    %v1627 = vld [vmem:[#allocation6 + $0x10] sm:$0xff]
    %v1628 = vld [vmem:[#allocation6 + $0x18] sm:$0xff]
    %v1629 = vld [vmem:[#allocation6 + $0x20] sm:$0xff]
    %v1630 = vld [vmem:[#allocation6 + $0x28] sm:$0xff]
    %v1631 = vld [vmem:[#allocation6 + $0x30] sm:$0xff]
    %v1632 = vld [vmem:[#allocation6 + $0x38] sm:$0xff]
    %v1633 = vld [vmem:[#allocation6 + $0x40] sm:$0xff]
    %v1634 = vld [vmem:[#allocation6 + $0x48] sm:$0xff]
    %v1635 = vld [vmem:[#allocation6 + $0x50] sm:$0xff]
    %v1636 = vld [vmem:[#allocation6 + $0x58] sm:$0xff]
    %v1637 = vld [vmem:[#allocation6 + $0x60] sm:$0xff]
    %v1638 = vld [vmem:[#allocation6 + $0x68] sm:$0xff]
    %v1639 = vld [vmem:[#allocation6 + $0x70] sm:$0xff]
    %v1640 = vld [vmem:[#allocation6 + $0x78] sm:$0xff]
    %v1641 = vld [vmem:[#allocation6 + $0x80] sm:$0xff]
    %v1642 = vld [vmem:[#allocation6 + $0x88] sm:$0xff]
    %v1643 = vld [vmem:[#allocation6 + $0x90] sm:$0xff]
    %v1644 = vld [vmem:[#allocation6 + $0x98] sm:$0xff]
    %v1645 = vld [vmem:[#allocation6 + $0xa0] sm:$0xff]
    %v1646 = vld [vmem:[#allocation6 + $0xa8] sm:$0xff]
    %v1647 = vld [vmem:[#allocation6 + $0xb0] sm:$0xff]
    %v1648 = vld [vmem:[#allocation6 + $0xb8] sm:$0xff]
    %v1649 = vld [vmem:[#allocation6 + $0xc0] sm:$0xff]
    %v1650 = vld [vmem:[#allocation6 + $0xc8] sm:$0xff]
    %v1651 = vld [vmem:[#allocation6 + $0xd0] sm:$0xff]
    %v1652 = vld [vmem:[#allocation6 + $0xd8] sm:$0xff]
    %v1653 = vld [vmem:[#allocation6 + $0xe0] sm:$0xff]
    %v1654 = vld [vmem:[#allocation6 + $0xe8] sm:$0xff]
    %v1655 = vld [vmem:[#allocation6 + $0xf0] sm:$0xff]
    %v1656 = vld [vmem:[#allocation6 + $0xf8] sm:$0xff]
    %v1657 = vld [vmem:[%s6] sm:$0xf]
    %v1659 = vperm.slane %v1657, 0
    %v1660 = vperm.slane %v1657, 1
    %v1661 = vperm.slane %v1657, 2
    %v1662 = vperm.slane %v1657, 3
    %v1699 = vunpack.c.l.b16 %v1625
    %v1700 = vunpack.c.h.b16 %v1625
    %v1701 = vunpack.c.l.b16 %v1626
    %v1702 = vunpack.c.h.b16 %v1626
    %v1703 = vunpack.c.l.b16 %v1627
    %v1704 = vunpack.c.h.b16 %v1627
    %v1705 = vunpack.c.l.b16 %v1628
    %v1706 = vunpack.c.h.b16 %v1628
    %v1707 = vunpack.c.l.b16 %v1629
    %v1708 = vunpack.c.h.b16 %v1629
    %v1709 = vunpack.c.l.b16 %v1630
    %v1710 = vunpack.c.h.b16 %v1630
    %v1711 = vunpack.c.l.b16 %v1631
    %v1712 = vunpack.c.h.b16 %v1631
    %v1713 = vunpack.c.l.b16 %v1632
    %v1714 = vunpack.c.h.b16 %v1632
    %v1715 = vunpack.c.l.b16 %v1633
    %v1716 = vunpack.c.h.b16 %v1633
    %v1717 = vunpack.c.l.b16 %v1634
    %v1718 = vunpack.c.h.b16 %v1634
    %v1719 = vunpack.c.l.b16 %v1635
    %v1720 = vunpack.c.h.b16 %v1635
    %v1721 = vunpack.c.l.b16 %v1636
    %v1722 = vunpack.c.h.b16 %v1636
    %v1723 = vunpack.c.l.b16 %v1637
    %v1724 = vunpack.c.h.b16 %v1637
    %v1725 = vunpack.c.l.b16 %v1638
    %v1726 = vunpack.c.h.b16 %v1638
    %v1727 = vunpack.c.l.b16 %v1639
    %v1728 = vunpack.c.h.b16 %v1639
    %v1729 = vunpack.c.l.b16 %v1640
    %v1730 = vunpack.c.h.b16 %v1640
    %v1731 = vunpack.c.l.b16 %v1641
    %v1732 = vunpack.c.h.b16 %v1641
    %v1733 = vunpack.c.l.b16 %v1642
    %v1734 = vunpack.c.h.b16 %v1642
    %v1735 = vunpack.c.l.b16 %v1643
    %v1736 = vunpack.c.h.b16 %v1643
    %v1737 = vunpack.c.l.b16 %v1644
    %v1738 = vunpack.c.h.b16 %v1644
    %v1739 = vunpack.c.l.b16 %v1645
    %v1740 = vunpack.c.h.b16 %v1645
    %v1741 = vunpack.c.l.b16 %v1646
    %v1742 = vunpack.c.h.b16 %v1646
    %v1743 = vunpack.c.l.b16 %v1647
    %v1744 = vunpack.c.h.b16 %v1647
    %v1745 = vunpack.c.l.b16 %v1648
    %v1746 = vunpack.c.h.b16 %v1648
    %v1747 = vunpack.c.l.b16 %v1649
    %v1748 = vunpack.c.h.b16 %v1649
    %v1749 = vunpack.c.l.b16 %v1650
    %v1750 = vunpack.c.h.b16 %v1650
    %v1751 = vunpack.c.l.b16 %v1651
    %v1752 = vunpack.c.h.b16 %v1651
    %v1753 = vunpack.c.l.b16 %v1652
    %v1754 = vunpack.c.h.b16 %v1652
    %v1755 = vunpack.c.l.b16 %v1653
    %v1756 = vunpack.c.h.b16 %v1653
    %v1757 = vunpack.c.l.b16 %v1654
    %v1758 = vunpack.c.h.b16 %v1654
    %v1759 = vunpack.c.l.b16 %v1655
    %v1760 = vunpack.c.h.b16 %v1655
    %v1761 = vunpack.c.l.b16 %v1656
    %v1762 = vunpack.c.h.b16 %v1656
    %v1763 = vpack.c.b16 %v1703, %v1699
    %v1764 = vpack.c.b16 %v1704, %v1700
    %v1765 = vpack.c.b16 %v1705, %v1701
    %v1766 = vpack.c.b16 %v1706, %v1702
    %v1767 = vpack.c.b16 %v1711, %v1707
    %v1768 = vpack.c.b16 %v1712, %v1708
    %v1769 = vpack.c.b16 %v1713, %v1709
    %v1770 = vpack.c.b16 %v1714, %v1710
    %v1771 = vpack.c.b16 %v1719, %v1715
    %v1772 = vpack.c.b16 %v1720, %v1716
    %v1773 = vpack.c.b16 %v1721, %v1717
    %v1774 = vpack.c.b16 %v1722, %v1718
    %v1775 = vpack.c.b16 %v1727, %v1723
    %v1776 = vpack.c.b16 %v1728, %v1724
    %v1777 = vpack.c.b16 %v1729, %v1725
    %v1778 = vpack.c.b16 %v1730, %v1726
    %v1779 = vpack.c.b16 %v1735, %v1731
    %v1780 = vpack.c.b16 %v1736, %v1732
    %v1781 = vpack.c.b16 %v1737, %v1733
    %v1782 = vpack.c.b16 %v1738, %v1734
    %v1783 = vpack.c.b16 %v1743, %v1739
    %v1784 = vpack.c.b16 %v1744, %v1740
    %v1785 = vpack.c.b16 %v1745, %v1741
    %v1786 = vpack.c.b16 %v1746, %v1742
    %v1787 = vpack.c.b16 %v1751, %v1747
    %v1788 = vpack.c.b16 %v1752, %v1748
    %v1789 = vpack.c.b16 %v1753, %v1749
    %v1790 = vpack.c.b16 %v1754, %v1750
    %v1791 = vpack.c.b16 %v1759, %v1755
    %v1792 = vpack.c.b16 %v1760, %v1756
    %v1793 = vpack.c.b16 %v1761, %v1757
    %v1794 = vpack.c.b16 %v1762, %v1758
    %1827 = vmatpush.bf16.msra.mxu0 %v1791
    %1828 = vmatpush.bf16.msra.mxu0 %v1787
    %1829 = vmatpush.bf16.msra.mxu0 %v1783
    %1830 = vmatpush.bf16.msra.mxu0 %v1779
    %1831 = vmatpush.bf16.msra.mxu0 %v1775
    %1832 = vmatpush.bf16.msra.mxu0 %v1771
    %1833 = vmatpush.bf16.msra.mxu0 %v1767
    %1834 = vmatpush.bf16.msra.mxu0 %v1763
    %1835 = vmatmul.bf16.gmra.mxu0 %v1611
    %v1836 = vpop.f32.mrf.mxu0
    %v1837 = vadd.f32 %v1659, %v1836
    %v1838 = vpop.f32.mrf.mxu0
    %v1839 = vadd.f32 %v1659, %v1838
    %1840 = vmatmul.bf16.gmra.mxu0 %v1615
    %v1841 = vpop.f32.mrf.mxu0
    %v1842 = vadd.f32 %v1659, %v1841
    %v1843 = vpop.f32.mrf.mxu0
    %v1844 = vadd.f32 %v1659, %v1843
    %1845 = vmatmul.bf16.gmra.mxu0 %v1619
    %v1846 = vpop.f32.mrf.mxu0
    %v1847 = vadd.f32 %v1659, %v1846
    %v1848 = vpop.f32.mrf.mxu0
    %v1849 = vadd.f32 %v1659, %v1848
    %1850 = vmatmul.bf16.gmra.mxu0 %v1623
    %v1851 = vpop.f32.mrf.mxu0
    %v1852 = vadd.f32 %v1659, %v1851
    %v1853 = vpop.f32.mrf.mxu0
    %v1854 = vadd.f32 %v1659, %v1853
    %1855 = vdwg.mxu0
    %1856 = vmatpush.bf16.msra.mxu0 %v1792
    %1857 = vmatpush.bf16.msra.mxu0 %v1788
    %1858 = vmatpush.bf16.msra.mxu0 %v1784
    %1859 = vmatpush.bf16.msra.mxu0 %v1780
    %1860 = vmatpush.bf16.msra.mxu0 %v1776
    %1861 = vmatpush.bf16.msra.mxu0 %v1772
    %1862 = vmatpush.bf16.msra.mxu0 %v1768
    %1863 = vmatpush.bf16.msra.mxu0 %v1764
    %1864 = vmatmul.bf16.gmra.mxu0 %v1611
    %v1865 = vpop.f32.mrf.mxu0
    %v1866 = vadd.f32 %v1660, %v1865
    %v1867 = vpop.f32.mrf.mxu0
    %v1868 = vadd.f32 %v1660, %v1867
    %1869 = vmatmul.bf16.gmra.mxu0 %v1615
    %v1870 = vpop.f32.mrf.mxu0
    %v1871 = vadd.f32 %v1660, %v1870
    %v1872 = vpop.f32.mrf.mxu0
    %v1873 = vadd.f32 %v1660, %v1872
    %1874 = vmatmul.bf16.gmra.mxu0 %v1619
    %v1875 = vpop.f32.mrf.mxu0
    %v1876 = vadd.f32 %v1660, %v1875
    %v1877 = vpop.f32.mrf.mxu0
    %v1878 = vadd.f32 %v1660, %v1877
    %1879 = vmatmul.bf16.gmra.mxu0 %v1623
    %v1880 = vpop.f32.mrf.mxu0
    %v1881 = vadd.f32 %v1660, %v1880
    %v1882 = vpop.f32.mrf.mxu0
    %v1883 = vadd.f32 %v1660, %v1882
    %1884 = vdwg.mxu0
    %1885 = vmatpush.bf16.msra.mxu0 %v1793
    %1886 = vmatpush.bf16.msra.mxu0 %v1789
    %1887 = vmatpush.bf16.msra.mxu0 %v1785
    %1888 = vmatpush.bf16.msra.mxu0 %v1781
    %1889 = vmatpush.bf16.msra.mxu0 %v1777
    %1890 = vmatpush.bf16.msra.mxu0 %v1773
    %1891 = vmatpush.bf16.msra.mxu0 %v1769
    %1892 = vmatpush.bf16.msra.mxu0 %v1765
    %1893 = vmatmul.bf16.gmra.mxu0 %v1611
    %v1894 = vpop.f32.mrf.mxu0
    %v1895 = vadd.f32 %v1661, %v1894
    %v1896 = vpop.f32.mrf.mxu0
    %v1897 = vadd.f32 %v1661, %v1896
    %1898 = vmatmul.bf16.gmra.mxu0 %v1615
    %v1899 = vpop.f32.mrf.mxu0
    %v1900 = vadd.f32 %v1661, %v1899
    %v1901 = vpop.f32.mrf.mxu0
    %v1902 = vadd.f32 %v1661, %v1901
    %1903 = vmatmul.bf16.gmra.mxu0 %v1619
    %v1904 = vpop.f32.mrf.mxu0
    %v1905 = vadd.f32 %v1661, %v1904
    %v1906 = vpop.f32.mrf.mxu0
    %v1907 = vadd.f32 %v1661, %v1906
    %1908 = vmatmul.bf16.gmra.mxu0 %v1623
    %v1909 = vpop.f32.mrf.mxu0
    %v1910 = vadd.f32 %v1661, %v1909
    %v1911 = vpop.f32.mrf.mxu0
    %v1912 = vadd.f32 %v1661, %v1911
    %1913 = vdwg.mxu0
    %1914 = vmatpush.bf16.msra.mxu0 %v1794
    %1915 = vmatpush.bf16.msra.mxu0 %v1790
    %1916 = vmatpush.bf16.msra.mxu0 %v1786
    %1917 = vmatpush.bf16.msra.mxu0 %v1782
    %1918 = vmatpush.bf16.msra.mxu0 %v1778
    %1919 = vmatpush.bf16.msra.mxu0 %v1774
    %1920 = vmatpush.bf16.msra.mxu0 %v1770
    %1921 = vmatpush.bf16.msra.mxu0 %v1766
    %1922 = vmatmul.bf16.gmra.mxu0 %v1611
    %v1923 = vpop.f32.mrf.mxu0
    %v1924 = vadd.f32 %v1662, %v1923
    %v1925 = vpop.f32.mrf.mxu0
    %v1926 = vadd.f32 %v1662, %v1925
    %1927 = vmatmul.bf16.gmra.mxu0 %v1615
    %v1928 = vpop.f32.mrf.mxu0
    %v1929 = vadd.f32 %v1662, %v1928
    %v1930 = vpop.f32.mrf.mxu0
    %v1931 = vadd.f32 %v1662, %v1930
    %1932 = vmatmul.bf16.gmra.mxu0 %v1619
    %v1933 = vpop.f32.mrf.mxu0
    %v1934 = vadd.f32 %v1662, %v1933
    %v1935 = vpop.f32.mrf.mxu0
    %v1936 = vadd.f32 %v1662, %v1935
    %1937 = vmatmul.bf16.gmra.mxu0 %v1623
    %v1938 = vpop.f32.mrf.mxu0
    %v1939 = vadd.f32 %v1662, %v1938
    %v1940 = vpop.f32.mrf.mxu0
    %v1941 = vadd.f32 %v1662, %v1940
    %1942 = vdwg.mxu0
    %v1943 = vld [vmem:[#allocation7] sm:$0xff]
    %v1944 = vld [vmem:[#allocation7 + $0x8] sm:$0xff]
    %v1945 = vld [vmem:[#allocation7 + $0x10] sm:$0xff]
    %v1946 = vld [vmem:[#allocation7 + $0x18] sm:$0xff]
    %v1947 = vld [vmem:[#allocation7 + $0x20] sm:$0xff]
    %v1948 = vld [vmem:[#allocation7 + $0x28] sm:$0xff]
    %v1949 = vld [vmem:[#allocation7 + $0x30] sm:$0xff]
    %v1950 = vld [vmem:[#allocation7 + $0x38] sm:$0xff]
    %v1951 = vld [vmem:[#allocation7 + $0x40] sm:$0xff]
    %v1952 = vld [vmem:[#allocation7 + $0x48] sm:$0xff]
    %v1953 = vld [vmem:[#allocation7 + $0x50] sm:$0xff]
    %v1954 = vld [vmem:[#allocation7 + $0x58] sm:$0xff]
    %v1955 = vld [vmem:[#allocation7 + $0x60] sm:$0xff]
    %v1956 = vld [vmem:[#allocation7 + $0x68] sm:$0xff]
    %v1957 = vld [vmem:[#allocation7 + $0x70] sm:$0xff]
    %v1958 = vld [vmem:[#allocation7 + $0x78] sm:$0xff]
    %v1959 = vld [vmem:[#allocation7 + $0x80] sm:$0xff]
    %v1960 = vld [vmem:[#allocation7 + $0x88] sm:$0xff]
    %v1961 = vld [vmem:[#allocation7 + $0x90] sm:$0xff]
    %v1962 = vld [vmem:[#allocation7 + $0x98] sm:$0xff]
    %v1963 = vld [vmem:[#allocation7 + $0xa0] sm:$0xff]
    %v1964 = vld [vmem:[#allocation7 + $0xa8] sm:$0xff]
    %v1965 = vld [vmem:[#allocation7 + $0xb0] sm:$0xff]
    %v1966 = vld [vmem:[#allocation7 + $0xb8] sm:$0xff]
    %v1967 = vld [vmem:[#allocation7 + $0xc0] sm:$0xff]
    %v1968 = vld [vmem:[#allocation7 + $0xc8] sm:$0xff]
    %v1969 = vld [vmem:[#allocation7 + $0xd0] sm:$0xff]
    %v1970 = vld [vmem:[#allocation7 + $0xd8] sm:$0xff]
    %v1971 = vld [vmem:[#allocation7 + $0xe0] sm:$0xff]
    %v1972 = vld [vmem:[#allocation7 + $0xe8] sm:$0xff]
    %v1973 = vld [vmem:[#allocation7 + $0xf0] sm:$0xff]
    %v1974 = vld [vmem:[#allocation7 + $0xf8] sm:$0xff]
    %v2007 = vunpack.c.l.b16 %v1943
    %v2008 = vunpack.c.h.b16 %v1943
    %v2009 = vunpack.c.l.b16 %v1944
    %v2010 = vunpack.c.h.b16 %v1944
    %v2011 = vunpack.c.l.b16 %v1945
    %v2012 = vunpack.c.h.b16 %v1945
    %v2013 = vunpack.c.l.b16 %v1946
    %v2014 = vunpack.c.h.b16 %v1946
    %v2015 = vunpack.c.l.b16 %v1947
    %v2016 = vunpack.c.h.b16 %v1947
    %v2017 = vunpack.c.l.b16 %v1948
    %v2018 = vunpack.c.h.b16 %v1948
    %v2019 = vunpack.c.l.b16 %v1949
    %v2020 = vunpack.c.h.b16 %v1949
    %v2021 = vunpack.c.l.b16 %v1950
    %v2022 = vunpack.c.h.b16 %v1950
    %v2023 = vunpack.c.l.b16 %v1951
    %v2024 = vunpack.c.h.b16 %v1951
    %v2025 = vunpack.c.l.b16 %v1952
    %v2026 = vunpack.c.h.b16 %v1952
    %v2027 = vunpack.c.l.b16 %v1953
    %v2028 = vunpack.c.h.b16 %v1953
    %v2029 = vunpack.c.l.b16 %v1954
    %v2030 = vunpack.c.h.b16 %v1954
    %v2031 = vunpack.c.l.b16 %v1955
    %v2032 = vunpack.c.h.b16 %v1955
    %v2033 = vunpack.c.l.b16 %v1956
    %v2034 = vunpack.c.h.b16 %v1956
    %v2035 = vunpack.c.l.b16 %v1957
    %v2036 = vunpack.c.h.b16 %v1957
    %v2037 = vunpack.c.l.b16 %v1958
    %v2038 = vunpack.c.h.b16 %v1958
    %v2039 = vunpack.c.l.b16 %v1959
    %v2040 = vunpack.c.h.b16 %v1959
    %v2041 = vunpack.c.l.b16 %v1960
    %v2042 = vunpack.c.h.b16 %v1960
    %v2043 = vunpack.c.l.b16 %v1961
    %v2044 = vunpack.c.h.b16 %v1961
    %v2045 = vunpack.c.l.b16 %v1962
    %v2046 = vunpack.c.h.b16 %v1962
    %v2047 = vunpack.c.l.b16 %v1963
    %v2048 = vunpack.c.h.b16 %v1963
    %v2049 = vunpack.c.l.b16 %v1964
    %v2050 = vunpack.c.h.b16 %v1964
    %v2051 = vunpack.c.l.b16 %v1965
    %v2052 = vunpack.c.h.b16 %v1965
    %v2053 = vunpack.c.l.b16 %v1966
    %v2054 = vunpack.c.h.b16 %v1966
    %v2055 = vunpack.c.l.b16 %v1967
    %v2056 = vunpack.c.h.b16 %v1967
    %v2057 = vunpack.c.l.b16 %v1968
    %v2058 = vunpack.c.h.b16 %v1968
    %v2059 = vunpack.c.l.b16 %v1969
    %v2060 = vunpack.c.h.b16 %v1969
    %v2061 = vunpack.c.l.b16 %v1970
    %v2062 = vunpack.c.h.b16 %v1970
    %v2063 = vunpack.c.l.b16 %v1971
    %v2064 = vunpack.c.h.b16 %v1971
    %v2065 = vunpack.c.l.b16 %v1972
    %v2066 = vunpack.c.h.b16 %v1972
    %v2067 = vunpack.c.l.b16 %v1973
    %v2068 = vunpack.c.h.b16 %v1973
    %v2069 = vunpack.c.l.b16 %v1974
    %v2070 = vunpack.c.h.b16 %v1974
    %v2071 = vpack.c.b16 %v2011, %v2007
    %v2072 = vpack.c.b16 %v2012, %v2008
    %v2073 = vpack.c.b16 %v2013, %v2009
    %v2074 = vpack.c.b16 %v2014, %v2010
    %v2075 = vpack.c.b16 %v2019, %v2015
    %v2076 = vpack.c.b16 %v2020, %v2016
    %v2077 = vpack.c.b16 %v2021, %v2017
    %v2078 = vpack.c.b16 %v2022, %v2018
    %v2079 = vpack.c.b16 %v2027, %v2023
    %v2080 = vpack.c.b16 %v2028, %v2024
    %v2081 = vpack.c.b16 %v2029, %v2025
    %v2082 = vpack.c.b16 %v2030, %v2026
    %v2083 = vpack.c.b16 %v2035, %v2031
    %v2084 = vpack.c.b16 %v2036, %v2032
    %v2085 = vpack.c.b16 %v2037, %v2033
    %v2086 = vpack.c.b16 %v2038, %v2034
    %v2087 = vpack.c.b16 %v2043, %v2039
    %v2088 = vpack.c.b16 %v2044, %v2040
    %v2089 = vpack.c.b16 %v2045, %v2041
    %v2090 = vpack.c.b16 %v2046, %v2042
    %v2091 = vpack.c.b16 %v2051, %v2047
    %v2092 = vpack.c.b16 %v2052, %v2048
    %v2093 = vpack.c.b16 %v2053, %v2049
    %v2094 = vpack.c.b16 %v2054, %v2050
    %v2095 = vpack.c.b16 %v2059, %v2055
    %v2096 = vpack.c.b16 %v2060, %v2056
    %v2097 = vpack.c.b16 %v2061, %v2057
    %v2098 = vpack.c.b16 %v2062, %v2058
    %v2099 = vpack.c.b16 %v2067, %v2063
    %v2100 = vpack.c.b16 %v2068, %v2064
    %v2101 = vpack.c.b16 %v2069, %v2065
    %v2102 = vpack.c.b16 %v2070, %v2066
    %2135 = vmatpush.bf16.msra.mxu0 %v2099
    %2136 = vmatpush.bf16.msra.mxu0 %v2095
    %2137 = vmatpush.bf16.msra.mxu0 %v2091
    %2138 = vmatpush.bf16.msra.mxu0 %v2087
    %2139 = vmatpush.bf16.msra.mxu0 %v2083
    %2140 = vmatpush.bf16.msra.mxu0 %v2079
    %2141 = vmatpush.bf16.msra.mxu0 %v2075
    %2142 = vmatpush.bf16.msra.mxu0 %v2071
    %2143 = vmatmul.bf16.gmra.mxu0 0
    %v2144 = vpop.f32.mrf.mxu0
    %v2145 = vadd.f32 0.0, %v2144
    %v2146 = vpop.f32.mrf.mxu0
    %2147 = vdwg.mxu0
    %2148 = vmatpush.bf16.msra.mxu0 %v2100
    %2149 = vmatpush.bf16.msra.mxu0 %v2096
    %2150 = vmatpush.bf16.msra.mxu0 %v2092
    %2151 = vmatpush.bf16.msra.mxu0 %v2088
    %2152 = vmatpush.bf16.msra.mxu0 %v2084
    %2153 = vmatpush.bf16.msra.mxu0 %v2080
    %2154 = vmatpush.bf16.msra.mxu0 %v2076
    %2155 = vmatpush.bf16.msra.mxu0 %v2072
    %2156 = vmatmul.bf16.gmra.mxu0 0
    %v2157 = vpop.f32.mrf.mxu0
    %v2158 = vadd.f32 0.0, %v2157
    %v2159 = vpop.f32.mrf.mxu0
    %2160 = vdwg.mxu0
    %2161 = vmatpush.bf16.msra.mxu0 %v2101
    %2162 = vmatpush.bf16.msra.mxu0 %v2097
    %2163 = vmatpush.bf16.msra.mxu0 %v2093
    %2164 = vmatpush.bf16.msra.mxu0 %v2089
    %2165 = vmatpush.bf16.msra.mxu0 %v2085
    %2166 = vmatpush.bf16.msra.mxu0 %v2081
    %2167 = vmatpush.bf16.msra.mxu0 %v2077
    %2168 = vmatpush.bf16.msra.mxu0 %v2073
    %2169 = vmatmul.bf16.gmra.mxu0 0
    %v2170 = vpop.f32.mrf.mxu0
    %v2171 = vadd.f32 0.0, %v2170
    %v2172 = vpop.f32.mrf.mxu0
    %2173 = vdwg.mxu0
    %2174 = vmatpush.bf16.msra.mxu0 %v2102
    %2175 = vmatpush.bf16.msra.mxu0 %v2098
    %2176 = vmatpush.bf16.msra.mxu0 %v2094
    %2177 = vmatpush.bf16.msra.mxu0 %v2090
    %2178 = vmatpush.bf16.msra.mxu0 %v2086
    %2179 = vmatpush.bf16.msra.mxu0 %v2082
    %2180 = vmatpush.bf16.msra.mxu0 %v2078
    %2181 = vmatpush.bf16.msra.mxu0 %v2074
    %2182 = vmatmul.bf16.gmra.mxu0 0
    %v2183 = vpop.f32.mrf.mxu0
    %v2184 = vadd.f32 0.0, %v2183
    %v2185 = vpop.f32.mrf.mxu0
    %2186 = vdwg.mxu0
    %v2187 = vadd.f32 %v1837, %v2145
    %v2188 = vadd.f32 %v1866, %v2158
    %v2189 = vadd.f32 %v1895, %v2171
    %v2190 = vadd.f32 %v1924, %v2184
    %v2191 = vxor.u32 %v2187, 2147483648
    %v2192 = vxor.u32 %v2188, 2147483648
    %v2193 = vxor.u32 %v2189, 2147483648
    %v2194 = vmul.f32 %v2191, 1.442695
    %v2195 = vpow.pop %v2194
    %v2196 = vmul.f32 %v2192, 1.442695
    %v2197 = vpow.pop %v2196
    %v2198 = vmul.f32 %v2193, 1.442695
    %v2199 = vpow.pop %v2198
    %v2200 = vadd.f32 %v2195, 1.0
    %v2201 = vadd.f32 %v2197, 1.0
    %v2202 = vadd.f32 %v2199, 1.0
    %v2203 = vrcp.pop %v2200
    %v2204 = vmul.f32 %v2200, %v2203
    %v2205 = vsub.f32 1.0, %v2204
    %v2206 = vmul.f32 %v2203, %v2205
    %v2207 = vadd.f32 %v2203, %v2206
    %vm2208 = vweird.f32 %v2200
    %vm2209 = vweird.f32 %v2203
    %vm2210 = vmor %vm2208, %vm2209
    %v2211 = vsel %vm2210, %v2203, %v2207
    %v2212 = vand.u32 2147483647, %v2200
    %vm2213 = vcmp.eq.f32.partialorder %v2212, 8.507059e+37
    %v2214 = vand.u32 %v2200, 2147483648
    %v2215 = vor.u32 1.1754944e-38, %v2214
    %v2216 = vsel %vm2213, %v2215, %v2211
    %v2217 = vmul.f32 1.0, %v2216
    %v2218 = vrcp.pop %v2201
    %v2219 = vmul.f32 %v2201, %v2218
    %v2220 = vsub.f32 1.0, %v2219
    %v2221 = vmul.f32 %v2218, %v2220
    %v2222 = vadd.f32 %v2218, %v2221
    %vm2223 = vweird.f32 %v2201
    %vm2224 = vweird.f32 %v2218
    %vm2225 = vmor %vm2223, %vm2224
    %v2226 = vsel %vm2225, %v2218, %v2222
    %v2227 = vand.u32 2147483647, %v2201
    %vm2228 = vcmp.eq.f32.partialorder %v2227, 8.507059e+37
    %v2229 = vand.u32 %v2201, 2147483648
    %v2230 = vor.u32 1.1754944e-38, %v2229
    %v2231 = vsel %vm2228, %v2230, %v2226
    %v2232 = vmul.f32 1.0, %v2231
    %v2233 = vrcp.pop %v2202
    %v2234 = vmul.f32 %v2202, %v2233
    %v2235 = vsub.f32 1.0, %v2234
    %v2236 = vmul.f32 %v2233, %v2235
    %v2237 = vadd.f32 %v2233, %v2236
    %vm2238 = vweird.f32 %v2202
    %vm2239 = vweird.f32 %v2233
    %vm2240 = vmor %vm2238, %vm2239
    %v2241 = vsel %vm2240, %v2233, %v2237
    %v2242 = vand.u32 2147483647, %v2202
    %vm2243 = vcmp.eq.f32.partialorder %v2242, 8.507059e+37
    %v2244 = vand.u32 %v2202, 2147483648
    %v2245 = vor.u32 1.1754944e-38, %v2244
    %v2246 = vsel %vm2243, %v2245, %v2241
    %v2247 = vmul.f32 1.0, %v2246
    %v2248 = vtanh.pop %v2190
    %v2249 = vmul.f32 %v2232, 0.0
    %v2250 = vmul.f32 %v2217, %v2248
    %v2251 = vadd.f32 %v2249, %v2250
    %v2252 = vtanh.pop %v2251
    %v2253 = vmul.f32 %v2247, %v2252
    %v2254 = vpack.c.bf16 %v2253, %v2253
    %v2255 = vadd.f32 %v2253, 0.0
    %2256 = vmatpush.bf16.msra.mxu0 %v2099
    %2257 = vmatpush.bf16.msra.mxu0 %v2095
    %2258 = vmatpush.bf16.msra.mxu0 %v2091
    %2259 = vmatpush.bf16.msra.mxu0 %v2087
    %2260 = vmatpush.bf16.msra.mxu0 %v2083
    %2261 = vmatpush.bf16.msra.mxu0 %v2079
    %2262 = vmatpush.bf16.msra.mxu0 %v2075
    %2263 = vmatpush.bf16.msra.mxu0 %v2071
    %2264 = vmatmul.bf16.gmra.mxu0 %v2254
    %v2265 = vpop.f32.mrf.mxu0
    %v2266 = vadd.f32 0.0, %v2265
    %v2267 = vpop.f32.mrf.mxu0
    %2268 = vdwg.mxu0
    %2269 = vmatpush.bf16.msra.mxu0 %v2100
    %2270 = vmatpush.bf16.msra.mxu0 %v2096
    %2271 = vmatpush.bf16.msra.mxu0 %v2092
    %2272 = vmatpush.bf16.msra.mxu0 %v2088
    %2273 = vmatpush.bf16.msra.mxu0 %v2084
    %2274 = vmatpush.bf16.msra.mxu0 %v2080
    %2275 = vmatpush.bf16.msra.mxu0 %v2076
    %2276 = vmatpush.bf16.msra.mxu0 %v2072
    %2277 = vmatmul.bf16.gmra.mxu0 %v2254
    %v2278 = vpop.f32.mrf.mxu0
    %v2279 = vadd.f32 0.0, %v2278
    %v2280 = vpop.f32.mrf.mxu0
    %2281 = vdwg.mxu0
    %2282 = vmatpush.bf16.msra.mxu0 %v2101
    %2283 = vmatpush.bf16.msra.mxu0 %v2097
    %2284 = vmatpush.bf16.msra.mxu0 %v2093
    %2285 = vmatpush.bf16.msra.mxu0 %v2089
    %2286 = vmatpush.bf16.msra.mxu0 %v2085
    %2287 = vmatpush.bf16.msra.mxu0 %v2081
    %2288 = vmatpush.bf16.msra.mxu0 %v2077
    %2289 = vmatpush.bf16.msra.mxu0 %v2073
    %2290 = vmatmul.bf16.gmra.mxu0 %v2254
    %v2291 = vpop.f32.mrf.mxu0
    %v2292 = vadd.f32 0.0, %v2291
    %v2293 = vpop.f32.mrf.mxu0
    %2294 = vdwg.mxu0
    %2295 = vmatpush.bf16.msra.mxu0 %v2102
    %2296 = vmatpush.bf16.msra.mxu0 %v2098
    %2297 = vmatpush.bf16.msra.mxu0 %v2094
    %2298 = vmatpush.bf16.msra.mxu0 %v2090
    %2299 = vmatpush.bf16.msra.mxu0 %v2086
    %2300 = vmatpush.bf16.msra.mxu0 %v2082
    %2301 = vmatpush.bf16.msra.mxu0 %v2078
    %2302 = vmatpush.bf16.msra.mxu0 %v2074
    %2303 = vmatmul.bf16.gmra.mxu0 %v2254
    %v2304 = vpop.f32.mrf.mxu0
    %v2305 = vadd.f32 0.0, %v2304
    %v2306 = vpop.f32.mrf.mxu0
    %2307 = vdwg.mxu0
    %v2308 = vadd.f32 %v1839, %v2266
    %v2309 = vadd.f32 %v1868, %v2279
    %v2310 = vadd.f32 %v1897, %v2292
    %v2311 = vadd.f32 %v1926, %v2305
    %v2312 = vxor.u32 %v2308, 2147483648
    %v2313 = vxor.u32 %v2309, 2147483648
    %v2314 = vxor.u32 %v2310, 2147483648
    %v2315 = vmul.f32 %v2312, 1.442695
    %v2316 = vpow.pop %v2315
    %v2317 = vmul.f32 %v2313, 1.442695
    %v2318 = vpow.pop %v2317
    %v2319 = vmul.f32 %v2314, 1.442695
    %v2320 = vpow.pop %v2319
    %v2321 = vadd.f32 %v2316, 1.0
    %v2322 = vadd.f32 %v2318, 1.0
    %v2323 = vadd.f32 %v2320, 1.0
    %v2324 = vrcp.pop %v2321
    %v2325 = vmul.f32 %v2321, %v2324
    %v2326 = vsub.f32 1.0, %v2325
    %v2327 = vmul.f32 %v2324, %v2326
    %v2328 = vadd.f32 %v2324, %v2327
    %vm2329 = vweird.f32 %v2321
    %vm2330 = vweird.f32 %v2324
    %vm2331 = vmor %vm2329, %vm2330
    %v2332 = vsel %vm2331, %v2324, %v2328
    %v2333 = vand.u32 2147483647, %v2321
    %vm2334 = vcmp.eq.f32.partialorder %v2333, 8.507059e+37
    %v2335 = vand.u32 %v2321, 2147483648
    %v2336 = vor.u32 1.1754944e-38, %v2335
    %v2337 = vsel %vm2334, %v2336, %v2332
    %v2338 = vmul.f32 1.0, %v2337
    %v2339 = vrcp.pop %v2322
    %v2340 = vmul.f32 %v2322, %v2339
    %v2341 = vsub.f32 1.0, %v2340
    %v2342 = vmul.f32 %v2339, %v2341
    %v2343 = vadd.f32 %v2339, %v2342
    %vm2344 = vweird.f32 %v2322
    %vm2345 = vweird.f32 %v2339
    %vm2346 = vmor %vm2344, %vm2345
    %v2347 = vsel %vm2346, %v2339, %v2343
    %v2348 = vand.u32 2147483647, %v2322
    %vm2349 = vcmp.eq.f32.partialorder %v2348, 8.507059e+37
    %v2350 = vand.u32 %v2322, 2147483648
    %v2351 = vor.u32 1.1754944e-38, %v2350
    %v2352 = vsel %vm2349, %v2351, %v2347
    %v2353 = vmul.f32 1.0, %v2352
    %v2354 = vrcp.pop %v2323
    %v2355 = vmul.f32 %v2323, %v2354
    %v2356 = vsub.f32 1.0, %v2355
    %v2357 = vmul.f32 %v2354, %v2356
    %v2358 = vadd.f32 %v2354, %v2357
    %vm2359 = vweird.f32 %v2323
    %vm2360 = vweird.f32 %v2354
    %vm2361 = vmor %vm2359, %vm2360
    %v2362 = vsel %vm2361, %v2354, %v2358
    %v2363 = vand.u32 2147483647, %v2323
    %vm2364 = vcmp.eq.f32.partialorder %v2363, 8.507059e+37
    %v2365 = vand.u32 %v2323, 2147483648
    %v2366 = vor.u32 1.1754944e-38, %v2365
    %v2367 = vsel %vm2364, %v2366, %v2362
    %v2368 = vmul.f32 1.0, %v2367
    %v2369 = vtanh.pop %v2311
    %v2370 = vmul.f32 %v2353, %v2251
    %v2371 = vmul.f32 %v2338, %v2369
    %v2372 = vadd.f32 %v2370, %v2371
    %v2373 = vtanh.pop %v2372
    %v2374 = vmul.f32 %v2368, %v2373
    %v2375 = vpack.c.bf16 %v2374, %v2374
    %v2376 = vadd.f32 %v2255, %v2374
    %2377 = vmatpush.bf16.msra.mxu0 %v2099
    %2378 = vmatpush.bf16.msra.mxu0 %v2095
    %2379 = vmatpush.bf16.msra.mxu0 %v2091
    %2380 = vmatpush.bf16.msra.mxu0 %v2087
    %2381 = vmatpush.bf16.msra.mxu0 %v2083
    %2382 = vmatpush.bf16.msra.mxu0 %v2079
    %2383 = vmatpush.bf16.msra.mxu0 %v2075
    %2384 = vmatpush.bf16.msra.mxu0 %v2071
    %2385 = vmatmul.bf16.gmra.mxu0 %v2375
    %v2386 = vpop.f32.mrf.mxu0
    %v2387 = vadd.f32 0.0, %v2386
    %v2388 = vpop.f32.mrf.mxu0
    %2389 = vdwg.mxu0
    %2390 = vmatpush.bf16.msra.mxu0 %v2100
    %2391 = vmatpush.bf16.msra.mxu0 %v2096
    %2392 = vmatpush.bf16.msra.mxu0 %v2092
    %2393 = vmatpush.bf16.msra.mxu0 %v2088
    %2394 = vmatpush.bf16.msra.mxu0 %v2084
    %2395 = vmatpush.bf16.msra.mxu0 %v2080
    %2396 = vmatpush.bf16.msra.mxu0 %v2076
    %2397 = vmatpush.bf16.msra.mxu0 %v2072
    %2398 = vmatmul.bf16.gmra.mxu0 %v2375
    %v2399 = vpop.f32.mrf.mxu0
    %v2400 = vadd.f32 0.0, %v2399
    %v2401 = vpop.f32.mrf.mxu0
    %2402 = vdwg.mxu0
    %2403 = vmatpush.bf16.msra.mxu0 %v2101
    %2404 = vmatpush.bf16.msra.mxu0 %v2097
    %2405 = vmatpush.bf16.msra.mxu0 %v2093
    %2406 = vmatpush.bf16.msra.mxu0 %v2089
    %2407 = vmatpush.bf16.msra.mxu0 %v2085
    %2408 = vmatpush.bf16.msra.mxu0 %v2081
    %2409 = vmatpush.bf16.msra.mxu0 %v2077
    %2410 = vmatpush.bf16.msra.mxu0 %v2073
    %2411 = vmatmul.bf16.gmra.mxu0 %v2375
    %v2412 = vpop.f32.mrf.mxu0
    %v2413 = vadd.f32 0.0, %v2412
    %v2414 = vpop.f32.mrf.mxu0
    %2415 = vdwg.mxu0
    %2416 = vmatpush.bf16.msra.mxu0 %v2102
    %2417 = vmatpush.bf16.msra.mxu0 %v2098
    %2418 = vmatpush.bf16.msra.mxu0 %v2094
    %2419 = vmatpush.bf16.msra.mxu0 %v2090
    %2420 = vmatpush.bf16.msra.mxu0 %v2086
    %2421 = vmatpush.bf16.msra.mxu0 %v2082
    %2422 = vmatpush.bf16.msra.mxu0 %v2078
    %2423 = vmatpush.bf16.msra.mxu0 %v2074
    %2424 = vmatmul.bf16.gmra.mxu0 %v2375
    %v2425 = vpop.f32.mrf.mxu0
    %v2426 = vadd.f32 0.0, %v2425
    %v2427 = vpop.f32.mrf.mxu0
    %2428 = vdwg.mxu0
    %v2429 = vadd.f32 %v1842, %v2387
    %v2430 = vadd.f32 %v1871, %v2400
    %v2431 = vadd.f32 %v1900, %v2413
    %v2432 = vadd.f32 %v1929, %v2426
    %v2433 = vxor.u32 %v2429, 2147483648
    %v2434 = vxor.u32 %v2430, 2147483648
    %v2435 = vxor.u32 %v2431, 2147483648
    %v2436 = vmul.f32 %v2433, 1.442695
    %v2437 = vpow.pop %v2436
    %v2438 = vmul.f32 %v2434, 1.442695
    %v2439 = vpow.pop %v2438
    %v2440 = vmul.f32 %v2435, 1.442695
    %v2441 = vpow.pop %v2440
    %v2442 = vadd.f32 %v2437, 1.0
    %v2443 = vadd.f32 %v2439, 1.0
    %v2444 = vadd.f32 %v2441, 1.0
    %v2445 = vrcp.pop %v2442
    %v2446 = vmul.f32 %v2442, %v2445
    %v2447 = vsub.f32 1.0, %v2446
    %v2448 = vmul.f32 %v2445, %v2447
    %v2449 = vadd.f32 %v2445, %v2448
    %vm2450 = vweird.f32 %v2442
    %vm2451 = vweird.f32 %v2445
    %vm2452 = vmor %vm2450, %vm2451
    %v2453 = vsel %vm2452, %v2445, %v2449
    %v2454 = vand.u32 2147483647, %v2442
    %vm2455 = vcmp.eq.f32.partialorder %v2454, 8.507059e+37
    %v2456 = vand.u32 %v2442, 2147483648
    %v2457 = vor.u32 1.1754944e-38, %v2456
    %v2458 = vsel %vm2455, %v2457, %v2453
    %v2459 = vmul.f32 1.0, %v2458
    %v2460 = vrcp.pop %v2443
    %v2461 = vmul.f32 %v2443, %v2460
    %v2462 = vsub.f32 1.0, %v2461
    %v2463 = vmul.f32 %v2460, %v2462
    %v2464 = vadd.f32 %v2460, %v2463
    %vm2465 = vweird.f32 %v2443
    %vm2466 = vweird.f32 %v2460
    %vm2467 = vmor %vm2465, %vm2466
    %v2468 = vsel %vm2467, %v2460, %v2464
    %v2469 = vand.u32 2147483647, %v2443
    %vm2470 = vcmp.eq.f32.partialorder %v2469, 8.507059e+37
    %v2471 = vand.u32 %v2443, 2147483648
    %v2472 = vor.u32 1.1754944e-38, %v2471
    %v2473 = vsel %vm2470, %v2472, %v2468
    %v2474 = vmul.f32 1.0, %v2473
    %v2475 = vrcp.pop %v2444
    %v2476 = vmul.f32 %v2444, %v2475
    %v2477 = vsub.f32 1.0, %v2476
    %v2478 = vmul.f32 %v2475, %v2477
    %v2479 = vadd.f32 %v2475, %v2478
    %vm2480 = vweird.f32 %v2444
    %vm2481 = vweird.f32 %v2475
    %vm2482 = vmor %vm2480, %vm2481
    %v2483 = vsel %vm2482, %v2475, %v2479
    %v2484 = vand.u32 2147483647, %v2444
    %vm2485 = vcmp.eq.f32.partialorder %v2484, 8.507059e+37
    %v2486 = vand.u32 %v2444, 2147483648
    %v2487 = vor.u32 1.1754944e-38, %v2486
    %v2488 = vsel %vm2485, %v2487, %v2483
    %v2489 = vmul.f32 1.0, %v2488
    %v2490 = vtanh.pop %v2432
    %v2491 = vmul.f32 %v2474, %v2372
    %v2492 = vmul.f32 %v2459, %v2490
    %v2493 = vadd.f32 %v2491, %v2492
    %v2494 = vtanh.pop %v2493
    %v2495 = vmul.f32 %v2489, %v2494
    %v2496 = vpack.c.bf16 %v2495, %v2495
    %v2497 = vadd.f32 %v2376, %v2495
    %2498 = vmatpush.bf16.msra.mxu0 %v2099
    %2499 = vmatpush.bf16.msra.mxu0 %v2095
    %2500 = vmatpush.bf16.msra.mxu0 %v2091
    %2501 = vmatpush.bf16.msra.mxu0 %v2087
    %2502 = vmatpush.bf16.msra.mxu0 %v2083
    %2503 = vmatpush.bf16.msra.mxu0 %v2079
    %2504 = vmatpush.bf16.msra.mxu0 %v2075
    %2505 = vmatpush.bf16.msra.mxu0 %v2071
    %2506 = vmatmul.bf16.gmra.mxu0 %v2496
    %v2507 = vpop.f32.mrf.mxu0
    %v2508 = vadd.f32 0.0, %v2507
    %v2509 = vpop.f32.mrf.mxu0
    %2510 = vdwg.mxu0
    %2511 = vmatpush.bf16.msra.mxu0 %v2100
    %2512 = vmatpush.bf16.msra.mxu0 %v2096
    %2513 = vmatpush.bf16.msra.mxu0 %v2092
    %2514 = vmatpush.bf16.msra.mxu0 %v2088
    %2515 = vmatpush.bf16.msra.mxu0 %v2084
    %2516 = vmatpush.bf16.msra.mxu0 %v2080
    %2517 = vmatpush.bf16.msra.mxu0 %v2076
    %2518 = vmatpush.bf16.msra.mxu0 %v2072
    %2519 = vmatmul.bf16.gmra.mxu0 %v2496
    %v2520 = vpop.f32.mrf.mxu0
    %v2521 = vadd.f32 0.0, %v2520
    %v2522 = vpop.f32.mrf.mxu0
    %2523 = vdwg.mxu0
    %2524 = vmatpush.bf16.msra.mxu0 %v2101
    %2525 = vmatpush.bf16.msra.mxu0 %v2097
    %2526 = vmatpush.bf16.msra.mxu0 %v2093
    %2527 = vmatpush.bf16.msra.mxu0 %v2089
    %2528 = vmatpush.bf16.msra.mxu0 %v2085
    %2529 = vmatpush.bf16.msra.mxu0 %v2081
    %2530 = vmatpush.bf16.msra.mxu0 %v2077
    %2531 = vmatpush.bf16.msra.mxu0 %v2073
    %2532 = vmatmul.bf16.gmra.mxu0 %v2496
    %v2533 = vpop.f32.mrf.mxu0
    %v2534 = vadd.f32 0.0, %v2533
    %v2535 = vpop.f32.mrf.mxu0
    %2536 = vdwg.mxu0
    %2537 = vmatpush.bf16.msra.mxu0 %v2102
    %2538 = vmatpush.bf16.msra.mxu0 %v2098
    %2539 = vmatpush.bf16.msra.mxu0 %v2094
    %2540 = vmatpush.bf16.msra.mxu0 %v2090
    %2541 = vmatpush.bf16.msra.mxu0 %v2086
    %2542 = vmatpush.bf16.msra.mxu0 %v2082
    %2543 = vmatpush.bf16.msra.mxu0 %v2078
    %2544 = vmatpush.bf16.msra.mxu0 %v2074
    %2545 = vmatmul.bf16.gmra.mxu0 %v2496
    %v2546 = vpop.f32.mrf.mxu0
    %v2547 = vadd.f32 0.0, %v2546
    %v2548 = vpop.f32.mrf.mxu0
    %2549 = vdwg.mxu0
    %v2550 = vadd.f32 %v1844, %v2508
    %v2551 = vadd.f32 %v1873, %v2521
    %v2552 = vadd.f32 %v1902, %v2534
    %v2553 = vadd.f32 %v1931, %v2547
    %v2554 = vxor.u32 %v2550, 2147483648
    %v2555 = vxor.u32 %v2551, 2147483648
    %v2556 = vxor.u32 %v2552, 2147483648
    %v2557 = vmul.f32 %v2554, 1.442695
    %v2558 = vpow.pop %v2557
    %v2559 = vmul.f32 %v2555, 1.442695
    %v2560 = vpow.pop %v2559
    %v2561 = vmul.f32 %v2556, 1.442695
    %v2562 = vpow.pop %v2561
    %v2563 = vadd.f32 %v2558, 1.0
    %v2564 = vadd.f32 %v2560, 1.0
    %v2565 = vadd.f32 %v2562, 1.0
    %v2566 = vrcp.pop %v2563
    %v2567 = vmul.f32 %v2563, %v2566
    %v2568 = vsub.f32 1.0, %v2567
    %v2569 = vmul.f32 %v2566, %v2568
    %v2570 = vadd.f32 %v2566, %v2569
    %vm2571 = vweird.f32 %v2563
    %vm2572 = vweird.f32 %v2566
    %vm2573 = vmor %vm2571, %vm2572
    %v2574 = vsel %vm2573, %v2566, %v2570
    %v2575 = vand.u32 2147483647, %v2563
    %vm2576 = vcmp.eq.f32.partialorder %v2575, 8.507059e+37
    %v2577 = vand.u32 %v2563, 2147483648
    %v2578 = vor.u32 1.1754944e-38, %v2577
    %v2579 = vsel %vm2576, %v2578, %v2574
    %v2580 = vmul.f32 1.0, %v2579
    %v2581 = vrcp.pop %v2564
    %v2582 = vmul.f32 %v2564, %v2581
    %v2583 = vsub.f32 1.0, %v2582
    %v2584 = vmul.f32 %v2581, %v2583
    %v2585 = vadd.f32 %v2581, %v2584
    %vm2586 = vweird.f32 %v2564
    %vm2587 = vweird.f32 %v2581
    %vm2588 = vmor %vm2586, %vm2587
    %v2589 = vsel %vm2588, %v2581, %v2585
    %v2590 = vand.u32 2147483647, %v2564
    %vm2591 = vcmp.eq.f32.partialorder %v2590, 8.507059e+37
    %v2592 = vand.u32 %v2564, 2147483648
    %v2593 = vor.u32 1.1754944e-38, %v2592
    %v2594 = vsel %vm2591, %v2593, %v2589
    %v2595 = vmul.f32 1.0, %v2594
    %v2596 = vrcp.pop %v2565
    %v2597 = vmul.f32 %v2565, %v2596
    %v2598 = vsub.f32 1.0, %v2597
    %v2599 = vmul.f32 %v2596, %v2598
    %v2600 = vadd.f32 %v2596, %v2599
    %vm2601 = vweird.f32 %v2565
    %vm2602 = vweird.f32 %v2596
    %vm2603 = vmor %vm2601, %vm2602
    %v2604 = vsel %vm2603, %v2596, %v2600
    %v2605 = vand.u32 2147483647, %v2565
    %vm2606 = vcmp.eq.f32.partialorder %v2605, 8.507059e+37
    %v2607 = vand.u32 %v2565, 2147483648
    %v2608 = vor.u32 1.1754944e-38, %v2607
    %v2609 = vsel %vm2606, %v2608, %v2604
    %v2610 = vmul.f32 1.0, %v2609
    %v2611 = vtanh.pop %v2553
    %v2612 = vmul.f32 %v2595, %v2493
    %v2613 = vmul.f32 %v2580, %v2611
    %v2614 = vadd.f32 %v2612, %v2613
    %v2615 = vtanh.pop %v2614
    %v2616 = vmul.f32 %v2610, %v2615
    %v2617 = vpack.c.bf16 %v2616, %v2616
    %v2618 = vadd.f32 %v2497, %v2616
    %2619 = vmatpush.bf16.msra.mxu0 %v2099
    %2620 = vmatpush.bf16.msra.mxu0 %v2095
    %2621 = vmatpush.bf16.msra.mxu0 %v2091
    %2622 = vmatpush.bf16.msra.mxu0 %v2087
    %2623 = vmatpush.bf16.msra.mxu0 %v2083
    %2624 = vmatpush.bf16.msra.mxu0 %v2079
    %2625 = vmatpush.bf16.msra.mxu0 %v2075
    %2626 = vmatpush.bf16.msra.mxu0 %v2071
    %2627 = vmatmul.bf16.gmra.mxu0 %v2617
    %v2628 = vpop.f32.mrf.mxu0
    %v2629 = vadd.f32 0.0, %v2628
    %v2630 = vpop.f32.mrf.mxu0
    %2631 = vdwg.mxu0
    %2632 = vmatpush.bf16.msra.mxu0 %v2100
    %2633 = vmatpush.bf16.msra.mxu0 %v2096
    %2634 = vmatpush.bf16.msra.mxu0 %v2092
    %2635 = vmatpush.bf16.msra.mxu0 %v2088
    %2636 = vmatpush.bf16.msra.mxu0 %v2084
    %2637 = vmatpush.bf16.msra.mxu0 %v2080
    %2638 = vmatpush.bf16.msra.mxu0 %v2076
    %2639 = vmatpush.bf16.msra.mxu0 %v2072
    %2640 = vmatmul.bf16.gmra.mxu0 %v2617
    %v2641 = vpop.f32.mrf.mxu0
    %v2642 = vadd.f32 0.0, %v2641
    %v2643 = vpop.f32.mrf.mxu0
    %2644 = vdwg.mxu0
    %2645 = vmatpush.bf16.msra.mxu0 %v2101
    %2646 = vmatpush.bf16.msra.mxu0 %v2097
    %2647 = vmatpush.bf16.msra.mxu0 %v2093
    %2648 = vmatpush.bf16.msra.mxu0 %v2089
    %2649 = vmatpush.bf16.msra.mxu0 %v2085
    %2650 = vmatpush.bf16.msra.mxu0 %v2081
    %2651 = vmatpush.bf16.msra.mxu0 %v2077
    %2652 = vmatpush.bf16.msra.mxu0 %v2073
    %2653 = vmatmul.bf16.gmra.mxu0 %v2617
    %v2654 = vpop.f32.mrf.mxu0
    %v2655 = vadd.f32 0.0, %v2654
    %v2656 = vpop.f32.mrf.mxu0
    %2657 = vdwg.mxu0
    %2658 = vmatpush.bf16.msra.mxu0 %v2102
    %2659 = vmatpush.bf16.msra.mxu0 %v2098
    %2660 = vmatpush.bf16.msra.mxu0 %v2094
    %2661 = vmatpush.bf16.msra.mxu0 %v2090
    %2662 = vmatpush.bf16.msra.mxu0 %v2086
    %2663 = vmatpush.bf16.msra.mxu0 %v2082
    %2664 = vmatpush.bf16.msra.mxu0 %v2078
    %2665 = vmatpush.bf16.msra.mxu0 %v2074
    %2666 = vmatmul.bf16.gmra.mxu0 %v2617
    %v2667 = vpop.f32.mrf.mxu0
    %v2668 = vadd.f32 0.0, %v2667
    %v2669 = vpop.f32.mrf.mxu0
    %2670 = vdwg.mxu0
    %v2671 = vadd.f32 %v1847, %v2629
    %v2672 = vadd.f32 %v1876, %v2642
    %v2673 = vadd.f32 %v1905, %v2655
    %v2674 = vadd.f32 %v1934, %v2668
    %v2675 = vxor.u32 %v2671, 2147483648
    %v2676 = vxor.u32 %v2672, 2147483648
    %v2677 = vxor.u32 %v2673, 2147483648
    %v2678 = vmul.f32 %v2675, 1.442695
    %v2679 = vpow.pop %v2678
    %v2680 = vmul.f32 %v2676, 1.442695
    %v2681 = vpow.pop %v2680
    %v2682 = vmul.f32 %v2677, 1.442695
    %v2683 = vpow.pop %v2682
    %v2684 = vadd.f32 %v2679, 1.0
    %v2685 = vadd.f32 %v2681, 1.0
    %v2686 = vadd.f32 %v2683, 1.0
    %v2687 = vrcp.pop %v2684
    %v2688 = vmul.f32 %v2684, %v2687
    %v2689 = vsub.f32 1.0, %v2688
    %v2690 = vmul.f32 %v2687, %v2689
    %v2691 = vadd.f32 %v2687, %v2690
    %vm2692 = vweird.f32 %v2684
    %vm2693 = vweird.f32 %v2687
    %vm2694 = vmor %vm2692, %vm2693
    %v2695 = vsel %vm2694, %v2687, %v2691
    %v2696 = vand.u32 2147483647, %v2684
    %vm2697 = vcmp.eq.f32.partialorder %v2696, 8.507059e+37
    %v2698 = vand.u32 %v2684, 2147483648
    %v2699 = vor.u32 1.1754944e-38, %v2698
    %v2700 = vsel %vm2697, %v2699, %v2695
    %v2701 = vmul.f32 1.0, %v2700
    %v2702 = vrcp.pop %v2685
    %v2703 = vmul.f32 %v2685, %v2702
    %v2704 = vsub.f32 1.0, %v2703
    %v2705 = vmul.f32 %v2702, %v2704
    %v2706 = vadd.f32 %v2702, %v2705
    %vm2707 = vweird.f32 %v2685
    %vm2708 = vweird.f32 %v2702
    %vm2709 = vmor %vm2707, %vm2708
    %v2710 = vsel %vm2709, %v2702, %v2706
    %v2711 = vand.u32 2147483647, %v2685
    %vm2712 = vcmp.eq.f32.partialorder %v2711, 8.507059e+37
    %v2713 = vand.u32 %v2685, 2147483648
    %v2714 = vor.u32 1.1754944e-38, %v2713
    %v2715 = vsel %vm2712, %v2714, %v2710
    %v2716 = vmul.f32 1.0, %v2715
    %v2717 = vrcp.pop %v2686
    %v2718 = vmul.f32 %v2686, %v2717
    %v2719 = vsub.f32 1.0, %v2718
    %v2720 = vmul.f32 %v2717, %v2719
    %v2721 = vadd.f32 %v2717, %v2720
    %vm2722 = vweird.f32 %v2686
    %vm2723 = vweird.f32 %v2717
    %vm2724 = vmor %vm2722, %vm2723
    %v2725 = vsel %vm2724, %v2717, %v2721
    %v2726 = vand.u32 2147483647, %v2686
    %vm2727 = vcmp.eq.f32.partialorder %v2726, 8.507059e+37
    %v2728 = vand.u32 %v2686, 2147483648
    %v2729 = vor.u32 1.1754944e-38, %v2728
    %v2730 = vsel %vm2727, %v2729, %v2725
    %v2731 = vmul.f32 1.0, %v2730
    %v2732 = vtanh.pop %v2674
    %v2733 = vmul.f32 %v2716, %v2614
    %v2734 = vmul.f32 %v2701, %v2732
    %v2735 = vadd.f32 %v2733, %v2734
    %v2736 = vtanh.pop %v2735
    %v2737 = vmul.f32 %v2731, %v2736
    %v2738 = vpack.c.bf16 %v2737, %v2737
    %v2739 = vadd.f32 %v2618, %v2737
    %2740 = vmatpush.bf16.msra.mxu0 %v2099
    %2741 = vmatpush.bf16.msra.mxu0 %v2095
    %2742 = vmatpush.bf16.msra.mxu0 %v2091
    %2743 = vmatpush.bf16.msra.mxu0 %v2087
    %2744 = vmatpush.bf16.msra.mxu0 %v2083
    %2745 = vmatpush.bf16.msra.mxu0 %v2079
    %2746 = vmatpush.bf16.msra.mxu0 %v2075
    %2747 = vmatpush.bf16.msra.mxu0 %v2071
    %2748 = vmatmul.bf16.gmra.mxu0 %v2738
    %v2749 = vpop.f32.mrf.mxu0
    %v2750 = vadd.f32 0.0, %v2749
    %v2751 = vpop.f32.mrf.mxu0
    %2752 = vdwg.mxu0
    %2753 = vmatpush.bf16.msra.mxu0 %v2100
    %2754 = vmatpush.bf16.msra.mxu0 %v2096
    %2755 = vmatpush.bf16.msra.mxu0 %v2092
    %2756 = vmatpush.bf16.msra.mxu0 %v2088
    %2757 = vmatpush.bf16.msra.mxu0 %v2084
    %2758 = vmatpush.bf16.msra.mxu0 %v2080
    %2759 = vmatpush.bf16.msra.mxu0 %v2076
    %2760 = vmatpush.bf16.msra.mxu0 %v2072
    %2761 = vmatmul.bf16.gmra.mxu0 %v2738
    %v2762 = vpop.f32.mrf.mxu0
    %v2763 = vadd.f32 0.0, %v2762
    %v2764 = vpop.f32.mrf.mxu0
    %2765 = vdwg.mxu0
    %2766 = vmatpush.bf16.msra.mxu0 %v2101
    %2767 = vmatpush.bf16.msra.mxu0 %v2097
    %2768 = vmatpush.bf16.msra.mxu0 %v2093
    %2769 = vmatpush.bf16.msra.mxu0 %v2089
    %2770 = vmatpush.bf16.msra.mxu0 %v2085
    %2771 = vmatpush.bf16.msra.mxu0 %v2081
    %2772 = vmatpush.bf16.msra.mxu0 %v2077
    %2773 = vmatpush.bf16.msra.mxu0 %v2073
    %2774 = vmatmul.bf16.gmra.mxu0 %v2738
    %v2775 = vpop.f32.mrf.mxu0
    %v2776 = vadd.f32 0.0, %v2775
    %v2777 = vpop.f32.mrf.mxu0
    %2778 = vdwg.mxu0
    %2779 = vmatpush.bf16.msra.mxu0 %v2102
    %2780 = vmatpush.bf16.msra.mxu0 %v2098
    %2781 = vmatpush.bf16.msra.mxu0 %v2094
    %2782 = vmatpush.bf16.msra.mxu0 %v2090
    %2783 = vmatpush.bf16.msra.mxu0 %v2086
    %2784 = vmatpush.bf16.msra.mxu0 %v2082
    %2785 = vmatpush.bf16.msra.mxu0 %v2078
    %2786 = vmatpush.bf16.msra.mxu0 %v2074
    %2787 = vmatmul.bf16.gmra.mxu0 %v2738
    %v2788 = vpop.f32.mrf.mxu0
    %v2789 = vadd.f32 0.0, %v2788
    %v2790 = vpop.f32.mrf.mxu0
    %2791 = vdwg.mxu0
    %v2792 = vadd.f32 %v1849, %v2750
    %v2793 = vadd.f32 %v1878, %v2763
    %v2794 = vadd.f32 %v1907, %v2776
    %v2795 = vadd.f32 %v1936, %v2789
    %v2796 = vxor.u32 %v2792, 2147483648
    %v2797 = vxor.u32 %v2793, 2147483648
    %v2798 = vxor.u32 %v2794, 2147483648
    %v2799 = vmul.f32 %v2796, 1.442695
    %v2800 = vpow.pop %v2799
    %v2801 = vmul.f32 %v2797, 1.442695
    %v2802 = vpow.pop %v2801
    %v2803 = vmul.f32 %v2798, 1.442695
    %v2804 = vpow.pop %v2803
    %v2805 = vadd.f32 %v2800, 1.0
    %v2806 = vadd.f32 %v2802, 1.0
    %v2807 = vadd.f32 %v2804, 1.0
    %v2808 = vrcp.pop %v2805
    %v2809 = vmul.f32 %v2805, %v2808
    %v2810 = vsub.f32 1.0, %v2809
    %v2811 = vmul.f32 %v2808, %v2810
    %v2812 = vadd.f32 %v2808, %v2811
    %vm2813 = vweird.f32 %v2805
    %vm2814 = vweird.f32 %v2808
    %vm2815 = vmor %vm2813, %vm2814
    %v2816 = vsel %vm2815, %v2808, %v2812
    %v2817 = vand.u32 2147483647, %v2805
    %vm2818 = vcmp.eq.f32.partialorder %v2817, 8.507059e+37
    %v2819 = vand.u32 %v2805, 2147483648
    %v2820 = vor.u32 1.1754944e-38, %v2819
    %v2821 = vsel %vm2818, %v2820, %v2816
    %v2822 = vmul.f32 1.0, %v2821
    %v2823 = vrcp.pop %v2806
    %v2824 = vmul.f32 %v2806, %v2823
    %v2825 = vsub.f32 1.0, %v2824
    %v2826 = vmul.f32 %v2823, %v2825
    %v2827 = vadd.f32 %v2823, %v2826
    %vm2828 = vweird.f32 %v2806
    %vm2829 = vweird.f32 %v2823
    %vm2830 = vmor %vm2828, %vm2829
    %v2831 = vsel %vm2830, %v2823, %v2827
    %v2832 = vand.u32 2147483647, %v2806
    %vm2833 = vcmp.eq.f32.partialorder %v2832, 8.507059e+37
    %v2834 = vand.u32 %v2806, 2147483648
    %v2835 = vor.u32 1.1754944e-38, %v2834
    %v2836 = vsel %vm2833, %v2835, %v2831
    %v2837 = vmul.f32 1.0, %v2836
    %v2838 = vrcp.pop %v2807
    %v2839 = vmul.f32 %v2807, %v2838
    %v2840 = vsub.f32 1.0, %v2839
    %v2841 = vmul.f32 %v2838, %v2840
    %v2842 = vadd.f32 %v2838, %v2841
    %vm2843 = vweird.f32 %v2807
    %vm2844 = vweird.f32 %v2838
    %vm2845 = vmor %vm2843, %vm2844
    %v2846 = vsel %vm2845, %v2838, %v2842
    %v2847 = vand.u32 2147483647, %v2807
    %vm2848 = vcmp.eq.f32.partialorder %v2847, 8.507059e+37
    %v2849 = vand.u32 %v2807, 2147483648
    %v2850 = vor.u32 1.1754944e-38, %v2849
    %v2851 = vsel %vm2848, %v2850, %v2846
    %v2852 = vmul.f32 1.0, %v2851
    %v2853 = vtanh.pop %v2795
    %v2854 = vmul.f32 %v2837, %v2735
    %v2855 = vmul.f32 %v2822, %v2853
    %v2856 = vadd.f32 %v2854, %v2855
    %v2857 = vtanh.pop %v2856
    %v2858 = vmul.f32 %v2852, %v2857
    %v2859 = vpack.c.bf16 %v2858, %v2858
    %v2860 = vadd.f32 %v2739, %v2858
    %2861 = vmatpush.bf16.msra.mxu0 %v2099
    %2862 = vmatpush.bf16.msra.mxu0 %v2095
    %2863 = vmatpush.bf16.msra.mxu0 %v2091
    %2864 = vmatpush.bf16.msra.mxu0 %v2087
    %2865 = vmatpush.bf16.msra.mxu0 %v2083
    %2866 = vmatpush.bf16.msra.mxu0 %v2079
    %2867 = vmatpush.bf16.msra.mxu0 %v2075
    %2868 = vmatpush.bf16.msra.mxu0 %v2071
    %2869 = vmatmul.bf16.gmra.mxu0 %v2859
    %v2870 = vpop.f32.mrf.mxu0
    %v2871 = vadd.f32 0.0, %v2870
    %v2872 = vpop.f32.mrf.mxu0
    %2873 = vdwg.mxu0
    %2874 = vmatpush.bf16.msra.mxu0 %v2100
    %2875 = vmatpush.bf16.msra.mxu0 %v2096
    %2876 = vmatpush.bf16.msra.mxu0 %v2092
    %2877 = vmatpush.bf16.msra.mxu0 %v2088
    %2878 = vmatpush.bf16.msra.mxu0 %v2084
    %2879 = vmatpush.bf16.msra.mxu0 %v2080
    %2880 = vmatpush.bf16.msra.mxu0 %v2076
    %2881 = vmatpush.bf16.msra.mxu0 %v2072
    %2882 = vmatmul.bf16.gmra.mxu0 %v2859
    %v2883 = vpop.f32.mrf.mxu0
    %v2884 = vadd.f32 0.0, %v2883
    %v2885 = vpop.f32.mrf.mxu0
    %2886 = vdwg.mxu0
    %2887 = vmatpush.bf16.msra.mxu0 %v2101
    %2888 = vmatpush.bf16.msra.mxu0 %v2097
    %2889 = vmatpush.bf16.msra.mxu0 %v2093
    %2890 = vmatpush.bf16.msra.mxu0 %v2089
    %2891 = vmatpush.bf16.msra.mxu0 %v2085
    %2892 = vmatpush.bf16.msra.mxu0 %v2081
    %2893 = vmatpush.bf16.msra.mxu0 %v2077
    %2894 = vmatpush.bf16.msra.mxu0 %v2073
    %2895 = vmatmul.bf16.gmra.mxu0 %v2859
    %v2896 = vpop.f32.mrf.mxu0
    %v2897 = vadd.f32 0.0, %v2896
    %v2898 = vpop.f32.mrf.mxu0
    %2899 = vdwg.mxu0
    %2900 = vmatpush.bf16.msra.mxu0 %v2102
    %2901 = vmatpush.bf16.msra.mxu0 %v2098
    %2902 = vmatpush.bf16.msra.mxu0 %v2094
    %2903 = vmatpush.bf16.msra.mxu0 %v2090
    %2904 = vmatpush.bf16.msra.mxu0 %v2086
    %2905 = vmatpush.bf16.msra.mxu0 %v2082
    %2906 = vmatpush.bf16.msra.mxu0 %v2078
    %2907 = vmatpush.bf16.msra.mxu0 %v2074
    %2908 = vmatmul.bf16.gmra.mxu0 %v2859
    %v2909 = vpop.f32.mrf.mxu0
    %v2910 = vadd.f32 0.0, %v2909
    %v2911 = vpop.f32.mrf.mxu0
    %2912 = vdwg.mxu0
    %v2913 = vadd.f32 %v1852, %v2871
    %v2914 = vadd.f32 %v1881, %v2884
    %v2915 = vadd.f32 %v1910, %v2897
    %v2916 = vadd.f32 %v1939, %v2910
    %v2917 = vxor.u32 %v2913, 2147483648
    %v2918 = vxor.u32 %v2914, 2147483648
    %v2919 = vxor.u32 %v2915, 2147483648
    %v2920 = vmul.f32 %v2917, 1.442695
    %v2921 = vpow.pop %v2920
    %v2922 = vmul.f32 %v2918, 1.442695
    %v2923 = vpow.pop %v2922
    %v2924 = vmul.f32 %v2919, 1.442695
    %v2925 = vpow.pop %v2924
    %v2926 = vadd.f32 %v2921, 1.0
    %v2927 = vadd.f32 %v2923, 1.0
    %v2928 = vadd.f32 %v2925, 1.0
    %v2929 = vrcp.pop %v2926
    %v2930 = vmul.f32 %v2926, %v2929
    %v2931 = vsub.f32 1.0, %v2930
    %v2932 = vmul.f32 %v2929, %v2931
    %v2933 = vadd.f32 %v2929, %v2932
    %vm2934 = vweird.f32 %v2926
    %vm2935 = vweird.f32 %v2929
    %vm2936 = vmor %vm2934, %vm2935
    %v2937 = vsel %vm2936, %v2929, %v2933
    %v2938 = vand.u32 2147483647, %v2926
    %vm2939 = vcmp.eq.f32.partialorder %v2938, 8.507059e+37
    %v2940 = vand.u32 %v2926, 2147483648
    %v2941 = vor.u32 1.1754944e-38, %v2940
    %v2942 = vsel %vm2939, %v2941, %v2937
    %v2943 = vmul.f32 1.0, %v2942
    %v2944 = vrcp.pop %v2927
    %v2945 = vmul.f32 %v2927, %v2944
    %v2946 = vsub.f32 1.0, %v2945
    %v2947 = vmul.f32 %v2944, %v2946
    %v2948 = vadd.f32 %v2944, %v2947
    %vm2949 = vweird.f32 %v2927
    %vm2950 = vweird.f32 %v2944
    %vm2951 = vmor %vm2949, %vm2950
    %v2952 = vsel %vm2951, %v2944, %v2948
    %v2953 = vand.u32 2147483647, %v2927
    %vm2954 = vcmp.eq.f32.partialorder %v2953, 8.507059e+37
    %v2955 = vand.u32 %v2927, 2147483648
    %v2956 = vor.u32 1.1754944e-38, %v2955
    %v2957 = vsel %vm2954, %v2956, %v2952
    %v2958 = vmul.f32 1.0, %v2957
    %v2959 = vrcp.pop %v2928
    %v2960 = vmul.f32 %v2928, %v2959
    %v2961 = vsub.f32 1.0, %v2960
    %v2962 = vmul.f32 %v2959, %v2961
    %v2963 = vadd.f32 %v2959, %v2962
    %vm2964 = vweird.f32 %v2928
    %vm2965 = vweird.f32 %v2959
    %vm2966 = vmor %vm2964, %vm2965
    %v2967 = vsel %vm2966, %v2959, %v2963
    %v2968 = vand.u32 2147483647, %v2928
    %vm2969 = vcmp.eq.f32.partialorder %v2968, 8.507059e+37
    %v2970 = vand.u32 %v2928, 2147483648
    %v2971 = vor.u32 1.1754944e-38, %v2970
    %v2972 = vsel %vm2969, %v2971, %v2967
    %v2973 = vmul.f32 1.0, %v2972
    %v2974 = vtanh.pop %v2916
    %v2975 = vmul.f32 %v2958, %v2856
    %v2976 = vmul.f32 %v2943, %v2974
    %v2977 = vadd.f32 %v2975, %v2976
    %v2978 = vtanh.pop %v2977
    %v2979 = vmul.f32 %v2973, %v2978
    %v2980 = vpack.c.bf16 %v2979, %v2979
    %v2981 = vadd.f32 %v2860, %v2979
    %2982 = vmatpush.bf16.msra.mxu0 %v2099
    %2983 = vmatpush.bf16.msra.mxu0 %v2095
    %2984 = vmatpush.bf16.msra.mxu0 %v2091
    %2985 = vmatpush.bf16.msra.mxu0 %v2087
    %2986 = vmatpush.bf16.msra.mxu0 %v2083
    %2987 = vmatpush.bf16.msra.mxu0 %v2079
    %2988 = vmatpush.bf16.msra.mxu0 %v2075
    %2989 = vmatpush.bf16.msra.mxu0 %v2071
    %2990 = vmatmul.bf16.gmra.mxu0 %v2980
    %v2991 = vpop.f32.mrf.mxu0
    %v2992 = vadd.f32 0.0, %v2991
    %v2993 = vpop.f32.mrf.mxu0
    %2994 = vdwg.mxu0
    %2995 = vmatpush.bf16.msra.mxu0 %v2100
    %2996 = vmatpush.bf16.msra.mxu0 %v2096
    %2997 = vmatpush.bf16.msra.mxu0 %v2092
    %2998 = vmatpush.bf16.msra.mxu0 %v2088
    %2999 = vmatpush.bf16.msra.mxu0 %v2084
    %3000 = vmatpush.bf16.msra.mxu0 %v2080
    %3001 = vmatpush.bf16.msra.mxu0 %v2076
    %3002 = vmatpush.bf16.msra.mxu0 %v2072
    %3003 = vmatmul.bf16.gmra.mxu0 %v2980
    %v3004 = vpop.f32.mrf.mxu0
    %v3005 = vadd.f32 0.0, %v3004
    %v3006 = vpop.f32.mrf.mxu0
    %3007 = vdwg.mxu0
    %3008 = vmatpush.bf16.msra.mxu0 %v2101
    %3009 = vmatpush.bf16.msra.mxu0 %v2097
    %3010 = vmatpush.bf16.msra.mxu0 %v2093
    %3011 = vmatpush.bf16.msra.mxu0 %v2089
    %3012 = vmatpush.bf16.msra.mxu0 %v2085
    %3013 = vmatpush.bf16.msra.mxu0 %v2081
    %3014 = vmatpush.bf16.msra.mxu0 %v2077
    %3015 = vmatpush.bf16.msra.mxu0 %v2073
    %3016 = vmatmul.bf16.gmra.mxu0 %v2980
    %v3017 = vpop.f32.mrf.mxu0
    %v3018 = vadd.f32 0.0, %v3017
    %v3019 = vpop.f32.mrf.mxu0
    %3020 = vdwg.mxu0
    %3021 = vmatpush.bf16.msra.mxu0 %v2102
    %3022 = vmatpush.bf16.msra.mxu0 %v2098
    %3023 = vmatpush.bf16.msra.mxu0 %v2094
    %3024 = vmatpush.bf16.msra.mxu0 %v2090
    %3025 = vmatpush.bf16.msra.mxu0 %v2086
    %3026 = vmatpush.bf16.msra.mxu0 %v2082
    %3027 = vmatpush.bf16.msra.mxu0 %v2078
    %3028 = vmatpush.bf16.msra.mxu0 %v2074
    %3029 = vmatmul.bf16.gmra.mxu0 %v2980
    %v3030 = vpop.f32.mrf.mxu0
    %v3031 = vadd.f32 0.0, %v3030
    %v3032 = vpop.f32.mrf.mxu0
    %3033 = vdwg.mxu0
    %v3034 = vadd.f32 %v1854, %v2992
    %v3035 = vadd.f32 %v1883, %v3005
    %v3036 = vadd.f32 %v1912, %v3018
    %v3037 = vadd.f32 %v1941, %v3031
    %v3038 = vxor.u32 %v3034, 2147483648
    %v3039 = vxor.u32 %v3035, 2147483648
    %v3040 = vxor.u32 %v3036, 2147483648
    %v3041 = vmul.f32 %v3038, 1.442695
    %v3042 = vpow.pop %v3041
    %v3043 = vmul.f32 %v3039, 1.442695
    %v3044 = vpow.pop %v3043
    %v3045 = vmul.f32 %v3040, 1.442695
    %v3046 = vpow.pop %v3045
    %v3047 = vadd.f32 %v3042, 1.0
    %v3048 = vadd.f32 %v3044, 1.0
    %v3049 = vadd.f32 %v3046, 1.0
    %v3050 = vrcp.pop %v3047
    %v3051 = vmul.f32 %v3047, %v3050
    %v3052 = vsub.f32 1.0, %v3051
    %v3053 = vmul.f32 %v3050, %v3052
    %v3054 = vadd.f32 %v3050, %v3053
    %vm3055 = vweird.f32 %v3047
    %vm3056 = vweird.f32 %v3050
    %vm3057 = vmor %vm3055, %vm3056
    %v3058 = vsel %vm3057, %v3050, %v3054
    %v3059 = vand.u32 2147483647, %v3047
    %vm3060 = vcmp.eq.f32.partialorder %v3059, 8.507059e+37
    %v3061 = vand.u32 %v3047, 2147483648
    %v3062 = vor.u32 1.1754944e-38, %v3061
    %v3063 = vsel %vm3060, %v3062, %v3058
    %v3064 = vmul.f32 1.0, %v3063
    %v3065 = vrcp.pop %v3048
    %v3066 = vmul.f32 %v3048, %v3065
    %v3067 = vsub.f32 1.0, %v3066
    %v3068 = vmul.f32 %v3065, %v3067
    %v3069 = vadd.f32 %v3065, %v3068
    %vm3070 = vweird.f32 %v3048
    %vm3071 = vweird.f32 %v3065
    %vm3072 = vmor %vm3070, %vm3071
    %v3073 = vsel %vm3072, %v3065, %v3069
    %v3074 = vand.u32 2147483647, %v3048
    %vm3075 = vcmp.eq.f32.partialorder %v3074, 8.507059e+37
    %v3076 = vand.u32 %v3048, 2147483648
    %v3077 = vor.u32 1.1754944e-38, %v3076
    %v3078 = vsel %vm3075, %v3077, %v3073
    %v3079 = vmul.f32 1.0, %v3078
    %v3080 = vrcp.pop %v3049
    %v3081 = vmul.f32 %v3049, %v3080
    %v3082 = vsub.f32 1.0, %v3081
    %v3083 = vmul.f32 %v3080, %v3082
    %v3084 = vadd.f32 %v3080, %v3083
    %vm3085 = vweird.f32 %v3049
    %vm3086 = vweird.f32 %v3080
    %vm3087 = vmor %vm3085, %vm3086
    %v3088 = vsel %vm3087, %v3080, %v3084
    %v3089 = vand.u32 2147483647, %v3049
    %vm3090 = vcmp.eq.f32.partialorder %v3089, 8.507059e+37
    %v3091 = vand.u32 %v3049, 2147483648
    %v3092 = vor.u32 1.1754944e-38, %v3091
    %v3093 = vsel %vm3090, %v3092, %v3088
    %v3094 = vmul.f32 1.0, %v3093
    %v3095 = vtanh.pop %v3037
    %v3096 = vmul.f32 %v3079, %v2977
    %v3097 = vmul.f32 %v3064, %v3095
    %v3098 = vadd.f32 %v3096, %v3097
    %v3099 = vtanh.pop %v3098
    %v3100 = vmul.f32 %v3094, %v3099
    %v3101 = vadd.f32 %v2981, %v3100
    %v3102 = vpack.c.bf16 %v3101, %v3101
    %v3103 = vld [vmem:[%s7] sm:$0xf]
    %v3104 = vld [vmem:[%s7 + $0x4] sm:$0xf]
    %v3105 = vld [vmem:[%s7 + $0x8] sm:$0xf]
    %v3106 = vld [vmem:[%s7 + $0xc] sm:$0xf]
    %v3107 = vld [vmem:[%s7 + $0x10] sm:$0xf]
    %v3108 = vld [vmem:[%s7 + $0x14] sm:$0xf]
    %v3109 = vld [vmem:[%s7 + $0x18] sm:$0xf]
    %v3110 = vld [vmem:[%s7 + $0x1c] sm:$0xf]
    %v3111 = vld [vmem:[%s7 + $0x20] sm:$0xf]
    %v3112 = vld [vmem:[%s7 + $0x24] sm:$0xf]
    %v3113 = vld [vmem:[%s7 + $0x28] sm:$0xf]
    %v3114 = vld [vmem:[%s7 + $0x2c] sm:$0xf]
    %v3115 = vld [vmem:[%s7 + $0x30] sm:$0xf]
    %v3116 = vld [vmem:[%s7 + $0x34] sm:$0xf]
    %v3117 = vld [vmem:[%s7 + $0x38] sm:$0xf]
    %v3118 = vld [vmem:[%s7 + $0x3c] sm:$0xf]
    %v3119 = vld [vmem:[%s8] sm:$0x1]
    %v3121 = vperm.slane %v3119, 0
    %v3139 = vunpack.c.l.b16 %v3103
    %v3140 = vunpack.c.l.b16 %v3104
    %v3141 = vunpack.c.l.b16 %v3105
    %v3142 = vunpack.c.l.b16 %v3106
    %v3143 = vunpack.c.l.b16 %v3107
    %v3144 = vunpack.c.l.b16 %v3108
    %v3145 = vunpack.c.l.b16 %v3109
    %v3146 = vunpack.c.l.b16 %v3110
    %v3147 = vunpack.c.l.b16 %v3111
    %v3148 = vunpack.c.l.b16 %v3112
    %v3149 = vunpack.c.l.b16 %v3113
    %v3150 = vunpack.c.l.b16 %v3114
    %v3151 = vunpack.c.l.b16 %v3115
    %v3152 = vunpack.c.l.b16 %v3116
    %v3153 = vunpack.c.l.b16 %v3117
    %v3154 = vunpack.c.l.b16 %v3118
    %v3155 = vpack.c.b16 %v3140, %v3139
    %v3156 = vpack.c.b16 %v3142, %v3141
    %v3157 = vpack.c.b16 %v3144, %v3143
    %v3158 = vpack.c.b16 %v3146, %v3145
    %v3159 = vpack.c.b16 %v3148, %v3147
    %v3160 = vpack.c.b16 %v3150, %v3149
    %v3161 = vpack.c.b16 %v3152, %v3151
    %v3162 = vpack.c.b16 %v3154, %v3153
    %3171 = vmatpush.bf16.msra.mxu0 %v3162
    %3172 = vmatpush.bf16.msra.mxu0 %v3161
    %3173 = vmatpush.bf16.msra.mxu0 %v3160
    %3174 = vmatpush.bf16.msra.mxu0 %v3159
    %3175 = vmatpush.bf16.msra.mxu0 %v3158
    %3176 = vmatpush.bf16.msra.mxu0 %v3157
    %3177 = vmatpush.bf16.msra.mxu0 %v3156
    %3178 = vmatpush.bf16.msra.mxu0 %v3155
    %3179 = vmatmul.bf16.gmra.mxu0 %v3102
    %v3180 = vpop.f32.mrf.mxu0
    %v3181 = vadd.f32 %v3121, %v3180
    %v3182 = vpop.f32.mrf.mxu0
    %3183 = vdwg.mxu0
    %v3184 = vmax.f32 %v3181, 0.0
    %v3185 = vpack.c.bf16 %v3184, %v3184
    %v3186 = vld [vmem:[%s9] sm:$0xf]
    %v3187 = vld [vmem:[%s9 + $0x4] sm:$0xf]
    %v3188 = vld [vmem:[%s9 + $0x8] sm:$0xf]
    %v3189 = vld [vmem:[%s9 + $0xc] sm:$0xf]
    %v3190 = vld [vmem:[%s9 + $0x10] sm:$0xf]
    %v3191 = vld [vmem:[%s9 + $0x14] sm:$0xf]
    %v3192 = vld [vmem:[%s9 + $0x18] sm:$0xf]
    %v3193 = vld [vmem:[%s9 + $0x1c] sm:$0xf]
    %v3194 = vld [vmem:[%s9 + $0x20] sm:$0xf]
    %v3195 = vld [vmem:[%s9 + $0x24] sm:$0xf]
    %v3196 = vld [vmem:[%s9 + $0x28] sm:$0xf]
    %v3197 = vld [vmem:[%s9 + $0x2c] sm:$0xf]
    %v3198 = vld [vmem:[%s9 + $0x30] sm:$0xf]
    %v3199 = vld [vmem:[%s9 + $0x34] sm:$0xf]
    %v3200 = vld [vmem:[%s9 + $0x38] sm:$0xf]
    %v3201 = vld [vmem:[%s9 + $0x3c] sm:$0xf]
    %v3202 = vld [vmem:[%s10] sm:$0x1]
    %v3204 = vperm.slane %v3202, 0
    %v3222 = vunpack.c.l.b16 %v3186
    %v3223 = vunpack.c.l.b16 %v3187
    %v3224 = vunpack.c.l.b16 %v3188
    %v3225 = vunpack.c.l.b16 %v3189
    %v3226 = vunpack.c.l.b16 %v3190
    %v3227 = vunpack.c.l.b16 %v3191
    %v3228 = vunpack.c.l.b16 %v3192
    %v3229 = vunpack.c.l.b16 %v3193
    %v3230 = vunpack.c.l.b16 %v3194
    %v3231 = vunpack.c.l.b16 %v3195
    %v3232 = vunpack.c.l.b16 %v3196
    %v3233 = vunpack.c.l.b16 %v3197
    %v3234 = vunpack.c.l.b16 %v3198
    %v3235 = vunpack.c.l.b16 %v3199
    %v3236 = vunpack.c.l.b16 %v3200
    %v3237 = vunpack.c.l.b16 %v3201
    %v3238 = vpack.c.b16 %v3223, %v3222
    %v3239 = vpack.c.b16 %v3225, %v3224
    %v3240 = vpack.c.b16 %v3227, %v3226
    %v3241 = vpack.c.b16 %v3229, %v3228
    %v3242 = vpack.c.b16 %v3231, %v3230
    %v3243 = vpack.c.b16 %v3233, %v3232
    %v3244 = vpack.c.b16 %v3235, %v3234
    %v3245 = vpack.c.b16 %v3237, %v3236
    %3254 = vmatpush.bf16.msra.mxu0 %v3245
    %3255 = vmatpush.bf16.msra.mxu0 %v3244
    %3256 = vmatpush.bf16.msra.mxu0 %v3243
    %3257 = vmatpush.bf16.msra.mxu0 %v3242
    %3258 = vmatpush.bf16.msra.mxu0 %v3241
    %3259 = vmatpush.bf16.msra.mxu0 %v3240
    %3260 = vmatpush.bf16.msra.mxu0 %v3239
    %3261 = vmatpush.bf16.msra.mxu0 %v3238
    %3262 = vmatmul.bf16.gmra.mxu0 %v3185
    %v3263 = vpop.f32.mrf.mxu0
    %v3264 = vadd.f32 %v3204, %v3263
    %v3265 = vpop.f32.mrf.mxu0
    %3266 = vdwg.mxu0
    %v3267 = vmax.f32 %v3264, 0.0
    %v3268 = vpack.c.bf16 %v3267, %v3267
    %v3269 = vld [vmem:[%s11] sm:$0xf]
    %v3270 = vld [vmem:[%s11 + $0x4] sm:$0xf]
    %v3271 = vld [vmem:[%s11 + $0x8] sm:$0xf]
    %v3272 = vld [vmem:[%s11 + $0xc] sm:$0xf]
    %v3273 = vld [vmem:[%s11 + $0x10] sm:$0xf]
    %v3274 = vld [vmem:[%s11 + $0x14] sm:$0xf]
    %v3275 = vld [vmem:[%s11 + $0x18] sm:$0xf]
    %v3276 = vld [vmem:[%s11 + $0x1c] sm:$0xf]
    %v3277 = vld [vmem:[%s12] sm:$0x1]
    %v3279 = vperm.slane %v3277, 0
    %v3289 = vunpack.c.l.b16 %v3269
    %v3290 = vunpack.c.l.b16 %v3270
    %v3291 = vunpack.c.l.b16 %v3271
    %v3292 = vunpack.c.l.b16 %v3272
    %v3293 = vunpack.c.l.b16 %v3273
    %v3294 = vunpack.c.l.b16 %v3274
    %v3295 = vunpack.c.l.b16 %v3275
    %v3296 = vunpack.c.l.b16 %v3276
    %v3297 = vpack.c.b16 %v3290, %v3289
    %v3298 = vpack.c.b16 %v3292, %v3291
    %v3299 = vpack.c.b16 %v3294, %v3293
    %v3300 = vpack.c.b16 %v3296, %v3295
    %vm3305 = vcmask 523264
    %v3307 = vsel %vm3305, %v3268, 0
    %3309 = vmatpush.bf16.msra.mxu0 0
    %3310 = vmatpush.bf16.msra.mxu0 0
    %3311 = vmatpush.bf16.msra.mxu0 0
    %3312 = vmatpush.bf16.msra.mxu0 0
    %3313 = vmatpush.bf16.msra.mxu0 %v3300
    %3314 = vmatpush.bf16.msra.mxu0 %v3299
    %3315 = vmatpush.bf16.msra.mxu0 %v3298
    %3316 = vmatpush.bf16.msra.mxu0 %v3297
    %3317 = vmatmul.bf16.gmra.mxu0 %v3307
    %v3318 = vpop.f32.mrf.mxu0
    %v3319 = vadd.f32 %v3279, %v3318
    %v3320 = vpop.f32.mrf.mxu0
    %3321 = vdwg.mxu0
    %vm3322 = vcmask 23552
    %3323 = vst.msk [vmem:[%s13] sm:$0xff] %vm3322, %v3319
    // Predicated region
    $region70: #{lstm_model_forward.1} parent=1 // pred_check
      _
    $region71: #{lstm_model_forward.1} parent=1 // pred_check_branch
      %3325 = sbr.rel (0) target = $region73
    $region72: #{lstm_model_forward.1} parent=1 // pred_region
      _
    $region73: #{lstm_model_forward.1} parent=1 // pred_fallthru
      _
    // Predicated region
    $region74: #{lstm_model_forward.1} parent=1 // pred_check
      _
    $region75: #{lstm_model_forward.1} parent=1 // pred_check_branch
      %3327 = sbr.rel (0) target = $region77
    $region76: #{lstm_model_forward.1} parent=1 // pred_region
      _
    $region77: #{lstm_model_forward.1} parent=1 // pred_fallthru
      _
    %3328 = vsyncpa [#allocation3], 1
    %3329 = vsyncpa [#allocation5], 1
    %3330 = vsyncpa [#allocation8], 1

</llo_original>
